<compile_context>
chip_gen: v7x
topology: tpu7x:2x2x1
jax: 0.10.0
libtpu: 0.0.40
codegen_flags: <defaults>
</compile_context>

<pallas_src>
import jax
import jax.numpy as jnp
from jax.experimental import pallas as pl
from jax.experimental.pallas import tpu as pltpu

BN_EPS = 1e-5
LEAKY_SLOPE = 0.2


# ------------------------------- kernel body -------------------------------- #

def _unet_inner_kernel(x_ref, wd_ref, wu_ref, y_ref, stats_ref, mp_ref):
    """Fused LeakyReLU -> Conv4x4/s2 -> ReLU -> (implicit 2x upsample) -> Conv3x3.

    x_ref    : (B, hp, wp, 4*cin)      bf16  padded input, 2x2 phases folded into channels
    wd_ref   : (16*cin, cinner)        bf16  down-conv weights, taps folded into K
    wu_ref   : (4, 4*cinner, couter)   bf16  up-conv weights per output parity, 2x2 taps in K
    y_ref    : (B, ho*wo, 4*couter)    f32   un-normalized output, parities on the lane axis
    stats_ref: (1, 2, couter)          f32   per-block BatchNorm sum / sum-of-squares
    mp_ref   : (B, ho+2, wo+2, cinner) bf16  scratch: zero-padded mid
    """
    B = x_ref.shape[0]
    ho = mp_ref.shape[1] - 2
    wo = mp_ref.shape[2] - 2
    cinner = mp_ref.shape[3]
    couter = stats_ref.shape[2]
    kdn = wd_ref.shape[0]

    # LeakyReLU once over the whole block (f32 VPU math, bf16 only at the MXU boundary).
    x = x_ref[...].astype(jnp.float32)
    xl = jnp.where(x > 0, x, LEAKY_SLOPE * x).astype(jnp.bfloat16)

    # ---- 4x4 stride-2 conv: ONE matmul, K = 16*cin (taps folded into the contraction) ---
    chunks = [xl[:, dy:dy + ho, dx:dx + wo, :] for dy in (0, 1) for dx in (0, 1)]
    lhs = jnp.concatenate(chunks, axis=-1).reshape(B * ho * wo, kdn)
    mid = jnp.dot(lhs, wd_ref[...], preferred_element_type=jnp.float32)
    mid = jnp.maximum(mid, 0.0)                               # uprelu (ReLU)

    # bf16 zero-padded mid in VMEM scratch. Only the 1-wide halo is cleared each step; the
    # interior is fully overwritten. (No "zero once at program_id==0": on a megacore split
    # the second core never executes step 0, so its scratch would stay uninitialized.)
    zr = jnp.zeros((B, 1, wo + 2, cinner), jnp.bfloat16)
    zc = jnp.zeros((B, ho, 1, cinner), jnp.bfloat16)
    mp_ref[:, 0:1, :, :] = zr
    mp_ref[:, ho + 1:ho + 2, :, :] = zr
    mp_ref[:, 1:ho + 1, 0:1, :] = zc
    mp_ref[:, 1:ho + 1, wo + 1:wo + 2, :] = zc
    mp_ref[:, 1:ho + 1, 1:wo + 1, :] = mid.astype(jnp.bfloat16).reshape(B, ho, wo, cinner)

    # ---- implicit 2x nearest upsample + 3x3 conv: 1 matmul per output parity, K = 4*cinner
    ys = []
    for pq in range(4):
        py, px = pq // 2, pq % 2
        taps = [mp_ref[:, py + a:py + a + ho, px + b:px + b + wo, :]
                for a in (0, 1) for b in (0, 1)]
        ulhs = jnp.concatenate(taps, axis=-1).reshape(B * ho * wo, 4 * cinner)
        ys.append(jnp.dot(ulhs, wu_ref[pq], preferred_element_type=jnp.float32))

    # BatchNorm partial statistics of the un-normalized output (f32 accumulation).
    s1 = jnp.zeros((1, couter), jnp.float32)
    s2 = jnp.zeros((1, couter), jnp.float32)
    for yp in ys:
        s1 = s1 + jnp.sum(yp, axis=0, keepdims=True)
        s2 = s2 + jnp.sum(yp * yp, axis=0, keepdims=True)
    stats_ref[0, 0:1, :] = s1
    stats_ref[0, 1:2, :] = s2

    # Lane-dense output: fold the 4 parities into the lane axis, single wide store.
    y_ref[...] = jnp.concatenate(ys, axis=-1).reshape(B, ho * wo, 4 * couter)


# ---------------------------- pallas_call wrapper ---------------------------- #

def _pallas_forward_raw(xfold, wd_flat, wu_flat, ho, wo, b_blk):
    n_pad, hp, wp, cin4 = xfold.shape
    kdn, cinner = wd_flat.shape
    couter = wu_flat.shape[2]
    nb = n_pad // b_blk
    return pl.pallas_call(
        _unet_inner_kernel,
        out_shape=(
            jax.ShapeDtypeStruct((n_pad, ho * wo, 4 * couter), jnp.float32),
            jax.ShapeDtypeStruct((nb, 2, couter), jnp.float32),
        ),
        grid=(nb,),
        in_specs=[
            pl.BlockSpec((b_blk, hp, wp, cin4), lambda i: (i, 0, 0, 0)),
            pl.BlockSpec((kdn, cinner), lambda i: (0, 0)),
            pl.BlockSpec((4, 4 * cinner, couter), lambda i: (0, 0, 0)),
        ],
        out_specs=(
            pl.BlockSpec((b_blk, ho * wo, 4 * couter), lambda i: (i, 0, 0)),
            pl.BlockSpec((1, 2, couter), lambda i: (i, 0, 0)),
        ),
        scratch_shapes=[pltpu.VMEM((b_blk, ho + 2, wo + 2, cinner), jnp.bfloat16)],
        compiler_params=pltpu.CompilerParams(dimension_semantics=("parallel",)),
    )(xfold, wd_flat, wu_flat)


# -------------------------------- JAX glue ----------------------------------- #

def unet_innermost_forward(x_nchw, params):
    """Forward of the innermost UnetSkipConnectionBlock. x_nchw: (N, input_nc, H, W) f32."""
    wd = params["down_w"]       # (inner_nc, input_nc, 4, 4)   torch OIHW
    wu = params["up_w"]         # (outer_nc, inner_nc, 3, 3)
    gamma = params["bn_gamma"]  # (outer_nc,)
    beta = params["bn_beta"]    # (outer_nc,)

    n, cin, h, w = x_nchw.shape
    cinner = wd.shape[0]
    couter = wu.shape[0]
    ho, wo = h // 2, w // 2
    hp, wp = ho + 1, wo + 1

    # Input prep (single XLA pass): NHWC, pad=1, 2x2 phase decomposition with the phases
    # folded into the channel axis -> the stride-2 conv becomes 4 contiguous static slices
    # with K = 4*cin each; stored bf16 (it is the largest HBM operand).
    x_nhwc = jnp.transpose(x_nchw, (0, 2, 3, 1))
    xpad = jnp.pad(x_nhwc, ((0, 0), (1, 1), (1, 1), (0, 0)))
    xfold = (xpad.reshape(n, hp, 2, wp, 2, cin)
                 .transpose(0, 1, 3, 2, 4, 5)
                 .reshape(n, hp, wp, 4 * cin)).astype(jnp.bfloat16)

    # Batch blocking: flatten b_blk samples into the matmul M dimension, capped by a
    # conservative per-step VMEM estimate (keeps default scoped-VMEM limits safe on v7x).
    per_sample = (2 * hp * wp * 4 * cin * 2                 # bf16 input block (dbl-buffered)
                  + (ho + 2) * (wo + 2) * cinner * 2        # bf16 mid scratch
                  + 2 * ho * wo * 4 * couter * 4            # f32 output block (dbl-buffered)
                  + ho * wo * (16 * cin + 4 * cinner) * 2   # matmul LHS staging
                  + ho * wo * cinner * 4)                   # f32 mid
    b_blk = int(max(1, min(n, 8, (4 << 20) // max(per_sample, 1))))
    nb = -(-n // b_blk)
    n_pad = nb * b_blk
    if n_pad != n:
        # zero samples contribute exactly zero to sum/sumsq -> BN stats stay correct.
        xfold = jnp.pad(xfold, ((0, n_pad - n), (0, 0), (0, 0), (0, 0)))

    # Down-conv weights: K index = (dy,dx)-chunk major, then phase, then input channel,
    # matching the kernel's chunk concat and the wrapper's phase-into-channel folding.
    wd_flat = (wd.reshape(cinner, cin, 2, 2, 2, 2)          # (O, I, dy, rp, dx, cp)
                 .transpose(2, 4, 3, 5, 1, 0)               # (dy, dx, rp, cp, I, O)
                 .reshape(16 * cin, cinner)).astype(jnp.bfloat16)

    # Up-conv weights: fold nearest-2x upsample + 3x3 conv into 2x2 taps per output parity,
    # then fold the 4 taps into the contraction dim (K = 4*cinner).
    wu_t = jnp.transpose(wu, (2, 3, 1, 0))                  # (3, 3, inner, outer)

    def _comb(w3, p):
        if p == 0:
            return jnp.stack([w3[0], w3[1] + w3[2]], axis=0)
        return jnp.stack([w3[0] + w3[1], w3[2]], axis=0)

    weff = []
    for py in range(2):
        wy = _comb(wu_t, py)                                # (2a, 3kx, inner, outer)
        for px in range(2):
            wyx = _comb(jnp.swapaxes(wy, 0, 1), px)         # (2b, 2a, inner, outer)
            weff.append(jnp.swapaxes(wyx, 0, 1).reshape(4 * cinner, couter))
    wu_flat = jnp.stack(weff, axis=0).astype(jnp.bfloat16)  # (4, 4*cinner, outer)

    # Single fused pass: un-normalized y (parity-on-lane) + BN partial stats.
    y_raw, stats = _pallas_forward_raw(xfold, wd_flat, wu_flat, ho, wo, b_blk)

    # Training-mode BatchNorm (biased variance) from the f32 sum / sumsq.
    count = n * h * w
    mean = jnp.sum(stats[:, 0, :], axis=0) / count
    var = jnp.maximum(jnp.sum(stats[:, 1, :], axis=0) / count - mean * mean, 0.0)
    scale = gamma * jax.lax.rsqrt(var + BN_EPS)
    bias = beta - mean * scale

    # Epilogue: affine folded into the de-parity reshape/transpose, then the skip concat.
    y = y_raw[:n].reshape(n, ho, wo, 2, 2, couter) * scale + bias
    y_nchw = jnp.transpose(y, (0, 5, 1, 3, 2, 4)).reshape(n, couter, h, w)
    return jnp.concatenate([x_nchw, y_nchw], axis=1)


# --------------------------- pure-JAX reference ----------------------------- #

def reference_forward(x, params):
    wd, wu = params["down_w"], params["up_w"]
    g, b = params["bn_gamma"], params["bn_beta"]
    hi = jnp.where(x > 0, x, LEAKY_SLOPE * x)
    hi = jax.lax.conv_general_dilated(hi, wd, (2, 2), ((1, 1), (1, 1)),
                                      dimension_numbers=("NCHW", "OIHW", "NCHW"),
                                      precision=jax.lax.Precision.HIGHEST)
    hi = jnp.maximum(hi, 0.0)
    hi = jnp.repeat(jnp.repeat(hi, 2, axis=2), 2, axis=3)
    hi = jax.lax.conv_general_dilated(hi, wu, (1, 1), ((1, 1), (1, 1)),
                                      dimension_numbers=("NCHW", "OIHW", "NCHW"),
                                      precision=jax.lax.Precision.HIGHEST)
    m = jnp.mean(hi, axis=(0, 2, 3), keepdims=True)
    v = jnp.mean((hi - m) ** 2, axis=(0, 2, 3), keepdims=True)
    hi = (hi - m) / jnp.sqrt(v + BN_EPS)
    hi = hi * g.reshape(1, -1, 1, 1) + b.reshape(1, -1, 1, 1)
    return jnp.concatenate([x, hi], axis=1)


# ---------------------------------- main ------------------------------------ #

if __name__ == "__main__":
    key = jax.random.PRNGKey(0)
    n, h, w = 2, 16, 16
    outer_nc, inner_nc = 4, 8
    input_nc = outer_nc            # PyTorch: input_nc defaults to outer_nc when None

    k1, k2, k3, k4, k5 = jax.random.split(key, 5)
    params = {
        "down_w": 0.1 * jax.random.normal(k1, (inner_nc, input_nc, 4, 4), jnp.float32),
        "up_w":   0.1 * jax.random.normal(k2, (outer_nc, inner_nc, 3, 3), jnp.float32),
        "bn_gamma": 1.0 + 0.1 * jax.random.normal(k3, (outer_nc,), jnp.float32),
        "bn_beta":  0.1 * jax.random.normal(k4, (outer_nc,), jnp.float32),
    }
    x = jax.random.normal(k5, (n, input_nc, h, w), jnp.float32)

    fwd = jax.jit(unet_innermost_forward)
    out = jax.block_until_ready(fwd(x, params))
    ref = jax.block_until_ready(reference_forward(x, params))

    assert out.shape == (n, input_nc + outer_nc, h, w), out.shape
    max_err = float(jnp.max(jnp.abs(out - ref)))
    # bf16 input + bf16 MXU operands (f32 accumulation) vs a fully-f32 HIGHEST reference.
    if not (max_err < 1e-1):
        raise AssertionError(f"Pallas result mismatch vs reference: max abs err = {max_err}")
    print("KERNEL_OK")
</pallas_src>

<mosaic_0001>
module attributes {stable_mosaic.version = 11 : i64} {
  func.func @_unet_inner_kernel(%arg0: i32, %arg1: memref<2x9x9x16xbf16, #tpu.memory_space<vmem>>, %arg2: memref<64x8xbf16, #tpu.memory_space<vmem>>, %arg3: memref<4x32x4xbf16, #tpu.memory_space<vmem>>, %arg4: memref<2x64x16xf32, #tpu.memory_space<vmem>>, %arg5: memref<1x2x4xf32, #tpu.memory_space<vmem>>, %arg6: memref<2x10x10x8xbf16, #tpu.memory_space<vmem>>) attributes {dimension_semantics = [#tpu.dimension_semantics<parallel>], iteration_bounds = array<i64: 1>, scalar_prefetch = 0 : i64, scratch_operands = 1 : i64, tpu.core_type = #tpu.core_type<tc>, window_params = [{transform_indices = @transform_0, window_bounds = array<i64: 2, 9, 9, 16>}, {pipeline_mode = #tpu.pipeline_mode<synchronous>, transform_indices = @transform_1, window_bounds = array<i64: 64, 8>}, {pipeline_mode = #tpu.pipeline_mode<synchronous>, transform_indices = @transform_2, window_bounds = array<i64: 4, 32, 4>}, {transform_indices = @transform_3, window_bounds = array<i64: 2, 64, 16>}, {transform_indices = @transform_4, window_bounds = array<i64: 1, 2, 4>}]} {
    %c0 = arith.constant 0 : index
    %c0_0 = arith.constant 0 : index
    %c0_1 = arith.constant 0 : index
    %c0_2 = arith.constant 0 : index
    %0 = vector.load %arg1[%c0, %c0_0, %c0_1, %c0_2] : memref<2x9x9x16xbf16, #tpu.memory_space<vmem>>, vector<2x9x9x16xbf16>
    %1 = arith.extf %0 : vector<2x9x9x16xbf16> to vector<2x9x9x16xf32>
    %cst = arith.constant 0.000000e+00 : f32
    %2 = vector.broadcast %cst : f32 to vector<2x9x9x16xf32>
    %3 = arith.cmpf ogt, %1, %2 : vector<2x9x9x16xf32>
    %cst_3 = arith.constant 2.000000e-01 : f32
    %4 = vector.broadcast %cst_3 : f32 to vector<2x9x9x16xf32>
    %5 = arith.mulf %4, %1 : vector<2x9x9x16xf32>
    %6 = arith.select %3, %1, %5 : vector<2x9x9x16xi1>, vector<2x9x9x16xf32>
    %7 = arith.truncf %6 : vector<2x9x9x16xf32> to vector<2x9x9x16xbf16>
    %8 = vector.extract_strided_slice %7 {offsets = [0, 0, 0, 0], sizes = [2, 8, 8, 16], strides = [1, 1, 1, 1]} : vector<2x9x9x16xbf16> to vector<2x8x8x16xbf16>
    %9 = vector.extract_strided_slice %7 {offsets = [0, 0, 1, 0], sizes = [2, 8, 8, 16], strides = [1, 1, 1, 1]} : vector<2x9x9x16xbf16> to vector<2x8x8x16xbf16>
    %10 = vector.extract_strided_slice %7 {offsets = [0, 1, 0, 0], sizes = [2, 8, 8, 16], strides = [1, 1, 1, 1]} : vector<2x9x9x16xbf16> to vector<2x8x8x16xbf16>
    %11 = vector.extract_strided_slice %7 {offsets = [0, 1, 1, 0], sizes = [2, 8, 8, 16], strides = [1, 1, 1, 1]} : vector<2x9x9x16xbf16> to vector<2x8x8x16xbf16>
    %12 = tpu.concatenate %8, %9, %10, %11 in 3 : vector<2x8x8x16xbf16>, vector<2x8x8x16xbf16>, vector<2x8x8x16xbf16>, vector<2x8x8x16xbf16> -> vector<2x8x8x64xbf16>
    %13 = vector.shape_cast %12 : vector<2x8x8x64xbf16> to vector<128x64xbf16>
    %c0_4 = arith.constant 0 : index
    %c0_5 = arith.constant 0 : index
    %14 = vector.load %arg2[%c0_4, %c0_5] : memref<64x8xbf16, #tpu.memory_space<vmem>>, vector<64x8xbf16>
    %cst_6 = arith.constant dense<0.000000e+00> : vector<128x8xf32>
    %15 = tpu.matmul %13, %14, %cst_6 {dimension_numbers = #tpu.dot_dimension_numbers<[1], [0], [0], [1], [0, 0, 1, 1], [], []>} : vector<128x64xbf16>, vector<64x8xbf16>, vector<128x8xf32> -> vector<128x8xf32>
    %cst_7 = arith.constant 0.000000e+00 : f32
    %16 = vector.broadcast %cst_7 : f32 to vector<128x8xf32>
    %17 = arith.maximumf %15, %16 : vector<128x8xf32>
    %cst_8 = arith.constant 0.000000e+00 : bf16
    %18 = vector.broadcast %cst_8 : bf16 to vector<2x1x10x8xbf16>
    %cst_9 = arith.constant 0.000000e+00 : bf16
    %19 = vector.broadcast %cst_9 : bf16 to vector<2x8x1x8xbf16>
    %c0_10 = arith.constant 0 : index
    %c0_11 = arith.constant 0 : index
    %c0_12 = arith.constant 0 : index
    %c0_13 = arith.constant 0 : index
    %20 = vector.load %arg6[%c0_10, %c0_11, %c0_12, %c0_13] : memref<2x10x10x8xbf16, #tpu.memory_space<vmem>>, vector<2x1x10x8xbf16>
    tpu.vector_store %arg6[%c0_10, %c0_11, %c0_12, %c0_13], %18 {strides = array<i32>} : memref<2x10x10x8xbf16, #tpu.memory_space<vmem>>, vector<2x1x10x8xbf16>,
    %c0_14 = arith.constant 0 : index
    %c9 = arith.constant 9 : index
    %c0_15 = arith.constant 0 : index
    %c0_16 = arith.constant 0 : index
    %21 = vector.load %arg6[%c0_14, %c9, %c0_15, %c0_16] : memref<2x10x10x8xbf16, #tpu.memory_space<vmem>>, vector<2x1x10x8xbf16>
    tpu.vector_store %arg6[%c0_14, %c9, %c0_15, %c0_16], %18 {strides = array<i32>} : memref<2x10x10x8xbf16, #tpu.memory_space<vmem>>, vector<2x1x10x8xbf16>,
    %c0_17 = arith.constant 0 : index
    %c1 = arith.constant 1 : index
    %c0_18 = arith.constant 0 : index
    %c0_19 = arith.constant 0 : index
    %22 = vector.load %arg6[%c0_17, %c1, %c0_18, %c0_19] : memref<2x10x10x8xbf16, #tpu.memory_space<vmem>>, vector<2x8x1x8xbf16>
    tpu.vector_store %arg6[%c0_17, %c1, %c0_18, %c0_19], %19 {strides = array<i32>} : memref<2x10x10x8xbf16, #tpu.memory_space<vmem>>, vector<2x8x1x8xbf16>,
    %c0_20 = arith.constant 0 : index
    %c1_21 = arith.constant 1 : index
    %c9_22 = arith.constant 9 : index
    %c0_23 = arith.constant 0 : index
    %23 = vector.load %arg6[%c0_20, %c1_21, %c9_22, %c0_23] : memref<2x10x10x8xbf16, #tpu.memory_space<vmem>>, vector<2x8x1x8xbf16>
    tpu.vector_store %arg6[%c0_20, %c1_21, %c9_22, %c0_23], %19 {strides = array<i32>} : memref<2x10x10x8xbf16, #tpu.memory_space<vmem>>, vector<2x8x1x8xbf16>,
    %24 = arith.truncf %17 : vector<128x8xf32> to vector<128x8xbf16>
    %25 = vector.shape_cast %24 : vector<128x8xbf16> to vector<2x8x8x8xbf16>
    %c0_24 = arith.constant 0 : index
    %c1_25 = arith.constant 1 : index
    %c1_26 = arith.constant 1 : index
    %c0_27 = arith.constant 0 : index
    %26 = vector.load %arg6[%c0_24, %c1_25, %c1_26, %c0_27] : memref<2x10x10x8xbf16, #tpu.memory_space<vmem>>, vector<2x8x8x8xbf16>
    tpu.vector_store %arg6[%c0_24, %c1_25, %c1_26, %c0_27], %25 {strides = array<i32>} : memref<2x10x10x8xbf16, #tpu.memory_space<vmem>>, vector<2x8x8x8xbf16>,
    %c0_28 = arith.constant 0 : index
    %c0_29 = arith.constant 0 : index
    %c0_30 = arith.constant 0 : index
    %c0_31 = arith.constant 0 : index
    %27 = vector.load %arg6[%c0_28, %c0_29, %c0_30, %c0_31] : memref<2x10x10x8xbf16, #tpu.memory_space<vmem>>, vector<2x8x8x8xbf16>
    %c0_32 = arith.constant 0 : index
    %c0_33 = arith.constant 0 : index
    %c1_34 = arith.constant 1 : index
    %c0_35 = arith.constant 0 : index
    %28 = vector.load %arg6[%c0_32, %c0_33, %c1_34, %c0_35] : memref<2x10x10x8xbf16, #tpu.memory_space<vmem>>, vector<2x8x8x8xbf16>
    %c0_36 = arith.constant 0 : index
    %c1_37 = arith.constant 1 : index
    %c0_38 = arith.constant 0 : index
    %c0_39 = arith.constant 0 : index
    %29 = vector.load %arg6[%c0_36, %c1_37, %c0_38, %c0_39] : memref<2x10x10x8xbf16, #tpu.memory_space<vmem>>, vector<2x8x8x8xbf16>
    %c0_40 = arith.constant 0 : index
    %c1_41 = arith.constant 1 : index
    %c1_42 = arith.constant 1 : index
    %c0_43 = arith.constant 0 : index
    %30 = vector.load %arg6[%c0_40, %c1_41, %c1_42, %c0_43] : memref<2x10x10x8xbf16, #tpu.memory_space<vmem>>, vector<2x8x8x8xbf16>
    %31 = tpu.concatenate %27, %28, %29, %30 in 3 : vector<2x8x8x8xbf16>, vector<2x8x8x8xbf16>, vector<2x8x8x8xbf16>, vector<2x8x8x8xbf16> -> vector<2x8x8x32xbf16>
    %32 = vector.shape_cast %31 : vector<2x8x8x32xbf16> to vector<128x32xbf16>
    %c0_44 = arith.constant 0 : index
    %c0_45 = arith.constant 0 : index
    %c0_46 = arith.constant 0 : index
    %33 = vector.load %arg3[%c0_44, %c0_45, %c0_46] : memref<4x32x4xbf16, #tpu.memory_space<vmem>>, vector<1x32x4xbf16>
    %34 = vector.shape_cast %33 : vector<1x32x4xbf16> to vector<32x4xbf16>
    %cst_47 = arith.constant dense<0.000000e+00> : vector<128x4xf32>
    %35 = tpu.matmul %32, %34, %cst_47 {dimension_numbers = #tpu.dot_dimension_numbers<[1], [0], [0], [1], [0, 0, 1, 1], [], []>} : vector<128x32xbf16>, vector<32x4xbf16>, vector<128x4xf32> -> vector<128x4xf32>
    %c0_48 = arith.constant 0 : index
    %c0_49 = arith.constant 0 : index
    %c1_50 = arith.constant 1 : index
    %c0_51 = arith.constant 0 : index
    %36 = vector.load %arg6[%c0_48, %c0_49, %c1_50, %c0_51] : memref<2x10x10x8xbf16, #tpu.memory_space<vmem>>, vector<2x8x8x8xbf16>
    %c0_52 = arith.constant 0 : index
    %c0_53 = arith.constant 0 : index
    %c2 = arith.constant 2 : index
    %c0_54 = arith.constant 0 : index
    %37 = vector.load %arg6[%c0_52, %c0_53, %c2, %c0_54] : memref<2x10x10x8xbf16, #tpu.memory_space<vmem>>, vector<2x8x8x8xbf16>
    %c0_55 = arith.constant 0 : index
    %c1_56 = arith.constant 1 : index
    %c1_57 = arith.constant 1 : index
    %c0_58 = arith.constant 0 : index
    %38 = vector.load %arg6[%c0_55, %c1_56, %c1_57, %c0_58] : memref<2x10x10x8xbf16, #tpu.memory_space<vmem>>, vector<2x8x8x8xbf16>
    %c0_59 = arith.constant 0 : index
    %c1_60 = arith.constant 1 : index
    %c2_61 = arith.constant 2 : index
    %c0_62 = arith.constant 0 : index
    %39 = vector.load %arg6[%c0_59, %c1_60, %c2_61, %c0_62] : memref<2x10x10x8xbf16, #tpu.memory_space<vmem>>, vector<2x8x8x8xbf16>
    %40 = tpu.concatenate %36, %37, %38, %39 in 3 : vector<2x8x8x8xbf16>, vector<2x8x8x8xbf16>, vector<2x8x8x8xbf16>, vector<2x8x8x8xbf16> -> vector<2x8x8x32xbf16>
    %41 = vector.shape_cast %40 : vector<2x8x8x32xbf16> to vector<128x32xbf16>
    %c1_63 = arith.constant 1 : index
    %c0_64 = arith.constant 0 : index
    %c0_65 = arith.constant 0 : index
    %42 = vector.load %arg3[%c1_63, %c0_64, %c0_65] : memref<4x32x4xbf16, #tpu.memory_space<vmem>>, vector<1x32x4xbf16>
    %43 = vector.shape_cast %42 : vector<1x32x4xbf16> to vector<32x4xbf16>
    %cst_66 = arith.constant dense<0.000000e+00> : vector<128x4xf32>
    %44 = tpu.matmul %41, %43, %cst_66 {dimension_numbers = #tpu.dot_dimension_numbers<[1], [0], [0], [1], [0, 0, 1, 1], [], []>} : vector<128x32xbf16>, vector<32x4xbf16>, vector<128x4xf32> -> vector<128x4xf32>
    %c0_67 = arith.constant 0 : index
    %c1_68 = arith.constant 1 : index
    %c0_69 = arith.constant 0 : index
    %c0_70 = arith.constant 0 : index
    %45 = vector.load %arg6[%c0_67, %c1_68, %c0_69, %c0_70] : memref<2x10x10x8xbf16, #tpu.memory_space<vmem>>, vector<2x8x8x8xbf16>
    %c0_71 = arith.constant 0 : index
    %c1_72 = arith.constant 1 : index
    %c1_73 = arith.constant 1 : index
    %c0_74 = arith.constant 0 : index
    %46 = vector.load %arg6[%c0_71, %c1_72, %c1_73, %c0_74] : memref<2x10x10x8xbf16, #tpu.memory_space<vmem>>, vector<2x8x8x8xbf16>
    %c0_75 = arith.constant 0 : index
    %c2_76 = arith.constant 2 : index
    %c0_77 = arith.constant 0 : index
    %c0_78 = arith.constant 0 : index
    %47 = vector.load %arg6[%c0_75, %c2_76, %c0_77, %c0_78] : memref<2x10x10x8xbf16, #tpu.memory_space<vmem>>, vector<2x8x8x8xbf16>
    %c0_79 = arith.constant 0 : index
    %c2_80 = arith.constant 2 : index
    %c1_81 = arith.constant 1 : index
    %c0_82 = arith.constant 0 : index
    %48 = vector.load %arg6[%c0_79, %c2_80, %c1_81, %c0_82] : memref<2x10x10x8xbf16, #tpu.memory_space<vmem>>, vector<2x8x8x8xbf16>
    %49 = tpu.concatenate %45, %46, %47, %48 in 3 : vector<2x8x8x8xbf16>, vector<2x8x8x8xbf16>, vector<2x8x8x8xbf16>, vector<2x8x8x8xbf16> -> vector<2x8x8x32xbf16>
    %50 = vector.shape_cast %49 : vector<2x8x8x32xbf16> to vector<128x32xbf16>
    %c2_83 = arith.constant 2 : index
    %c0_84 = arith.constant 0 : index
    %c0_85 = arith.constant 0 : index
    %51 = vector.load %arg3[%c2_83, %c0_84, %c0_85] : memref<4x32x4xbf16, #tpu.memory_space<vmem>>, vector<1x32x4xbf16>
    %52 = vector.shape_cast %51 : vector<1x32x4xbf16> to vector<32x4xbf16>
    %cst_86 = arith.constant dense<0.000000e+00> : vector<128x4xf32>
    %53 = tpu.matmul %50, %52, %cst_86 {dimension_numbers = #tpu.dot_dimension_numbers<[1], [0], [0], [1], [0, 0, 1, 1], [], []>} : vector<128x32xbf16>, vector<32x4xbf16>, vector<128x4xf32> -> vector<128x4xf32>
    %c0_87 = arith.constant 0 : index
    %c1_88 = arith.constant 1 : index
    %c1_89 = arith.constant 1 : index
    %c0_90 = arith.constant 0 : index
    %54 = vector.load %arg6[%c0_87, %c1_88, %c1_89, %c0_90] : memref<2x10x10x8xbf16, #tpu.memory_space<vmem>>, vector<2x8x8x8xbf16>
    %c0_91 = arith.constant 0 : index
    %c1_92 = arith.constant 1 : index
    %c2_93 = arith.constant 2 : index
    %c0_94 = arith.constant 0 : index
    %55 = vector.load %arg6[%c0_91, %c1_92, %c2_93, %c0_94] : memref<2x10x10x8xbf16, #tpu.memory_space<vmem>>, vector<2x8x8x8xbf16>
    %c0_95 = arith.constant 0 : index
    %c2_96 = arith.constant 2 : index
    %c1_97 = arith.constant 1 : index
    %c0_98 = arith.constant 0 : index
    %56 = vector.load %arg6[%c0_95, %c2_96, %c1_97, %c0_98] : memref<2x10x10x8xbf16, #tpu.memory_space<vmem>>, vector<2x8x8x8xbf16>
    %c0_99 = arith.constant 0 : index
    %c2_100 = arith.constant 2 : index
    %c2_101 = arith.constant 2 : index
    %c0_102 = arith.constant 0 : index
    %57 = vector.load %arg6[%c0_99, %c2_100, %c2_101, %c0_102] : memref<2x10x10x8xbf16, #tpu.memory_space<vmem>>, vector<2x8x8x8xbf16>
    %58 = tpu.concatenate %54, %55, %56, %57 in 3 : vector<2x8x8x8xbf16>, vector<2x8x8x8xbf16>, vector<2x8x8x8xbf16>, vector<2x8x8x8xbf16> -> vector<2x8x8x32xbf16>
    %59 = vector.shape_cast %58 : vector<2x8x8x32xbf16> to vector<128x32xbf16>
    %c3 = arith.constant 3 : index
    %c0_103 = arith.constant 0 : index
    %c0_104 = arith.constant 0 : index
    %60 = vector.load %arg3[%c3, %c0_103, %c0_104] : memref<4x32x4xbf16, #tpu.memory_space<vmem>>, vector<1x32x4xbf16>
    %61 = vector.shape_cast %60 : vector<1x32x4xbf16> to vector<32x4xbf16>
    %cst_105 = arith.constant dense<0.000000e+00> : vector<128x4xf32>
    %62 = tpu.matmul %59, %61, %cst_105 {dimension_numbers = #tpu.dot_dimension_numbers<[1], [0], [0], [1], [0, 0, 1, 1], [], []>} : vector<128x32xbf16>, vector<32x4xbf16>, vector<128x4xf32> -> vector<128x4xf32>
    %cst_106 = arith.constant 0.000000e+00 : f32
    %63 = vector.broadcast %cst_106 : f32 to vector<1x4xf32>
    %cst_107 = arith.constant 0.000000e+00 : f32
    %64 = vector.broadcast %cst_107 : f32 to vector<1x4xf32>
    %cst_108 = arith.constant dense<0.000000e+00> : vector<4xf32>
    %65 = vector.multi_reduction <add>, %35, %cst_108 [0] : vector<128x4xf32> to vector<4xf32>
    %66 = vector.shape_cast %65 : vector<4xf32> to vector<1x4xf32>
    %67 = arith.addf %63, %66 : vector<1x4xf32>
    %68 = arith.mulf %35, %35 : vector<128x4xf32>
    %cst_109 = arith.constant dense<0.000000e+00> : vector<4xf32>
    %69 = vector.multi_reduction <add>, %68, %cst_109 [0] : vector<128x4xf32> to vector<4xf32>
    %70 = vector.shape_cast %69 : vector<4xf32> to vector<1x4xf32>
    %71 = arith.addf %64, %70 : vector<1x4xf32>
    %cst_110 = arith.constant dense<0.000000e+00> : vector<4xf32>
    %72 = vector.multi_reduction <add>, %44, %cst_110 [0] : vector<128x4xf32> to vector<4xf32>
    %73 = vector.shape_cast %72 : vector<4xf32> to vector<1x4xf32>
    %74 = arith.addf %67, %73 : vector<1x4xf32>
    %75 = arith.mulf %44, %44 : vector<128x4xf32>
    %cst_111 = arith.constant dense<0.000000e+00> : vector<4xf32>
    %76 = vector.multi_reduction <add>, %75, %cst_111 [0] : vector<128x4xf32> to vector<4xf32>
    %77 = vector.shape_cast %76 : vector<4xf32> to vector<1x4xf32>
    %78 = arith.addf %71, %77 : vector<1x4xf32>
    %cst_112 = arith.constant dense<0.000000e+00> : vector<4xf32>
    %79 = vector.multi_reduction <add>, %53, %cst_112 [0] : vector<128x4xf32> to vector<4xf32>
    %80 = vector.shape_cast %79 : vector<4xf32> to vector<1x4xf32>
    %81 = arith.addf %74, %80 : vector<1x4xf32>
    %82 = arith.mulf %53, %53 : vector<128x4xf32>
    %cst_113 = arith.constant dense<0.000000e+00> : vector<4xf32>
    %83 = vector.multi_reduction <add>, %82, %cst_113 [0] : vector<128x4xf32> to vector<4xf32>
    %84 = vector.shape_cast %83 : vector<4xf32> to vector<1x4xf32>
    %85 = arith.addf %78, %84 : vector<1x4xf32>
    %cst_114 = arith.constant dense<0.000000e+00> : vector<4xf32>
    %86 = vector.multi_reduction <add>, %62, %cst_114 [0] : vector<128x4xf32> to vector<4xf32>
    %87 = vector.shape_cast %86 : vector<4xf32> to vector<1x4xf32>
    %88 = arith.addf %81, %87 : vector<1x4xf32>
    %89 = arith.mulf %62, %62 : vector<128x4xf32>
    %cst_115 = arith.constant dense<0.000000e+00> : vector<4xf32>
    %90 = vector.multi_reduction <add>, %89, %cst_115 [0] : vector<128x4xf32> to vector<4xf32>
    %91 = vector.shape_cast %90 : vector<4xf32> to vector<1x4xf32>
    %92 = arith.addf %85, %91 : vector<1x4xf32>
    %c0_116 = arith.constant 0 : index
    %c0_117 = arith.constant 0 : index
    %c0_118 = arith.constant 0 : index
    %93 = vector.load %arg5[%c0_116, %c0_117, %c0_118] : memref<1x2x4xf32, #tpu.memory_space<vmem>>, vector<1x1x4xf32>
    %94 = vector.shape_cast %93 : vector<1x1x4xf32> to vector<1x4xf32>
    %95 = vector.shape_cast %88 : vector<1x4xf32> to vector<1x1x4xf32>
    tpu.vector_store %arg5[%c0_116, %c0_117, %c0_118], %95 {strides = array<i32>} : memref<1x2x4xf32, #tpu.memory_space<vmem>>, vector<1x1x4xf32>,
    %c0_119 = arith.constant 0 : index
    %c1_120 = arith.constant 1 : index
    %c0_121 = arith.constant 0 : index
    %96 = vector.load %arg5[%c0_119, %c1_120, %c0_121] : memref<1x2x4xf32, #tpu.memory_space<vmem>>, vector<1x1x4xf32>
    %97 = vector.shape_cast %96 : vector<1x1x4xf32> to vector<1x4xf32>
    %98 = vector.shape_cast %92 : vector<1x4xf32> to vector<1x1x4xf32>
    tpu.vector_store %arg5[%c0_119, %c1_120, %c0_121], %98 {strides = array<i32>} : memref<1x2x4xf32, #tpu.memory_space<vmem>>, vector<1x1x4xf32>,
    %99 = tpu.concatenate %35, %44, %53, %62 in 1 : vector<128x4xf32>, vector<128x4xf32>, vector<128x4xf32>, vector<128x4xf32> -> vector<128x16xf32>
    %100 = vector.shape_cast %99 : vector<128x16xf32> to vector<2x64x16xf32>
    %c0_122 = arith.constant 0 : index
    %c0_123 = arith.constant 0 : index
    %c0_124 = arith.constant 0 : index
    %101 = vector.load %arg4[%c0_122, %c0_123, %c0_124] : memref<2x64x16xf32, #tpu.memory_space<vmem>>, vector<2x64x16xf32>
    tpu.vector_store %arg4[%c0_122, %c0_123, %c0_124], %100 {strides = array<i32>} : memref<2x64x16xf32, #tpu.memory_space<vmem>>, vector<2x64x16xf32>,
    return
  }
  func.func @transform_0(%arg0: i32) -> (i32, i32, i32, i32) {
    %c0_i32 = arith.constant 0 : i32
    %c0_i32_0 = arith.constant 0 : i32
    %c0_i32_1 = arith.constant 0 : i32
    %c0_i32_2 = arith.constant 0 : i32
    return %arg0, %c0_i32, %c0_i32_0, %c0_i32_1 : i32, i32, i32, i32
  }
  func.func @transform_1(%arg0: i32) -> (i32, i32) {
    %c0_i32 = arith.constant 0 : i32
    %c0_i32_0 = arith.constant 0 : i32
    %c0_i32_1 = arith.constant 0 : i32
    return %c0_i32, %c0_i32_0 : i32, i32
  }
  func.func @transform_2(%arg0: i32) -> (i32, i32, i32) {
    %c0_i32 = arith.constant 0 : i32
    %c0_i32_0 = arith.constant 0 : i32
    %c0_i32_1 = arith.constant 0 : i32
    %c0_i32_2 = arith.constant 0 : i32
    return %c0_i32, %c0_i32_0, %c0_i32_1 : i32, i32, i32
  }
  func.func @transform_3(%arg0: i32) -> (i32, i32, i32) {
    %c0_i32 = arith.constant 0 : i32
    %c0_i32_0 = arith.constant 0 : i32
    %c0_i32_1 = arith.constant 0 : i32
    return %arg0, %c0_i32, %c0_i32_0 : i32, i32, i32
  }
  func.func @transform_4(%arg0: i32) -> (i32, i32, i32) {
    %c0_i32 = arith.constant 0 : i32
    %c0_i32_0 = arith.constant 0 : i32
    %c0_i32_1 = arith.constant 0 : i32
    return %arg0, %c0_i32, %c0_i32_0 : i32, i32, i32
  }
}

</mosaic_0001>

<llo_original>
// kernel: unet_innermost_forward.1
$region0: #{unet_innermost_forward.1}
  #allocation0 [shape = 'u32[]', space=smem, size = 0x4, offset = 0x4, fixed_abs, tag = 'smem constant byte address 0x4 - core index']
  #allocation1 [shape = 'u32[144,128]{1,0:T(1,128)}', space=vmem, size = 0x12000, scoped, tag = 'internal scratch']
  #allocation2 [shape = 'bf16[2,10,10,8]{3,2,1,0:T(8,128)(2,1)}', space=vmem, size = 0x14000, scoped, tag = 'scratch operand']
  %s0 = inlined_call_operand.vmem [shape: bf16[2,9,9,16], index: 0, kind: input, shape index: {}]
  %s1 = inlined_call_operand.vmem [shape: bf16[64,8], index: 1, kind: input, shape index: {}]
  %s2 = inlined_call_operand.vmem [shape: bf16[4,32,4], index: 2, kind: input, shape index: {}]
  %s3 = inlined_call_operand.vmem [shape: f32[2,64,16], index: 3, kind: output, shape index: {0}]
  %s4 = inlined_call_operand.vmem [shape: f32[1,2,4], index: 4, kind: output, shape index: {1}]
  %5 = xla_tuple %s3, %s4
  %s6 = sld [smem:[#allocation0]]
  $region30: #{unet_innermost_forward.1} parent=0
    _
  %s8 = ssub.s32 1, %s6
  %s9 = scalar_select 0, %s8, %s6
  // Predicated region
  $region2: #{unet_innermost_forward.1} parent=0 // pred_check
    _
  $region3: #{unet_innermost_forward.1} parent=0 // pred_check_branch
    %11 = sbr.rel (0) target = $region5
  $region4: #{unet_innermost_forward.1} parent=0 // pred_region
    _
  $region5: #{unet_innermost_forward.1} parent=0 // pred_fallthru
    _
  // Predicated region
  $region6: #{unet_innermost_forward.1} parent=0 // pred_check
    _
  $region7: #{unet_innermost_forward.1} parent=0 // pred_check_branch
    %13 = sbr.rel (0) target = $region9
  $region8: #{unet_innermost_forward.1} parent=0 // pred_region
    _
  $region9: #{unet_innermost_forward.1} parent=0 // pred_fallthru
    _
  // Predicated region
  $region10: #{unet_innermost_forward.1} parent=0 // pred_check
    _
  $region11: #{unet_innermost_forward.1} parent=0 // pred_check_branch
    %15 = sbr.rel (0) target = $region13
  $region12: #{unet_innermost_forward.1} parent=0 // pred_region
    _
  $region13: #{unet_innermost_forward.1} parent=0 // pred_fallthru
    _
  %v17 = vld [vmem:[%s0] sm:$0xf]
  %v18 = vld [vmem:[%s0 + $0x4] sm:$0x1]
  %v19 = vld [vmem:[%s0 + $0x8] sm:$0xf]
  %v20 = vld [vmem:[%s0 + $0xc] sm:$0x1]
  %v21 = vld [vmem:[%s0 + $0x10] sm:$0xf]
  %v22 = vld [vmem:[%s0 + $0x14] sm:$0x1]
  %v23 = vld [vmem:[%s0 + $0x18] sm:$0xf]
  %v24 = vld [vmem:[%s0 + $0x1c] sm:$0x1]
  %v25 = vld [vmem:[%s0 + $0x20] sm:$0xf]
  %v26 = vld [vmem:[%s0 + $0x24] sm:$0x1]
  %v27 = vld [vmem:[%s0 + $0x28] sm:$0xf]
  %v28 = vld [vmem:[%s0 + $0x2c] sm:$0x1]
  %v29 = vld [vmem:[%s0 + $0x30] sm:$0xf]
  %v30 = vld [vmem:[%s0 + $0x34] sm:$0x1]
  %v31 = vld [vmem:[%s0 + $0x38] sm:$0xf]
  %v32 = vld [vmem:[%s0 + $0x3c] sm:$0x1]
  %v33 = vld [vmem:[%s0 + $0x40] sm:$0xf]
  %v34 = vld [vmem:[%s0 + $0x44] sm:$0x1]
  %v35 = vld [vmem:[%s0 + $0x48] sm:$0xf]
  %v36 = vld [vmem:[%s0 + $0x4c] sm:$0x1]
  %v37 = vld [vmem:[%s0 + $0x50] sm:$0xf]
  %v38 = vld [vmem:[%s0 + $0x54] sm:$0x1]
  %v39 = vld [vmem:[%s0 + $0x58] sm:$0xf]
  %v40 = vld [vmem:[%s0 + $0x5c] sm:$0x1]
  %v41 = vld [vmem:[%s0 + $0x60] sm:$0xf]
  %v42 = vld [vmem:[%s0 + $0x64] sm:$0x1]
  %v43 = vld [vmem:[%s0 + $0x68] sm:$0xf]
  %v44 = vld [vmem:[%s0 + $0x6c] sm:$0x1]
  %v45 = vld [vmem:[%s0 + $0x70] sm:$0xf]
  %v46 = vld [vmem:[%s0 + $0x74] sm:$0x1]
  %v47 = vld [vmem:[%s0 + $0x78] sm:$0xf]
  %v48 = vld [vmem:[%s0 + $0x7c] sm:$0x1]
  %v49 = vld [vmem:[%s0 + $0x80] sm:$0xf]
  %v50 = vld [vmem:[%s0 + $0x84] sm:$0x1]
  %v51 = vld [vmem:[%s0 + $0x88] sm:$0xf]
  %v52 = vld [vmem:[%s0 + $0x8c] sm:$0x1]
  %v53 = vunpack.c.l.bf16 %v17
  %v54 = vunpack.c.l.bf16 %v18
  %v55 = vunpack.c.l.bf16 %v19
  %v56 = vunpack.c.l.bf16 %v20
  %v57 = vunpack.c.l.bf16 %v21
  %v58 = vunpack.c.l.bf16 %v22
  %v59 = vunpack.c.l.bf16 %v23
  %v60 = vunpack.c.l.bf16 %v24
  %v61 = vunpack.c.l.bf16 %v25
  %v62 = vunpack.c.l.bf16 %v26
  %v63 = vunpack.c.l.bf16 %v27
  %v64 = vunpack.c.l.bf16 %v28
  %v65 = vunpack.c.l.bf16 %v29
  %v66 = vunpack.c.l.bf16 %v30
  %v67 = vunpack.c.l.bf16 %v31
  %v68 = vunpack.c.l.bf16 %v32
  %v69 = vunpack.c.l.bf16 %v33
  %v70 = vunpack.c.l.bf16 %v34
  %v71 = vunpack.c.l.bf16 %v35
  %v72 = vunpack.c.l.bf16 %v36
  %v73 = vunpack.c.l.bf16 %v37
  %v74 = vunpack.c.l.bf16 %v38
  %v75 = vunpack.c.l.bf16 %v39
  %v76 = vunpack.c.l.bf16 %v40
  %v77 = vunpack.c.l.bf16 %v41
  %v78 = vunpack.c.l.bf16 %v42
  %v79 = vunpack.c.l.bf16 %v43
  %v80 = vunpack.c.l.bf16 %v44
  %v81 = vunpack.c.l.bf16 %v45
  %v82 = vunpack.c.l.bf16 %v46
  %v83 = vunpack.c.l.bf16 %v47
  %v84 = vunpack.c.l.bf16 %v48
  %v85 = vunpack.c.l.bf16 %v49
  %v86 = vunpack.c.l.bf16 %v50
  %v87 = vunpack.c.l.bf16 %v51
  %v88 = vunpack.c.l.bf16 %v52
  %vm89 = vcmp.gt.f32.partialorder %v53, 0.0
  %vm90 = vcmp.gt.f32.partialorder %v54, 0.0
  %vm91 = vcmp.gt.f32.partialorder %v55, 0.0
  %vm92 = vcmp.gt.f32.partialorder %v56, 0.0
  %vm93 = vcmp.gt.f32.partialorder %v57, 0.0
  %vm94 = vcmp.gt.f32.partialorder %v58, 0.0
  %vm95 = vcmp.gt.f32.partialorder %v59, 0.0
  %vm96 = vcmp.gt.f32.partialorder %v60, 0.0
  %vm97 = vcmp.gt.f32.partialorder %v61, 0.0
  %vm98 = vcmp.gt.f32.partialorder %v62, 0.0
  %vm99 = vcmp.gt.f32.partialorder %v63, 0.0
  %vm100 = vcmp.gt.f32.partialorder %v64, 0.0
  %vm101 = vcmp.gt.f32.partialorder %v65, 0.0
  %vm102 = vcmp.gt.f32.partialorder %v66, 0.0
  %vm103 = vcmp.gt.f32.partialorder %v67, 0.0
  %vm104 = vcmp.gt.f32.partialorder %v68, 0.0
  %vm105 = vcmp.gt.f32.partialorder %v69, 0.0
  %vm106 = vcmp.gt.f32.partialorder %v70, 0.0
  %vm107 = vcmp.gt.f32.partialorder %v71, 0.0
  %vm108 = vcmp.gt.f32.partialorder %v72, 0.0
  %vm109 = vcmp.gt.f32.partialorder %v73, 0.0
  %vm110 = vcmp.gt.f32.partialorder %v74, 0.0
  %vm111 = vcmp.gt.f32.partialorder %v75, 0.0
  %vm112 = vcmp.gt.f32.partialorder %v76, 0.0
  %vm113 = vcmp.gt.f32.partialorder %v77, 0.0
  %vm114 = vcmp.gt.f32.partialorder %v78, 0.0
  %vm115 = vcmp.gt.f32.partialorder %v79, 0.0
  %vm116 = vcmp.gt.f32.partialorder %v80, 0.0
  %vm117 = vcmp.gt.f32.partialorder %v81, 0.0
  %vm118 = vcmp.gt.f32.partialorder %v82, 0.0
  %vm119 = vcmp.gt.f32.partialorder %v83, 0.0
  %vm120 = vcmp.gt.f32.partialorder %v84, 0.0
  %vm121 = vcmp.gt.f32.partialorder %v85, 0.0
  %vm122 = vcmp.gt.f32.partialorder %v86, 0.0
  %vm123 = vcmp.gt.f32.partialorder %v87, 0.0
  %vm124 = vcmp.gt.f32.partialorder %v88, 0.0
  %v125 = vmul.f32 %v53, 0.2
  %v126 = vmul.f32 %v54, 0.2
  %v127 = vmul.f32 %v55, 0.2
  %v128 = vmul.f32 %v56, 0.2
  %v129 = vmul.f32 %v57, 0.2
  %v130 = vmul.f32 %v58, 0.2
  %v131 = vmul.f32 %v59, 0.2
  %v132 = vmul.f32 %v60, 0.2
  %v133 = vmul.f32 %v61, 0.2
  %v134 = vmul.f32 %v62, 0.2
  %v135 = vmul.f32 %v63, 0.2
  %v136 = vmul.f32 %v64, 0.2
  %v137 = vmul.f32 %v65, 0.2
  %v138 = vmul.f32 %v66, 0.2
  %v139 = vmul.f32 %v67, 0.2
  %v140 = vmul.f32 %v68, 0.2
  %v141 = vmul.f32 %v69, 0.2
  %v142 = vmul.f32 %v70, 0.2
  %v143 = vmul.f32 %v71, 0.2
  %v144 = vmul.f32 %v72, 0.2
  %v145 = vmul.f32 %v73, 0.2
  %v146 = vmul.f32 %v74, 0.2
  %v147 = vmul.f32 %v75, 0.2
  %v148 = vmul.f32 %v76, 0.2
  %v149 = vmul.f32 %v77, 0.2
  %v150 = vmul.f32 %v78, 0.2
  %v151 = vmul.f32 %v79, 0.2
  %v152 = vmul.f32 %v80, 0.2
  %v153 = vmul.f32 %v81, 0.2
  %v154 = vmul.f32 %v82, 0.2
  %v155 = vmul.f32 %v83, 0.2
  %v156 = vmul.f32 %v84, 0.2
  %v157 = vmul.f32 %v85, 0.2
  %v158 = vmul.f32 %v86, 0.2
  %v159 = vmul.f32 %v87, 0.2
  %v160 = vmul.f32 %v88, 0.2
  %v161 = vsel %vm89, %v53, %v125
  %v162 = vsel %vm90, %v54, %v126
  %v163 = vsel %vm91, %v55, %v127
  %v164 = vsel %vm92, %v56, %v128
  %v165 = vsel %vm93, %v57, %v129
  %v166 = vsel %vm94, %v58, %v130
  %v167 = vsel %vm95, %v59, %v131
  %v168 = vsel %vm96, %v60, %v132
  %v169 = vsel %vm97, %v61, %v133
  %v170 = vsel %vm98, %v62, %v134
  %v171 = vsel %vm99, %v63, %v135
  %v172 = vsel %vm100, %v64, %v136
  %v173 = vsel %vm101, %v65, %v137
  %v174 = vsel %vm102, %v66, %v138
  %v175 = vsel %vm103, %v67, %v139
  %v176 = vsel %vm104, %v68, %v140
  %v177 = vsel %vm105, %v69, %v141
  %v178 = vsel %vm106, %v70, %v142
  %v179 = vsel %vm107, %v71, %v143
  %v180 = vsel %vm108, %v72, %v144
  %v181 = vsel %vm109, %v73, %v145
  %v182 = vsel %vm110, %v74, %v146
  %v183 = vsel %vm111, %v75, %v147
  %v184 = vsel %vm112, %v76, %v148
  %v185 = vsel %vm113, %v77, %v149
  %v186 = vsel %vm114, %v78, %v150
  %v187 = vsel %vm115, %v79, %v151
  %v188 = vsel %vm116, %v80, %v152
  %v189 = vsel %vm117, %v81, %v153
  %v190 = vsel %vm118, %v82, %v154
  %v191 = vsel %vm119, %v83, %v155
  %v192 = vsel %vm120, %v84, %v156
  %v193 = vsel %vm121, %v85, %v157
  %v194 = vsel %vm122, %v86, %v158
  %v195 = vsel %vm123, %v87, %v159
  %v196 = vsel %vm124, %v88, %v160
  %v197 = vpack.c.bf16 %v162, %v161
  %v198 = vpack.c.bf16 %v164, %v163
  %v199 = vpack.c.bf16 %v166, %v165
  %v200 = vpack.c.bf16 %v168, %v167
  %v201 = vpack.c.bf16 %v170, %v169
  %v202 = vpack.c.bf16 %v172, %v171
  %v203 = vpack.c.bf16 %v174, %v173
  %v204 = vpack.c.bf16 %v176, %v175
  %v205 = vpack.c.bf16 %v178, %v177
  %v206 = vpack.c.bf16 %v180, %v179
  %v207 = vpack.c.bf16 %v182, %v181
  %v208 = vpack.c.bf16 %v184, %v183
  %v209 = vpack.c.bf16 %v186, %v185
  %v210 = vpack.c.bf16 %v188, %v187
  %v211 = vpack.c.bf16 %v190, %v189
  %v212 = vpack.c.bf16 %v192, %v191
  %v213 = vpack.c.bf16 %v194, %v193
  %v214 = vpack.c.bf16 %v196, %v195
  %v216 = vshrl.u32 %v197, 16
  %v218 = vshll.u32 %v197, 16
  %v220 = vrot.slane %v218, 1
  %v221 = vor.u32 %v216, %v220
  %v223 = vshrl.u32 %v198, 16
  %v225 = vshll.u32 %v198, 16
  %v227 = vrot.slane %v225, 1
  %v228 = vor.u32 %v223, %v227
  %v230 = vshrl.u32 %v199, 16
  %v232 = vshll.u32 %v199, 16
  %v234 = vrot.slane %v232, 1
  %v235 = vor.u32 %v230, %v234
  %v237 = vshrl.u32 %v200, 16
  %v239 = vshll.u32 %v200, 16
  %v241 = vrot.slane %v239, 1
  %v242 = vor.u32 %v237, %v241
  %v244 = vshrl.u32 %v201, 16
  %v246 = vshll.u32 %v201, 16
  %v248 = vrot.slane %v246, 1
  %v249 = vor.u32 %v244, %v248
  %v251 = vshrl.u32 %v202, 16
  %v253 = vshll.u32 %v202, 16
  %v255 = vrot.slane %v253, 1
  %v256 = vor.u32 %v251, %v255
  %v258 = vshrl.u32 %v203, 16
  %v260 = vshll.u32 %v203, 16
  %v262 = vrot.slane %v260, 1
  %v263 = vor.u32 %v258, %v262
  %v265 = vshrl.u32 %v204, 16
  %v267 = vshll.u32 %v204, 16
  %v269 = vrot.slane %v267, 1
  %v270 = vor.u32 %v265, %v269
  %v272 = vshrl.u32 %v206, 16
  %v274 = vshll.u32 %v206, 16
  %v276 = vrot.slane %v274, 1
  %v277 = vor.u32 %v272, %v276
  %v279 = vshrl.u32 %v207, 16
  %v281 = vshll.u32 %v207, 16
  %v283 = vrot.slane %v281, 1
  %v284 = vor.u32 %v279, %v283
  %v286 = vshrl.u32 %v208, 16
  %v288 = vshll.u32 %v208, 16
  %v290 = vrot.slane %v288, 1
  %v291 = vor.u32 %v286, %v290
  %v293 = vshrl.u32 %v209, 16
  %v295 = vshll.u32 %v209, 16
  %v297 = vrot.slane %v295, 1
  %v298 = vor.u32 %v293, %v297
  %v300 = vshrl.u32 %v210, 16
  %v302 = vshll.u32 %v210, 16
  %v304 = vrot.slane %v302, 1
  %v305 = vor.u32 %v300, %v304
  %v307 = vshrl.u32 %v211, 16
  %v309 = vshll.u32 %v211, 16
  %v311 = vrot.slane %v309, 1
  %v312 = vor.u32 %v307, %v311
  %v314 = vshrl.u32 %v212, 16
  %v316 = vshll.u32 %v212, 16
  %v318 = vrot.slane %v316, 1
  %v319 = vor.u32 %v314, %v318
  %v321 = vshrl.u32 %v213, 16
  %v323 = vshll.u32 %v213, 16
  %v325 = vrot.slane %v323, 1
  %v326 = vor.u32 %v321, %v325
  %327 = vrot.lane.b32.xlu0 %v221, 16
  %v328 = vpop.permute.xlu0 %327
  %329 = vrot.lane.b32.xlu0 %v228, 16
  %v330 = vpop.permute.xlu0 %329
  %331 = vrot.lane.b32.xlu0 %v235, 16
  %v332 = vpop.permute.xlu0 %331
  %333 = vrot.lane.b32.xlu0 %v242, 16
  %v334 = vpop.permute.xlu0 %333
  %335 = vrot.lane.b32.xlu0 %v249, 16
  %v336 = vpop.permute.xlu0 %335
  %337 = vrot.lane.b32.xlu0 %v256, 16
  %v338 = vpop.permute.xlu0 %337
  %339 = vrot.lane.b32.xlu0 %v263, 16
  %v340 = vpop.permute.xlu0 %339
  %341 = vrot.lane.b32.xlu0 %v270, 16
  %v342 = vpop.permute.xlu0 %341
  %343 = vrot.lane.b32.xlu0 %v277, 16
  %v344 = vpop.permute.xlu0 %343
  %345 = vrot.lane.b32.xlu0 %v284, 16
  %v346 = vpop.permute.xlu0 %345
  %347 = vrot.lane.b32.xlu0 %v291, 16
  %v348 = vpop.permute.xlu0 %347
  %349 = vrot.lane.b32.xlu0 %v298, 16
  %v350 = vpop.permute.xlu0 %349
  %351 = vrot.lane.b32.xlu0 %v305, 16
  %v352 = vpop.permute.xlu0 %351
  %353 = vrot.lane.b32.xlu0 %v312, 16
  %v354 = vpop.permute.xlu0 %353
  %355 = vrot.lane.b32.xlu0 %v319, 16
  %v356 = vpop.permute.xlu0 %355
  %357 = vrot.lane.b32.xlu0 %v326, 16
  %v358 = vpop.permute.xlu0 %357
  %375 = vrot.lane.b32.xlu0 %v198, 32
  %v376 = vpop.permute.xlu0 %375
  %377 = vrot.lane.b32.xlu0 %v199, 32
  %v378 = vpop.permute.xlu0 %377
  %379 = vrot.lane.b32.xlu0 %v200, 32
  %v380 = vpop.permute.xlu0 %379
  %381 = vrot.lane.b32.xlu0 %v201, 32
  %v382 = vpop.permute.xlu0 %381
  %383 = vrot.lane.b32.xlu0 %v202, 32
  %v384 = vpop.permute.xlu0 %383
  %385 = vrot.lane.b32.xlu0 %v203, 32
  %v386 = vpop.permute.xlu0 %385
  %387 = vrot.lane.b32.xlu0 %v204, 32
  %v388 = vpop.permute.xlu0 %387
  %389 = vrot.lane.b32.xlu0 %v205, 32
  %v390 = vpop.permute.xlu0 %389
  %391 = vrot.lane.b32.xlu0 %v207, 32
  %v392 = vpop.permute.xlu0 %391
  %393 = vrot.lane.b32.xlu0 %v208, 32
  %v394 = vpop.permute.xlu0 %393
  %395 = vrot.lane.b32.xlu0 %v209, 32
  %v396 = vpop.permute.xlu0 %395
  %397 = vrot.lane.b32.xlu0 %v210, 32
  %v398 = vpop.permute.xlu0 %397
  %399 = vrot.lane.b32.xlu0 %v211, 32
  %v400 = vpop.permute.xlu0 %399
  %401 = vrot.lane.b32.xlu0 %v212, 32
  %v402 = vpop.permute.xlu0 %401
  %403 = vrot.lane.b32.xlu0 %v213, 32
  %v404 = vpop.permute.xlu0 %403
  %405 = vrot.lane.b32.xlu0 %v214, 32
  %v406 = vpop.permute.xlu0 %405
  %v408 = vshrl.u32 %v205, 16
  %v410 = vshll.u32 %v205, 16
  %v412 = vrot.slane %v410, 1
  %v413 = vor.u32 %v408, %v412
  %v415 = vshrl.u32 %v214, 16
  %v417 = vshll.u32 %v214, 16
  %v419 = vrot.slane %v417, 1
  %v420 = vor.u32 %v415, %v419
  %421 = vrot.lane.b32.xlu0 %v228, 48
  %v422 = vpop.permute.xlu0 %421
  %423 = vrot.lane.b32.xlu0 %v235, 48
  %v424 = vpop.permute.xlu0 %423
  %425 = vrot.lane.b32.xlu0 %v242, 48
  %v426 = vpop.permute.xlu0 %425
  %427 = vrot.lane.b32.xlu0 %v249, 48
  %v428 = vpop.permute.xlu0 %427
  %429 = vrot.lane.b32.xlu0 %v256, 48
  %v430 = vpop.permute.xlu0 %429
  %431 = vrot.lane.b32.xlu0 %v263, 48
  %v432 = vpop.permute.xlu0 %431
  %433 = vrot.lane.b32.xlu0 %v270, 48
  %v434 = vpop.permute.xlu0 %433
  %435 = vrot.lane.b32.xlu0 %v413, 48
  %v436 = vpop.permute.xlu0 %435
  %437 = vrot.lane.b32.xlu0 %v284, 48
  %v438 = vpop.permute.xlu0 %437
  %439 = vrot.lane.b32.xlu0 %v291, 48
  %v440 = vpop.permute.xlu0 %439
  %441 = vrot.lane.b32.xlu0 %v298, 48
  %v442 = vpop.permute.xlu0 %441
  %443 = vrot.lane.b32.xlu0 %v305, 48
  %v444 = vpop.permute.xlu0 %443
  %445 = vrot.lane.b32.xlu0 %v312, 48
  %v446 = vpop.permute.xlu0 %445
  %447 = vrot.lane.b32.xlu0 %v319, 48
  %v448 = vpop.permute.xlu0 %447
  %449 = vrot.lane.b32.xlu0 %v326, 48
  %v450 = vpop.permute.xlu0 %449
  %451 = vrot.lane.b32.xlu0 %v420, 48
  %v452 = vpop.permute.xlu0 %451
  %vm453 = vcmask 130048
  %v455 = vsel %vm453, %v197, %v328
  %v457 = vsel %vm453, %v198, %v330
  %v459 = vsel %vm453, %v199, %v332
  %v461 = vsel %vm453, %v200, %v334
  %v463 = vsel %vm453, %v201, %v336
  %v465 = vsel %vm453, %v202, %v338
  %v467 = vsel %vm453, %v203, %v340
  %v469 = vsel %vm453, %v204, %v342
  %v471 = vsel %vm453, %v206, %v344
  %v473 = vsel %vm453, %v207, %v346
  %v475 = vsel %vm453, %v208, %v348
  %v477 = vsel %vm453, %v209, %v350
  %v479 = vsel %vm453, %v210, %v352
  %v481 = vsel %vm453, %v211, %v354
  %v483 = vsel %vm453, %v212, %v356
  %v485 = vsel %vm453, %v213, %v358
  %vm486 = vcmask 261120
  %v488 = vsel %vm486, %v455, %v376
  %v490 = vsel %vm486, %v457, %v378
  %v492 = vsel %vm486, %v459, %v380
  %v494 = vsel %vm486, %v461, %v382
  %v496 = vsel %vm486, %v463, %v384
  %v498 = vsel %vm486, %v465, %v386
  %v500 = vsel %vm486, %v467, %v388
  %v502 = vsel %vm486, %v469, %v390
  %v504 = vsel %vm486, %v471, %v392
  %v506 = vsel %vm486, %v473, %v394
  %v508 = vsel %vm486, %v475, %v396
  %v510 = vsel %vm486, %v477, %v398
  %v512 = vsel %vm486, %v479, %v400
  %v514 = vsel %vm486, %v481, %v402
  %v516 = vsel %vm486, %v483, %v404
  %v518 = vsel %vm486, %v485, %v406
  %vm519 = vcmask 392192
  %v521 = vsel %vm519, %v488, %v422
  %v523 = vsel %vm519, %v490, %v424
  %v525 = vsel %vm519, %v492, %v426
  %v527 = vsel %vm519, %v494, %v428
  %v529 = vsel %vm519, %v496, %v430
  %v531 = vsel %vm519, %v498, %v432
  %v533 = vsel %vm519, %v500, %v434
  %v535 = vsel %vm519, %v502, %v436
  %v537 = vsel %vm519, %v504, %v438
  %v539 = vsel %vm519, %v506, %v440
  %v541 = vsel %vm519, %v508, %v442
  %v543 = vsel %vm519, %v510, %v444
  %v545 = vsel %vm519, %v512, %v446
  %v547 = vsel %vm519, %v514, %v448
  %v549 = vsel %vm519, %v516, %v450
  %v551 = vsel %vm519, %v518, %v452
  %v552 = vld [vmem:[%s1] sm:$0xf]
  %v553 = vld [vmem:[%s1 + $0x4] sm:$0xf]
  %v554 = vld [vmem:[%s1 + $0x8] sm:$0xf]
  %v555 = vld [vmem:[%s1 + $0xc] sm:$0xf]
  %v556 = vld [vmem:[%s1 + $0x10] sm:$0xf]
  %v557 = vld [vmem:[%s1 + $0x14] sm:$0xf]
  %v558 = vld [vmem:[%s1 + $0x18] sm:$0xf]
  %v559 = vld [vmem:[%s1 + $0x1c] sm:$0xf]
  %v576 = vunpack.c.l.b16 %v521
  %v577 = vunpack.c.l.b16 %v523
  %v578 = vunpack.c.l.b16 %v525
  %v579 = vunpack.c.l.b16 %v527
  %v580 = vunpack.c.l.b16 %v529
  %v581 = vunpack.c.l.b16 %v531
  %v582 = vunpack.c.l.b16 %v533
  %v583 = vunpack.c.l.b16 %v535
  %v584 = vunpack.c.l.b16 %v537
  %v585 = vunpack.c.l.b16 %v539
  %v586 = vunpack.c.l.b16 %v541
  %v587 = vunpack.c.l.b16 %v543
  %v588 = vunpack.c.l.b16 %v545
  %v589 = vunpack.c.l.b16 %v547
  %v590 = vunpack.c.l.b16 %v549
  %v591 = vunpack.c.l.b16 %v551
  %v592 = vpack.c.b16 %v577, %v576
  %v593 = vpack.c.b16 %v579, %v578
  %v594 = vpack.c.b16 %v581, %v580
  %v595 = vpack.c.b16 %v583, %v582
  %v596 = vpack.c.b16 %v585, %v584
  %v597 = vpack.c.b16 %v587, %v586
  %v598 = vpack.c.b16 %v589, %v588
  %v599 = vpack.c.b16 %v591, %v590
  %v608 = vunpack.c.l.b16 %v552
  %v609 = vunpack.c.l.b16 %v553
  %v610 = vunpack.c.l.b16 %v554
  %v611 = vunpack.c.l.b16 %v555
  %v612 = vunpack.c.l.b16 %v556
  %v613 = vunpack.c.l.b16 %v557
  %v614 = vunpack.c.l.b16 %v558
  %v615 = vunpack.c.l.b16 %v559
  %v616 = vpack.c.b16 %v609, %v608
  %v617 = vpack.c.b16 %v611, %v610
  %v618 = vpack.c.b16 %v613, %v612
  %v619 = vpack.c.b16 %v615, %v614
  %vm624 = vcmask 523264
  %v626 = vsel %vm624, %v592, 0
  %v629 = vsel %vm624, %v593, 0
  %v632 = vsel %vm624, %v594, 0
  %v635 = vsel %vm624, %v595, 0
  %v638 = vsel %vm624, %v596, 0
  %v641 = vsel %vm624, %v597, 0
  %v644 = vsel %vm624, %v598, 0
  %v647 = vsel %vm624, %v599, 0
  %649 = vmatprep.subr.bf16.mxu0 0
  %650 = vmatpush1.bf16.msra.mxu0 %v616
  %651 = vmatprep.subr.bf16.mxu0 0
  %652 = vmatpush1.bf16.msra.mxu0 %v617
  %653 = vmatprep.subr.bf16.mxu0 0
  %654 = vmatpush1.bf16.msra.mxu0 %v618
  %655 = vmatprep.subr.bf16.mxu0 0
  %656 = vmatpush1.bf16.msra.mxu0 %v619
  %657 = vmatprep.subr.bf16.mxu0 0
  %658 = vmatpush1.bf16.msra.mxu0 0
  %659 = vmatprep.subr.bf16.mxu0 0
  %660 = vmatpush1.bf16.msra.mxu0 0
  %661 = vmatprep.subr.bf16.mxu0 0
  %662 = vmatpush1.bf16.msra.mxu0 0
  %663 = vmatprep.subr.bf16.mxu0 0
  %664 = vmatpush1.bf16.msra.mxu0 0
  %665 = vmatprep.subr.bf16.mxu0 0
  %666 = vmatpush1.bf16.msra.mxu0 0
  %667 = vmatprep.subr.bf16.mxu0 0
  %668 = vmatpush1.bf16.msra.mxu0 0
  %669 = vmatprep.subr.bf16.mxu0 0
  %670 = vmatpush1.bf16.msra.mxu0 0
  %671 = vmatprep.subr.bf16.mxu0 0
  %672 = vmatpush1.bf16.msra.mxu0 0
  %673 = vmatprep.subr.bf16.mxu0 0
  %674 = vmatpush1.bf16.msra.mxu0 0
  %675 = vmatprep.subr.bf16.mxu0 0
  %676 = vmatpush1.bf16.msra.mxu0 0
  %677 = vmatprep.subr.bf16.mxu0 0
  %678 = vmatpush1.bf16.msra.mxu0 0
  %679 = vmatprep.subr.bf16.mxu0 0
  %680 = vmatpush1.bf16.msra.mxu0 0
  %681 = vmatprep.mubr.bf16.mxu0 0
  %682 = vmatmul.mubr.bf16.gmra.mrb[0].mxu0 %v626
  %v683 = vpop.f32.mrb[0].mxu0
  %v684 = vadd.f32 0.0, %v683
  %v685 = vpop.f32.mrb[0].mxu0
  %v686 = vpop.f32.mrb[0].mxu0
  %v687 = vadd.f32 0.0, %v686
  %v688 = vpop.f32.mrb[0].mxu0
  %689 = vmatprep.mubr.bf16.mxu0 0
  %690 = vmatmul.mubr.bf16.gmra.mrb[0].mxu0 %v629
  %v691 = vpop.f32.mrb[0].mxu0
  %v692 = vadd.f32 0.0, %v691
  %v693 = vpop.f32.mrb[0].mxu0
  %v694 = vpop.f32.mrb[0].mxu0
  %v695 = vadd.f32 0.0, %v694
  %v696 = vpop.f32.mrb[0].mxu0
  %697 = vmatprep.mubr.bf16.mxu0 0
  %698 = vmatmul.mubr.bf16.gmra.mrb[0].mxu0 %v632
  %v699 = vpop.f32.mrb[0].mxu0
  %v700 = vadd.f32 0.0, %v699
  %v701 = vpop.f32.mrb[0].mxu0
  %v702 = vpop.f32.mrb[0].mxu0
  %v703 = vadd.f32 0.0, %v702
  %v704 = vpop.f32.mrb[0].mxu0
  %705 = vmatprep.mubr.bf16.mxu0 0
  %706 = vmatmul.mubr.bf16.gmra.mrb[0].mxu0 %v635
  %v707 = vpop.f32.mrb[0].mxu0
  %v708 = vadd.f32 0.0, %v707
  %v709 = vpop.f32.mrb[0].mxu0
  %v710 = vpop.f32.mrb[0].mxu0
  %v711 = vadd.f32 0.0, %v710
  %v712 = vpop.f32.mrb[0].mxu0
  %713 = vmatprep.mubr.bf16.mxu0 0
  %714 = vmatmul.mubr.bf16.gmra.mrb[0].mxu0 %v638
  %v715 = vpop.f32.mrb[0].mxu0
  %v716 = vadd.f32 0.0, %v715
  %v717 = vpop.f32.mrb[0].mxu0
  %v718 = vpop.f32.mrb[0].mxu0
  %v719 = vadd.f32 0.0, %v718
  %v720 = vpop.f32.mrb[0].mxu0
  %721 = vmatprep.mubr.bf16.mxu0 0
  %722 = vmatmul.mubr.bf16.gmra.mrb[0].mxu0 %v641
  %v723 = vpop.f32.mrb[0].mxu0
  %v724 = vadd.f32 0.0, %v723
  %v725 = vpop.f32.mrb[0].mxu0
  %v726 = vpop.f32.mrb[0].mxu0
  %v727 = vadd.f32 0.0, %v726
  %v728 = vpop.f32.mrb[0].mxu0
  %729 = vmatprep.mubr.bf16.mxu0 0
  %730 = vmatmul.mubr.bf16.gmra.mrb[0].mxu0 %v644
  %v731 = vpop.f32.mrb[0].mxu0
  %v732 = vadd.f32 0.0, %v731
  %v733 = vpop.f32.mrb[0].mxu0
  %v734 = vpop.f32.mrb[0].mxu0
  %v735 = vadd.f32 0.0, %v734
  %v736 = vpop.f32.mrb[0].mxu0
  %737 = vmatprep.mubr.bf16.mxu0 0
  %738 = vmatmul.mubr.bf16.gmra.mrb[0].mxu0 %v647
  %v739 = vpop.f32.mrb[0].mxu0
  %v740 = vadd.f32 0.0, %v739
  %v741 = vpop.f32.mrb[0].mxu0
  %v742 = vpop.f32.mrb[0].mxu0
  %v743 = vadd.f32 0.0, %v742
  %v744 = vpop.f32.mrb[0].mxu0
  %745 = vdwg.mxu0
  %v746 = vmax.f32 %v684, 0.0
  %v747 = vmax.f32 %v687, 0.0
  %v748 = vmax.f32 %v692, 0.0
  %v749 = vmax.f32 %v695, 0.0
  %v750 = vmax.f32 %v700, 0.0
  %v751 = vmax.f32 %v703, 0.0
  %v752 = vmax.f32 %v708, 0.0
  %v753 = vmax.f32 %v711, 0.0
  %v754 = vmax.f32 %v716, 0.0
  %v755 = vmax.f32 %v719, 0.0
  %v756 = vmax.f32 %v724, 0.0
  %v757 = vmax.f32 %v727, 0.0
  %v758 = vmax.f32 %v732, 0.0
  %v759 = vmax.f32 %v735, 0.0
  %v760 = vmax.f32 %v740, 0.0
  %v761 = vmax.f32 %v743, 0.0
  %vm762 = vcmask 60416
  %763 = vst.msk [vmem:[#allocation2] sm:$0xf] %vm762, 0
  %vm764 = vcmask 57344
  %765 = vst.msk [vmem:[#allocation2 + $0x4] sm:$0x1] %vm764, 0
  %766 = vst.msk [vmem:[#allocation2 + $0x50] sm:$0xf] %vm762, 0
  %767 = vst.msk [vmem:[#allocation2 + $0x54] sm:$0x1] %vm764, 0
  %s768 = scalar_lea.vmem [#allocation2], 72
  %769 = vst.msk [vmem:[%s768] sm:$0xf] %vm762, 0
  %770 = vst.msk [vmem:[%s768 + $0x4] sm:$0x1] %vm764, 0
  %771 = vst.msk [vmem:[%s768 + $0x50] sm:$0xf] %vm762, 0
  %772 = vst.msk [vmem:[%s768 + $0x54] sm:$0x1] %vm764, 0
  %s773 = scalar_lea.vmem [#allocation2], 8
  %vm774 = vcmask 57344
  %vm775 = vsmask.f32 256
  %vm776 = vmand %vm774, %vm775
  %v777 = vld [vmem:[%s773] sm:$0x1]
  %v778 = vsel %vm776, 0, %v777
  %779 = vst [vmem:[%s773] sm:$0x1] %v778
  %v780 = vld [vmem:[%s773 + $0x8] sm:$0x1]
  %v781 = vsel %vm776, 0, %v780
  %782 = vst [vmem:[%s773 + $0x8] sm:$0x1] %v781
  %v783 = vld [vmem:[%s773 + $0x10] sm:$0x1]
  %v784 = vsel %vm776, 0, %v783
  %785 = vst [vmem:[%s773 + $0x10] sm:$0x1] %v784
  %v786 = vld [vmem:[%s773 + $0x18] sm:$0x1]
  %v787 = vsel %vm776, 0, %v786
  %788 = vst [vmem:[%s773 + $0x18] sm:$0x1] %v787
  %v789 = vld [vmem:[%s773 + $0x20] sm:$0x1]
  %v790 = vsel %vm776, 0, %v789
  %791 = vst [vmem:[%s773 + $0x20] sm:$0x1] %v790
  %v792 = vld [vmem:[%s773 + $0x28] sm:$0x1]
  %v793 = vsel %vm776, 0, %v792
  %794 = vst [vmem:[%s773 + $0x28] sm:$0x1] %v793
  %v795 = vld [vmem:[%s773 + $0x30] sm:$0x1]
  %v796 = vsel %vm776, 0, %v795
  %797 = vst [vmem:[%s773 + $0x30] sm:$0x1] %v796
  %v798 = vld [vmem:[%s773 + $0x38] sm:$0x1]
  %v799 = vsel %vm776, 0, %v798
  %800 = vst [vmem:[%s773 + $0x38] sm:$0x1] %v799
  %v801 = vld [vmem:[%s773 + $0x50] sm:$0x1]
  %v802 = vsel %vm776, 0, %v801
  %803 = vst [vmem:[%s773 + $0x50] sm:$0x1] %v802
  %v804 = vld [vmem:[%s773 + $0x58] sm:$0x1]
  %v805 = vsel %vm776, 0, %v804
  %806 = vst [vmem:[%s773 + $0x58] sm:$0x1] %v805
  %v807 = vld [vmem:[%s773 + $0x60] sm:$0x1]
  %v808 = vsel %vm776, 0, %v807
  %809 = vst [vmem:[%s773 + $0x60] sm:$0x1] %v808
  %v810 = vld [vmem:[%s773 + $0x68] sm:$0x1]
  %v811 = vsel %vm776, 0, %v810
  %812 = vst [vmem:[%s773 + $0x68] sm:$0x1] %v811
  %v813 = vld [vmem:[%s773 + $0x70] sm:$0x1]
  %v814 = vsel %vm776, 0, %v813
  %815 = vst [vmem:[%s773 + $0x70] sm:$0x1] %v814
  %v816 = vld [vmem:[%s773 + $0x78] sm:$0x1]
  %v817 = vsel %vm776, 0, %v816
  %818 = vst [vmem:[%s773 + $0x78] sm:$0x1] %v817
  %v819 = vld [vmem:[%s773 + $0x80] sm:$0x1]
  %v820 = vsel %vm776, 0, %v819
  %821 = vst [vmem:[%s773 + $0x80] sm:$0x1] %v820
  %v822 = vld [vmem:[%s773 + $0x88] sm:$0x1]
  %v823 = vsel %vm776, 0, %v822
  %824 = vst [vmem:[%s773 + $0x88] sm:$0x1] %v823
  %vm825 = vsmask.f32 7938
  %vm826 = vmand %vm774, %vm825
  %v827 = vld [vmem:[%s773 + $0x4] sm:$0x1]
  %v828 = vsel %vm826, 0, %v827
  %829 = vst [vmem:[%s773 + $0x4] sm:$0x1] %v828
  %v830 = vld [vmem:[%s773 + $0xc] sm:$0x1]
  %v831 = vsel %vm826, 0, %v830
  %832 = vst [vmem:[%s773 + $0xc] sm:$0x1] %v831
  %v833 = vld [vmem:[%s773 + $0x14] sm:$0x1]
  %v834 = vsel %vm826, 0, %v833
  %835 = vst [vmem:[%s773 + $0x14] sm:$0x1] %v834
  %v836 = vld [vmem:[%s773 + $0x1c] sm:$0x1]
  %v837 = vsel %vm826, 0, %v836
  %838 = vst [vmem:[%s773 + $0x1c] sm:$0x1] %v837
  %v839 = vld [vmem:[%s773 + $0x24] sm:$0x1]
  %v840 = vsel %vm826, 0, %v839
  %841 = vst [vmem:[%s773 + $0x24] sm:$0x1] %v840
  %v842 = vld [vmem:[%s773 + $0x2c] sm:$0x1]
  %v843 = vsel %vm826, 0, %v842
  %844 = vst [vmem:[%s773 + $0x2c] sm:$0x1] %v843
  %v845 = vld [vmem:[%s773 + $0x34] sm:$0x1]
  %v846 = vsel %vm826, 0, %v845
  %847 = vst [vmem:[%s773 + $0x34] sm:$0x1] %v846
  %v848 = vld [vmem:[%s773 + $0x3c] sm:$0x1]
  %v849 = vsel %vm826, 0, %v848
  %850 = vst [vmem:[%s773 + $0x3c] sm:$0x1] %v849
  %v851 = vld [vmem:[%s773 + $0x54] sm:$0x1]
  %v852 = vsel %vm826, 0, %v851
  %853 = vst [vmem:[%s773 + $0x54] sm:$0x1] %v852
  %v854 = vld [vmem:[%s773 + $0x5c] sm:$0x1]
  %v855 = vsel %vm826, 0, %v854
  %856 = vst [vmem:[%s773 + $0x5c] sm:$0x1] %v855
  %v857 = vld [vmem:[%s773 + $0x64] sm:$0x1]
  %v858 = vsel %vm826, 0, %v857
  %859 = vst [vmem:[%s773 + $0x64] sm:$0x1] %v858
  %v860 = vld [vmem:[%s773 + $0x6c] sm:$0x1]
  %v861 = vsel %vm826, 0, %v860
  %862 = vst [vmem:[%s773 + $0x6c] sm:$0x1] %v861
  %v863 = vld [vmem:[%s773 + $0x74] sm:$0x1]
  %v864 = vsel %vm826, 0, %v863
  %865 = vst [vmem:[%s773 + $0x74] sm:$0x1] %v864
  %v866 = vld [vmem:[%s773 + $0x7c] sm:$0x1]
  %v867 = vsel %vm826, 0, %v866
  %868 = vst [vmem:[%s773 + $0x7c] sm:$0x1] %v867
  %v869 = vld [vmem:[%s773 + $0x84] sm:$0x1]
  %v870 = vsel %vm826, 0, %v869
  %871 = vst [vmem:[%s773 + $0x84] sm:$0x1] %v870
  %v872 = vld [vmem:[%s773 + $0x8c] sm:$0x1]
  %v873 = vsel %vm826, 0, %v872
  %874 = vst [vmem:[%s773 + $0x8c] sm:$0x1] %v873
  %v875 = vpack.c.bf16 %v747, %v746
  %v876 = vpack.c.bf16 %v749, %v748
  %v877 = vpack.c.bf16 %v751, %v750
  %v878 = vpack.c.bf16 %v753, %v752
  %v879 = vpack.c.bf16 %v755, %v754
  %v880 = vpack.c.bf16 %v757, %v756
  %v881 = vpack.c.bf16 %v759, %v758
  %v882 = vpack.c.bf16 %v761, %v760
  %v891 = vunpack.c.l.b16 %v875
  %v892 = vunpack.c.h.b16 %v875
  %v893 = vunpack.c.l.b16 %v876
  %v894 = vunpack.c.h.b16 %v876
  %v895 = vunpack.c.l.b16 %v877
  %v896 = vunpack.c.h.b16 %v877
  %v897 = vunpack.c.l.b16 %v878
  %v898 = vunpack.c.h.b16 %v878
  %v899 = vunpack.c.l.b16 %v879
  %v900 = vunpack.c.h.b16 %v879
  %v901 = vunpack.c.l.b16 %v880
  %v902 = vunpack.c.h.b16 %v880
  %v903 = vunpack.c.l.b16 %v881
  %v904 = vunpack.c.h.b16 %v881
  %v905 = vunpack.c.l.b16 %v882
  %v906 = vunpack.c.h.b16 %v882
  %v907 = vpack.c.b16 %v891, %v891
  %v908 = vpack.c.b16 %v892, %v892
  %v909 = vpack.c.b16 %v893, %v893
  %v910 = vpack.c.b16 %v894, %v894
  %v911 = vpack.c.b16 %v895, %v895
  %v912 = vpack.c.b16 %v896, %v896
  %v913 = vpack.c.b16 %v897, %v897
  %v914 = vpack.c.b16 %v898, %v898
  %v915 = vpack.c.b16 %v899, %v899
  %v916 = vpack.c.b16 %v900, %v900
  %v917 = vpack.c.b16 %v901, %v901
  %v918 = vpack.c.b16 %v902, %v902
  %v919 = vpack.c.b16 %v903, %v903
  %v920 = vpack.c.b16 %v904, %v904
  %v921 = vpack.c.b16 %v905, %v905
  %v922 = vpack.c.b16 %v906, %v906
  %v924 = vshrl.u32 %v907, 16
  %v926 = vrot.slane %v924, 7
  %v927 = vshll.u32 %v907, 16
  %v929 = vor.u32 %v926, %v927
  %v930 = vrot.slane %v926, 4
  %v932 = vshrl.u32 %v908, 16
  %v934 = vrot.slane %v932, 7
  %v935 = vshll.u32 %v908, 16
  %v937 = vor.u32 %v934, %v935
  %v938 = vrot.slane %v934, 4
  %v940 = vshrl.u32 %v909, 16
  %v942 = vrot.slane %v940, 7
  %v943 = vshll.u32 %v909, 16
  %v945 = vor.u32 %v942, %v943
  %v946 = vrot.slane %v942, 4
  %v948 = vshrl.u32 %v910, 16
  %v950 = vrot.slane %v948, 7
  %v951 = vshll.u32 %v910, 16
  %v953 = vor.u32 %v950, %v951
  %v954 = vrot.slane %v950, 4
  %v956 = vshrl.u32 %v911, 16
  %v958 = vrot.slane %v956, 7
  %v959 = vshll.u32 %v911, 16
  %v961 = vor.u32 %v958, %v959
  %v962 = vrot.slane %v958, 4
  %v964 = vshrl.u32 %v912, 16
  %v966 = vrot.slane %v964, 7
  %v967 = vshll.u32 %v912, 16
  %v969 = vor.u32 %v966, %v967
  %v970 = vrot.slane %v966, 4
  %v972 = vshrl.u32 %v913, 16
  %v974 = vrot.slane %v972, 7
  %v975 = vshll.u32 %v913, 16
  %v977 = vor.u32 %v974, %v975
  %v978 = vrot.slane %v974, 4
  %v980 = vshrl.u32 %v914, 16
  %v982 = vrot.slane %v980, 7
  %v983 = vshll.u32 %v914, 16
  %v985 = vor.u32 %v982, %v983
  %v986 = vrot.slane %v982, 4
  %v988 = vshrl.u32 %v915, 16
  %v990 = vrot.slane %v988, 7
  %v991 = vshll.u32 %v915, 16
  %v993 = vor.u32 %v990, %v991
  %v994 = vrot.slane %v990, 4
  %v996 = vshrl.u32 %v916, 16
  %v998 = vrot.slane %v996, 7
  %v999 = vshll.u32 %v916, 16
  %v1001 = vor.u32 %v998, %v999
  %v1002 = vrot.slane %v998, 4
  %v1004 = vshrl.u32 %v917, 16
  %v1006 = vrot.slane %v1004, 7
  %v1007 = vshll.u32 %v917, 16
  %v1009 = vor.u32 %v1006, %v1007
  %v1010 = vrot.slane %v1006, 4
  %v1012 = vshrl.u32 %v918, 16
  %v1014 = vrot.slane %v1012, 7
  %v1015 = vshll.u32 %v918, 16
  %v1017 = vor.u32 %v1014, %v1015
  %v1018 = vrot.slane %v1014, 4
  %v1020 = vshrl.u32 %v919, 16
  %v1022 = vrot.slane %v1020, 7
  %v1023 = vshll.u32 %v919, 16
  %v1025 = vor.u32 %v1022, %v1023
  %v1026 = vrot.slane %v1022, 4
  %v1028 = vshrl.u32 %v920, 16
  %v1030 = vrot.slane %v1028, 7
  %v1031 = vshll.u32 %v920, 16
  %v1033 = vor.u32 %v1030, %v1031
  %v1034 = vrot.slane %v1030, 4
  %v1036 = vshrl.u32 %v921, 16
  %v1038 = vrot.slane %v1036, 7
  %v1039 = vshll.u32 %v921, 16
  %v1041 = vor.u32 %v1038, %v1039
  %v1042 = vrot.slane %v1038, 4
  %v1044 = vshrl.u32 %v922, 16
  %v1046 = vrot.slane %v1044, 7
  %v1047 = vshll.u32 %v922, 16
  %v1049 = vor.u32 %v1046, %v1047
  %v1050 = vrot.slane %v1046, 4
  %vm1083 = vcmask 60416
  %vm1084 = vmand %vm1083, %vm825
  %v1085 = vld [vmem:[%s773] sm:$0xf]
  %v1086 = vsel %vm1084, %v929, %v1085
  %1087 = vst [vmem:[%s773] sm:$0xf] %v1086
  %v1088 = vld [vmem:[%s773 + $0x4] sm:$0x1]
  %v1089 = vsel %vm776, %v930, %v1088
  %1090 = vst [vmem:[%s773 + $0x4] sm:$0x1] %v1089
  %v1091 = vld [vmem:[%s773 + $0x8] sm:$0xf]
  %v1092 = vsel %vm1084, %v937, %v1091
  %1093 = vst [vmem:[%s773 + $0x8] sm:$0xf] %v1092
  %v1094 = vld [vmem:[%s773 + $0xc] sm:$0x1]
  %v1095 = vsel %vm776, %v938, %v1094
  %1096 = vst [vmem:[%s773 + $0xc] sm:$0x1] %v1095
  %v1097 = vld [vmem:[%s773 + $0x10] sm:$0xf]
  %v1098 = vsel %vm1084, %v945, %v1097
  %1099 = vst [vmem:[%s773 + $0x10] sm:$0xf] %v1098
  %v1100 = vld [vmem:[%s773 + $0x14] sm:$0x1]
  %v1101 = vsel %vm776, %v946, %v1100
  %1102 = vst [vmem:[%s773 + $0x14] sm:$0x1] %v1101
  %v1103 = vld [vmem:[%s773 + $0x18] sm:$0xf]
  %v1104 = vsel %vm1084, %v953, %v1103
  %1105 = vst [vmem:[%s773 + $0x18] sm:$0xf] %v1104
  %v1106 = vld [vmem:[%s773 + $0x1c] sm:$0x1]
  %v1107 = vsel %vm776, %v954, %v1106
  %1108 = vst [vmem:[%s773 + $0x1c] sm:$0x1] %v1107
  %v1109 = vld [vmem:[%s773 + $0x20] sm:$0xf]
  %v1110 = vsel %vm1084, %v961, %v1109
  %1111 = vst [vmem:[%s773 + $0x20] sm:$0xf] %v1110
  %v1112 = vld [vmem:[%s773 + $0x24] sm:$0x1]
  %v1113 = vsel %vm776, %v962, %v1112
  %1114 = vst [vmem:[%s773 + $0x24] sm:$0x1] %v1113
  %v1115 = vld [vmem:[%s773 + $0x28] sm:$0xf]
  %v1116 = vsel %vm1084, %v969, %v1115
  %1117 = vst [vmem:[%s773 + $0x28] sm:$0xf] %v1116
  %v1118 = vld [vmem:[%s773 + $0x2c] sm:$0x1]
  %v1119 = vsel %vm776, %v970, %v1118
  %1120 = vst [vmem:[%s773 + $0x2c] sm:$0x1] %v1119
  %v1121 = vld [vmem:[%s773 + $0x30] sm:$0xf]
  %v1122 = vsel %vm1084, %v977, %v1121
  %1123 = vst [vmem:[%s773 + $0x30] sm:$0xf] %v1122
  %v1124 = vld [vmem:[%s773 + $0x34] sm:$0x1]
  %v1125 = vsel %vm776, %v978, %v1124
  %1126 = vst [vmem:[%s773 + $0x34] sm:$0x1] %v1125
  %v1127 = vld [vmem:[%s773 + $0x38] sm:$0xf]
  %v1128 = vsel %vm1084, %v985, %v1127
  %1129 = vst [vmem:[%s773 + $0x38] sm:$0xf] %v1128
  %v1130 = vld [vmem:[%s773 + $0x3c] sm:$0x1]
  %v1131 = vsel %vm776, %v986, %v1130
  %1132 = vst [vmem:[%s773 + $0x3c] sm:$0x1] %v1131
  %v1133 = vld [vmem:[%s773 + $0x50] sm:$0xf]
  %v1134 = vsel %vm1084, %v993, %v1133
  %1135 = vst [vmem:[%s773 + $0x50] sm:$0xf] %v1134
  %v1136 = vld [vmem:[%s773 + $0x54] sm:$0x1]
  %v1137 = vsel %vm776, %v994, %v1136
  %1138 = vst [vmem:[%s773 + $0x54] sm:$0x1] %v1137
  %v1139 = vld [vmem:[%s773 + $0x58] sm:$0xf]
  %v1140 = vsel %vm1084, %v1001, %v1139
  %1141 = vst [vmem:[%s773 + $0x58] sm:$0xf] %v1140
  %v1142 = vld [vmem:[%s773 + $0x5c] sm:$0x1]
  %v1143 = vsel %vm776, %v1002, %v1142
  %1144 = vst [vmem:[%s773 + $0x5c] sm:$0x1] %v1143
  %v1145 = vld [vmem:[%s773 + $0x60] sm:$0xf]
  %v1146 = vsel %vm1084, %v1009, %v1145
  %1147 = vst [vmem:[%s773 + $0x60] sm:$0xf] %v1146
  %v1148 = vld [vmem:[%s773 + $0x64] sm:$0x1]
  %v1149 = vsel %vm776, %v1010, %v1148
  %1150 = vst [vmem:[%s773 + $0x64] sm:$0x1] %v1149
  %v1151 = vld [vmem:[%s773 + $0x68] sm:$0xf]
  %v1152 = vsel %vm1084, %v1017, %v1151
  %1153 = vst [vmem:[%s773 + $0x68] sm:$0xf] %v1152
  %v1154 = vld [vmem:[%s773 + $0x6c] sm:$0x1]
  %v1155 = vsel %vm776, %v1018, %v1154
  %1156 = vst [vmem:[%s773 + $0x6c] sm:$0x1] %v1155
  %v1157 = vld [vmem:[%s773 + $0x70] sm:$0xf]
  %v1158 = vsel %vm1084, %v1025, %v1157
  %1159 = vst [vmem:[%s773 + $0x70] sm:$0xf] %v1158
  %v1160 = vld [vmem:[%s773 + $0x74] sm:$0x1]
  %v1161 = vsel %vm776, %v1026, %v1160
  %1162 = vst [vmem:[%s773 + $0x74] sm:$0x1] %v1161
  %v1163 = vld [vmem:[%s773 + $0x78] sm:$0xf]
  %v1164 = vsel %vm1084, %v1033, %v1163
  %1165 = vst [vmem:[%s773 + $0x78] sm:$0xf] %v1164
  %v1166 = vld [vmem:[%s773 + $0x7c] sm:$0x1]
  %v1167 = vsel %vm776, %v1034, %v1166
  %1168 = vst [vmem:[%s773 + $0x7c] sm:$0x1] %v1167
  %v1169 = vld [vmem:[%s773 + $0x80] sm:$0xf]
  %v1170 = vsel %vm1084, %v1041, %v1169
  %1171 = vst [vmem:[%s773 + $0x80] sm:$0xf] %v1170
  %v1172 = vld [vmem:[%s773 + $0x84] sm:$0x1]
  %v1173 = vsel %vm776, %v1042, %v1172
  %1174 = vst [vmem:[%s773 + $0x84] sm:$0x1] %v1173
  %v1175 = vld [vmem:[%s773 + $0x88] sm:$0xf]
  %v1176 = vsel %vm1084, %v1049, %v1175
  %1177 = vst [vmem:[%s773 + $0x88] sm:$0xf] %v1176
  %v1178 = vld [vmem:[%s773 + $0x8c] sm:$0x1]
  %v1179 = vsel %vm776, %v1050, %v1178
  %1180 = vst [vmem:[%s773 + $0x8c] sm:$0x1] %v1179
  %v1181 = vld [vmem:[#allocation2] sm:$0xf]
  %v1182 = vld [vmem:[#allocation2 + $0x8] sm:$0xf]
  %v1183 = vld [vmem:[#allocation2 + $0x10] sm:$0xf]
  %v1184 = vld [vmem:[#allocation2 + $0x18] sm:$0xf]
  %v1185 = vld [vmem:[#allocation2 + $0x20] sm:$0xf]
  %v1186 = vld [vmem:[#allocation2 + $0x28] sm:$0xf]
  %v1187 = vld [vmem:[#allocation2 + $0x30] sm:$0xf]
  %v1188 = vld [vmem:[#allocation2 + $0x38] sm:$0xf]
  %v1189 = vld [vmem:[#allocation2 + $0x50] sm:$0xf]
  %v1190 = vld [vmem:[#allocation2 + $0x58] sm:$0xf]
  %v1191 = vld [vmem:[#allocation2 + $0x60] sm:$0xf]
  %v1192 = vld [vmem:[#allocation2 + $0x68] sm:$0xf]
  %v1193 = vld [vmem:[#allocation2 + $0x70] sm:$0xf]
  %v1194 = vld [vmem:[#allocation2 + $0x78] sm:$0xf]
  %v1195 = vld [vmem:[#allocation2 + $0x80] sm:$0xf]
  %v1196 = vld [vmem:[#allocation2 + $0x88] sm:$0xf]
  %v1197 = vld [vmem:[#allocation2 + $0x4] sm:$0x1]
  %v1198 = vld [vmem:[#allocation2 + $0xc] sm:$0x1]
  %v1199 = vld [vmem:[#allocation2 + $0x14] sm:$0x1]
  %v1200 = vld [vmem:[#allocation2 + $0x1c] sm:$0x1]
  %v1201 = vld [vmem:[#allocation2 + $0x24] sm:$0x1]
  %v1202 = vld [vmem:[#allocation2 + $0x2c] sm:$0x1]
  %v1203 = vld [vmem:[#allocation2 + $0x34] sm:$0x1]
  %v1204 = vld [vmem:[#allocation2 + $0x3c] sm:$0x1]
  %v1205 = vld [vmem:[#allocation2 + $0x54] sm:$0x1]
  %v1206 = vld [vmem:[#allocation2 + $0x5c] sm:$0x1]
  %v1207 = vld [vmem:[#allocation2 + $0x64] sm:$0x1]
  %v1208 = vld [vmem:[#allocation2 + $0x6c] sm:$0x1]
  %v1209 = vld [vmem:[#allocation2 + $0x74] sm:$0x1]
  %v1210 = vld [vmem:[#allocation2 + $0x7c] sm:$0x1]
  %v1211 = vld [vmem:[#allocation2 + $0x84] sm:$0x1]
  %v1212 = vld [vmem:[#allocation2 + $0x8c] sm:$0x1]
  %v1213 = vld [vmem:[%s773] sm:$0xf]
  %v1214 = vld [vmem:[%s773 + $0x8] sm:$0xf]
  %v1215 = vld [vmem:[%s773 + $0x10] sm:$0xf]
  %v1216 = vld [vmem:[%s773 + $0x18] sm:$0xf]
  %v1217 = vld [vmem:[%s773 + $0x20] sm:$0xf]
  %v1218 = vld [vmem:[%s773 + $0x28] sm:$0xf]
  %v1219 = vld [vmem:[%s773 + $0x30] sm:$0xf]
  %v1220 = vld [vmem:[%s773 + $0x38] sm:$0xf]
  %v1221 = vld [vmem:[%s773 + $0x50] sm:$0xf]
  %v1222 = vld [vmem:[%s773 + $0x58] sm:$0xf]
  %v1223 = vld [vmem:[%s773 + $0x60] sm:$0xf]
  %v1224 = vld [vmem:[%s773 + $0x68] sm:$0xf]
  %v1225 = vld [vmem:[%s773 + $0x70] sm:$0xf]
  %v1226 = vld [vmem:[%s773 + $0x78] sm:$0xf]
  %v1227 = vld [vmem:[%s773 + $0x80] sm:$0xf]
  %v1228 = vld [vmem:[%s773 + $0x88] sm:$0xf]
  %v1229 = vld [vmem:[%s773 + $0x4] sm:$0x1]
  %v1230 = vld [vmem:[%s773 + $0xc] sm:$0x1]
  %v1231 = vld [vmem:[%s773 + $0x14] sm:$0x1]
  %v1232 = vld [vmem:[%s773 + $0x1c] sm:$0x1]
  %v1233 = vld [vmem:[%s773 + $0x24] sm:$0x1]
  %v1234 = vld [vmem:[%s773 + $0x2c] sm:$0x1]
  %v1235 = vld [vmem:[%s773 + $0x34] sm:$0x1]
  %v1236 = vld [vmem:[%s773 + $0x3c] sm:$0x1]
  %v1237 = vld [vmem:[%s773 + $0x54] sm:$0x1]
  %v1238 = vld [vmem:[%s773 + $0x5c] sm:$0x1]
  %v1239 = vld [vmem:[%s773 + $0x64] sm:$0x1]
  %v1240 = vld [vmem:[%s773 + $0x6c] sm:$0x1]
  %v1241 = vld [vmem:[%s773 + $0x74] sm:$0x1]
  %v1242 = vld [vmem:[%s773 + $0x7c] sm:$0x1]
  %v1243 = vld [vmem:[%s773 + $0x84] sm:$0x1]
  %v1244 = vld [vmem:[%s773 + $0x8c] sm:$0x1]
  %v1277 = vunpack.c.l.b16 %v1181
  %v1278 = vunpack.c.l.b16 %v1197
  %v1279 = vunpack.c.l.b16 %v1182
  %v1280 = vunpack.c.l.b16 %v1198
  %v1281 = vunpack.c.l.b16 %v1183
  %v1282 = vunpack.c.l.b16 %v1199
  %v1283 = vunpack.c.l.b16 %v1184
  %v1284 = vunpack.c.l.b16 %v1200
  %v1285 = vunpack.c.l.b16 %v1185
  %v1286 = vunpack.c.l.b16 %v1201
  %v1287 = vunpack.c.l.b16 %v1186
  %v1288 = vunpack.c.l.b16 %v1202
  %v1289 = vunpack.c.l.b16 %v1187
  %v1290 = vunpack.c.l.b16 %v1203
  %v1291 = vunpack.c.l.b16 %v1188
  %v1292 = vunpack.c.l.b16 %v1204
  %v1293 = vunpack.c.l.b16 %v1189
  %v1294 = vunpack.c.l.b16 %v1205
  %v1295 = vunpack.c.l.b16 %v1190
  %v1296 = vunpack.c.l.b16 %v1206
  %v1297 = vunpack.c.l.b16 %v1191
  %v1298 = vunpack.c.l.b16 %v1207
  %v1299 = vunpack.c.l.b16 %v1192
  %v1300 = vunpack.c.l.b16 %v1208
  %v1301 = vunpack.c.l.b16 %v1193
  %v1302 = vunpack.c.l.b16 %v1209
  %v1303 = vunpack.c.l.b16 %v1194
  %v1304 = vunpack.c.l.b16 %v1210
  %v1305 = vunpack.c.l.b16 %v1195
  %v1306 = vunpack.c.l.b16 %v1211
  %v1307 = vunpack.c.l.b16 %v1196
  %v1308 = vunpack.c.l.b16 %v1212
  %v1309 = vpack.c.b16 %v1278, %v1277
  %v1310 = vpack.c.b16 %v1280, %v1279
  %v1311 = vpack.c.b16 %v1282, %v1281
  %v1312 = vpack.c.b16 %v1284, %v1283
  %v1313 = vpack.c.b16 %v1286, %v1285
  %v1314 = vpack.c.b16 %v1288, %v1287
  %v1315 = vpack.c.b16 %v1290, %v1289
  %v1316 = vpack.c.b16 %v1292, %v1291
  %v1317 = vpack.c.b16 %v1294, %v1293
  %v1318 = vpack.c.b16 %v1296, %v1295
  %v1319 = vpack.c.b16 %v1298, %v1297
  %v1320 = vpack.c.b16 %v1300, %v1299
  %v1321 = vpack.c.b16 %v1302, %v1301
  %v1322 = vpack.c.b16 %v1304, %v1303
  %v1323 = vpack.c.b16 %v1306, %v1305
  %v1324 = vpack.c.b16 %v1308, %v1307
  %v1326 = vshrl.u32 %v1309, 16
  %v1328 = vshll.u32 %v1309, 16
  %v1330 = vrot.slane %v1328, 1
  %v1331 = vor.u32 %v1326, %v1330
  %v1333 = vshrl.u32 %v1310, 16
  %v1335 = vshll.u32 %v1310, 16
  %v1337 = vrot.slane %v1335, 1
  %v1338 = vor.u32 %v1333, %v1337
  %v1340 = vshrl.u32 %v1311, 16
  %v1342 = vshll.u32 %v1311, 16
  %v1344 = vrot.slane %v1342, 1
  %v1345 = vor.u32 %v1340, %v1344
  %v1347 = vshrl.u32 %v1312, 16
  %v1349 = vshll.u32 %v1312, 16
  %v1351 = vrot.slane %v1349, 1
  %v1352 = vor.u32 %v1347, %v1351
  %v1354 = vshrl.u32 %v1313, 16
  %v1356 = vshll.u32 %v1313, 16
  %v1358 = vrot.slane %v1356, 1
  %v1359 = vor.u32 %v1354, %v1358
  %v1361 = vshrl.u32 %v1314, 16
  %v1363 = vshll.u32 %v1314, 16
  %v1365 = vrot.slane %v1363, 1
  %v1366 = vor.u32 %v1361, %v1365
  %v1368 = vshrl.u32 %v1315, 16
  %v1370 = vshll.u32 %v1315, 16
  %v1372 = vrot.slane %v1370, 1
  %v1373 = vor.u32 %v1368, %v1372
  %v1375 = vshrl.u32 %v1316, 16
  %v1377 = vshll.u32 %v1316, 16
  %v1379 = vrot.slane %v1377, 1
  %v1380 = vor.u32 %v1375, %v1379
  %v1382 = vshrl.u32 %v1317, 16
  %v1384 = vshll.u32 %v1317, 16
  %v1386 = vrot.slane %v1384, 1
  %v1387 = vor.u32 %v1382, %v1386
  %v1389 = vshrl.u32 %v1318, 16
  %v1391 = vshll.u32 %v1318, 16
  %v1393 = vrot.slane %v1391, 1
  %v1394 = vor.u32 %v1389, %v1393
  %v1396 = vshrl.u32 %v1319, 16
  %v1398 = vshll.u32 %v1319, 16
  %v1400 = vrot.slane %v1398, 1
  %v1401 = vor.u32 %v1396, %v1400
  %v1403 = vshrl.u32 %v1320, 16
  %v1405 = vshll.u32 %v1320, 16
  %v1407 = vrot.slane %v1405, 1
  %v1408 = vor.u32 %v1403, %v1407
  %v1410 = vshrl.u32 %v1321, 16
  %v1412 = vshll.u32 %v1321, 16
  %v1414 = vrot.slane %v1412, 1
  %v1415 = vor.u32 %v1410, %v1414
  %v1417 = vshrl.u32 %v1322, 16
  %v1419 = vshll.u32 %v1322, 16
  %v1421 = vrot.slane %v1419, 1
  %v1422 = vor.u32 %v1417, %v1421
  %v1424 = vshrl.u32 %v1323, 16
  %v1426 = vshll.u32 %v1323, 16
  %v1428 = vrot.slane %v1426, 1
  %v1429 = vor.u32 %v1424, %v1428
  %v1431 = vshrl.u32 %v1324, 16
  %v1433 = vshll.u32 %v1324, 16
  %v1435 = vrot.slane %v1433, 1
  %v1436 = vor.u32 %v1431, %v1435
  %1437 = vrot.lane.b32.xlu0 %v1331, 8
  %v1438 = vpop.permute.xlu0 %1437
  %1439 = vrot.lane.b32.xlu0 %v1338, 8
  %v1440 = vpop.permute.xlu0 %1439
  %1441 = vrot.lane.b32.xlu0 %v1345, 8
  %v1442 = vpop.permute.xlu0 %1441
  %1443 = vrot.lane.b32.xlu0 %v1352, 8
  %v1444 = vpop.permute.xlu0 %1443
  %1445 = vrot.lane.b32.xlu0 %v1359, 8
  %v1446 = vpop.permute.xlu0 %1445
  %1447 = vrot.lane.b32.xlu0 %v1366, 8
  %v1448 = vpop.permute.xlu0 %1447
  %1449 = vrot.lane.b32.xlu0 %v1373, 8
  %v1450 = vpop.permute.xlu0 %1449
  %1451 = vrot.lane.b32.xlu0 %v1380, 8
  %v1452 = vpop.permute.xlu0 %1451
  %1453 = vrot.lane.b32.xlu0 %v1387, 8
  %v1454 = vpop.permute.xlu0 %1453
  %1455 = vrot.lane.b32.xlu0 %v1394, 8
  %v1456 = vpop.permute.xlu0 %1455
  %1457 = vrot.lane.b32.xlu0 %v1401, 8
  %v1458 = vpop.permute.xlu0 %1457
  %1459 = vrot.lane.b32.xlu0 %v1408, 8
  %v1460 = vpop.permute.xlu0 %1459
  %1461 = vrot.lane.b32.xlu0 %v1415, 8
  %v1462 = vpop.permute.xlu0 %1461
  %1463 = vrot.lane.b32.xlu0 %v1422, 8
  %v1464 = vpop.permute.xlu0 %1463
  %1465 = vrot.lane.b32.xlu0 %v1429, 8
  %v1466 = vpop.permute.xlu0 %1465
  %1467 = vrot.lane.b32.xlu0 %v1436, 8
  %v1468 = vpop.permute.xlu0 %1467
  %v1485 = vunpack.c.l.b16 %v1213
  %v1486 = vunpack.c.l.b16 %v1214
  %v1487 = vunpack.c.l.b16 %v1215
  %v1488 = vunpack.c.l.b16 %v1216
  %v1489 = vunpack.c.l.b16 %v1217
  %v1490 = vunpack.c.l.b16 %v1218
  %v1491 = vunpack.c.l.b16 %v1219
  %v1492 = vunpack.c.l.b16 %v1220
  %v1493 = vunpack.c.l.b16 %v1221
  %v1494 = vunpack.c.l.b16 %v1222
  %v1495 = vunpack.c.l.b16 %v1223
  %v1496 = vunpack.c.l.b16 %v1224
  %v1497 = vunpack.c.l.b16 %v1225
  %v1498 = vunpack.c.l.b16 %v1226
  %v1499 = vunpack.c.l.b16 %v1227
  %v1500 = vunpack.c.l.b16 %v1228
  %v1501 = vpack.c.b16 %v1485, %v1485
  %v1502 = vpack.c.b16 %v1486, %v1486
  %v1503 = vpack.c.b16 %v1487, %v1487
  %v1504 = vpack.c.b16 %v1488, %v1488
  %v1505 = vpack.c.b16 %v1489, %v1489
  %v1506 = vpack.c.b16 %v1490, %v1490
  %v1507 = vpack.c.b16 %v1491, %v1491
  %v1508 = vpack.c.b16 %v1492, %v1492
  %v1509 = vpack.c.b16 %v1493, %v1493
  %v1510 = vpack.c.b16 %v1494, %v1494
  %v1511 = vpack.c.b16 %v1495, %v1495
  %v1512 = vpack.c.b16 %v1496, %v1496
  %v1513 = vpack.c.b16 %v1497, %v1497
  %v1514 = vpack.c.b16 %v1498, %v1498
  %v1515 = vpack.c.b16 %v1499, %v1499
  %v1516 = vpack.c.b16 %v1500, %v1500
  %1517 = vrot.lane.b32.xlu0 %v1501, 16
  %v1518 = vpop.permute.xlu0 %1517
  %1519 = vrot.lane.b32.xlu0 %v1502, 16
  %v1520 = vpop.permute.xlu0 %1519
  %1521 = vrot.lane.b32.xlu0 %v1503, 16
  %v1522 = vpop.permute.xlu0 %1521
  %1523 = vrot.lane.b32.xlu0 %v1504, 16
  %v1524 = vpop.permute.xlu0 %1523
  %1525 = vrot.lane.b32.xlu0 %v1505, 16
  %v1526 = vpop.permute.xlu0 %1525
  %1527 = vrot.lane.b32.xlu0 %v1506, 16
  %v1528 = vpop.permute.xlu0 %1527
  %1529 = vrot.lane.b32.xlu0 %v1507, 16
  %v1530 = vpop.permute.xlu0 %1529
  %1531 = vrot.lane.b32.xlu0 %v1508, 16
  %v1532 = vpop.permute.xlu0 %1531
  %1533 = vrot.lane.b32.xlu0 %v1509, 16
  %v1534 = vpop.permute.xlu0 %1533
  %1535 = vrot.lane.b32.xlu0 %v1510, 16
  %v1536 = vpop.permute.xlu0 %1535
  %1537 = vrot.lane.b32.xlu0 %v1511, 16
  %v1538 = vpop.permute.xlu0 %1537
  %1539 = vrot.lane.b32.xlu0 %v1512, 16
  %v1540 = vpop.permute.xlu0 %1539
  %1541 = vrot.lane.b32.xlu0 %v1513, 16
  %v1542 = vpop.permute.xlu0 %1541
  %1543 = vrot.lane.b32.xlu0 %v1514, 16
  %v1544 = vpop.permute.xlu0 %1543
  %1545 = vrot.lane.b32.xlu0 %v1515, 16
  %v1546 = vpop.permute.xlu0 %1545
  %1547 = vrot.lane.b32.xlu0 %v1516, 16
  %v1548 = vpop.permute.xlu0 %1547
  %v1565 = vunpack.c.l.b16 %v1229
  %v1566 = vunpack.c.l.b16 %v1230
  %v1567 = vunpack.c.l.b16 %v1231
  %v1568 = vunpack.c.l.b16 %v1232
  %v1569 = vunpack.c.l.b16 %v1233
  %v1570 = vunpack.c.l.b16 %v1234
  %v1571 = vunpack.c.l.b16 %v1235
  %v1572 = vunpack.c.l.b16 %v1236
  %v1573 = vunpack.c.l.b16 %v1237
  %v1574 = vunpack.c.l.b16 %v1238
  %v1575 = vunpack.c.l.b16 %v1239
  %v1576 = vunpack.c.l.b16 %v1240
  %v1577 = vunpack.c.l.b16 %v1241
  %v1578 = vunpack.c.l.b16 %v1242
  %v1579 = vunpack.c.l.b16 %v1243
  %v1580 = vunpack.c.l.b16 %v1244
  %v1581 = vpack.c.b16 %v1565, %v1485
  %v1582 = vpack.c.b16 %v1566, %v1486
  %v1583 = vpack.c.b16 %v1567, %v1487
  %v1584 = vpack.c.b16 %v1568, %v1488
  %v1585 = vpack.c.b16 %v1569, %v1489
  %v1586 = vpack.c.b16 %v1570, %v1490
  %v1587 = vpack.c.b16 %v1571, %v1491
  %v1588 = vpack.c.b16 %v1572, %v1492
  %v1589 = vpack.c.b16 %v1573, %v1493
  %v1590 = vpack.c.b16 %v1574, %v1494
  %v1591 = vpack.c.b16 %v1575, %v1495
  %v1592 = vpack.c.b16 %v1576, %v1496
  %v1593 = vpack.c.b16 %v1577, %v1497
  %v1594 = vpack.c.b16 %v1578, %v1498
  %v1595 = vpack.c.b16 %v1579, %v1499
  %v1596 = vpack.c.b16 %v1580, %v1500
  %v1598 = vshrl.u32 %v1581, 16
  %v1600 = vshll.u32 %v1581, 16
  %v1602 = vrot.slane %v1600, 1
  %v1603 = vor.u32 %v1598, %v1602
  %v1605 = vshrl.u32 %v1582, 16
  %v1607 = vshll.u32 %v1582, 16
  %v1609 = vrot.slane %v1607, 1
  %v1610 = vor.u32 %v1605, %v1609
  %v1612 = vshrl.u32 %v1583, 16
  %v1614 = vshll.u32 %v1583, 16
  %v1616 = vrot.slane %v1614, 1
  %v1617 = vor.u32 %v1612, %v1616
  %v1619 = vshrl.u32 %v1584, 16
  %v1621 = vshll.u32 %v1584, 16
  %v1623 = vrot.slane %v1621, 1
  %v1624 = vor.u32 %v1619, %v1623
  %v1626 = vshrl.u32 %v1585, 16
  %v1628 = vshll.u32 %v1585, 16
  %v1630 = vrot.slane %v1628, 1
  %v1631 = vor.u32 %v1626, %v1630
  %v1633 = vshrl.u32 %v1586, 16
  %v1635 = vshll.u32 %v1586, 16
  %v1637 = vrot.slane %v1635, 1
  %v1638 = vor.u32 %v1633, %v1637
  %v1640 = vshrl.u32 %v1587, 16
  %v1642 = vshll.u32 %v1587, 16
  %v1644 = vrot.slane %v1642, 1
  %v1645 = vor.u32 %v1640, %v1644
  %v1647 = vshrl.u32 %v1588, 16
  %v1649 = vshll.u32 %v1588, 16
  %v1651 = vrot.slane %v1649, 1
  %v1652 = vor.u32 %v1647, %v1651
  %v1654 = vshrl.u32 %v1589, 16
  %v1656 = vshll.u32 %v1589, 16
  %v1658 = vrot.slane %v1656, 1
  %v1659 = vor.u32 %v1654, %v1658
  %v1661 = vshrl.u32 %v1590, 16
  %v1663 = vshll.u32 %v1590, 16
  %v1665 = vrot.slane %v1663, 1
  %v1666 = vor.u32 %v1661, %v1665
  %v1668 = vshrl.u32 %v1591, 16
  %v1670 = vshll.u32 %v1591, 16
  %v1672 = vrot.slane %v1670, 1
  %v1673 = vor.u32 %v1668, %v1672
  %v1675 = vshrl.u32 %v1592, 16
  %v1677 = vshll.u32 %v1592, 16
  %v1679 = vrot.slane %v1677, 1
  %v1680 = vor.u32 %v1675, %v1679
  %v1682 = vshrl.u32 %v1593, 16
  %v1684 = vshll.u32 %v1593, 16
  %v1686 = vrot.slane %v1684, 1
  %v1687 = vor.u32 %v1682, %v1686
  %v1689 = vshrl.u32 %v1594, 16
  %v1691 = vshll.u32 %v1594, 16
  %v1693 = vrot.slane %v1691, 1
  %v1694 = vor.u32 %v1689, %v1693
  %v1696 = vshrl.u32 %v1595, 16
  %v1698 = vshll.u32 %v1595, 16
  %v1700 = vrot.slane %v1698, 1
  %v1701 = vor.u32 %v1696, %v1700
  %v1703 = vshrl.u32 %v1596, 16
  %v1705 = vshll.u32 %v1596, 16
  %v1707 = vrot.slane %v1705, 1
  %v1708 = vor.u32 %v1703, %v1707
  %1709 = vrot.lane.b32.xlu0 %v1603, 24
  %v1710 = vpop.permute.xlu0 %1709
  %1711 = vrot.lane.b32.xlu0 %v1610, 24
  %v1712 = vpop.permute.xlu0 %1711
  %1713 = vrot.lane.b32.xlu0 %v1617, 24
  %v1714 = vpop.permute.xlu0 %1713
  %1715 = vrot.lane.b32.xlu0 %v1624, 24
  %v1716 = vpop.permute.xlu0 %1715
  %1717 = vrot.lane.b32.xlu0 %v1631, 24
  %v1718 = vpop.permute.xlu0 %1717
  %1719 = vrot.lane.b32.xlu0 %v1638, 24
  %v1720 = vpop.permute.xlu0 %1719
  %1721 = vrot.lane.b32.xlu0 %v1645, 24
  %v1722 = vpop.permute.xlu0 %1721
  %1723 = vrot.lane.b32.xlu0 %v1652, 24
  %v1724 = vpop.permute.xlu0 %1723
  %1725 = vrot.lane.b32.xlu0 %v1659, 24
  %v1726 = vpop.permute.xlu0 %1725
  %1727 = vrot.lane.b32.xlu0 %v1666, 24
  %v1728 = vpop.permute.xlu0 %1727
  %1729 = vrot.lane.b32.xlu0 %v1673, 24
  %v1730 = vpop.permute.xlu0 %1729
  %1731 = vrot.lane.b32.xlu0 %v1680, 24
  %v1732 = vpop.permute.xlu0 %1731
  %1733 = vrot.lane.b32.xlu0 %v1687, 24
  %v1734 = vpop.permute.xlu0 %1733
  %1735 = vrot.lane.b32.xlu0 %v1694, 24
  %v1736 = vpop.permute.xlu0 %1735
  %1737 = vrot.lane.b32.xlu0 %v1701, 24
  %v1738 = vpop.permute.xlu0 %1737
  %1739 = vrot.lane.b32.xlu0 %v1708, 24
  %v1740 = vpop.permute.xlu0 %1739
  %vm1741 = vcmask 64512
  %v1744 = vsel %vm1741, %v1181, %v1438
  %v1747 = vsel %vm1741, %v1182, %v1440
  %v1750 = vsel %vm1741, %v1183, %v1442
  %v1753 = vsel %vm1741, %v1184, %v1444
  %v1756 = vsel %vm1741, %v1185, %v1446
  %v1759 = vsel %vm1741, %v1186, %v1448
  %v1762 = vsel %vm1741, %v1187, %v1450
  %v1765 = vsel %vm1741, %v1188, %v1452
  %v1768 = vsel %vm1741, %v1189, %v1454
  %v1771 = vsel %vm1741, %v1190, %v1456
  %v1774 = vsel %vm1741, %v1191, %v1458
  %v1777 = vsel %vm1741, %v1192, %v1460
  %v1780 = vsel %vm1741, %v1193, %v1462
  %v1783 = vsel %vm1741, %v1194, %v1464
  %v1786 = vsel %vm1741, %v1195, %v1466
  %v1789 = vsel %vm1741, %v1196, %v1468
  %v1791 = vsel %vm453, %v1744, %v1518
  %v1793 = vsel %vm453, %v1747, %v1520
  %v1795 = vsel %vm453, %v1750, %v1522
  %v1797 = vsel %vm453, %v1753, %v1524
  %v1799 = vsel %vm453, %v1756, %v1526
  %v1801 = vsel %vm453, %v1759, %v1528
  %v1803 = vsel %vm453, %v1762, %v1530
  %v1805 = vsel %vm453, %v1765, %v1532
  %v1807 = vsel %vm453, %v1768, %v1534
  %v1809 = vsel %vm453, %v1771, %v1536
  %v1811 = vsel %vm453, %v1774, %v1538
  %v1813 = vsel %vm453, %v1777, %v1540
  %v1815 = vsel %vm453, %v1780, %v1542
  %v1817 = vsel %vm453, %v1783, %v1544
  %v1819 = vsel %vm453, %v1786, %v1546
  %v1821 = vsel %vm453, %v1789, %v1548
  %vm1822 = vcmask 195584
  %v1824 = vsel %vm1822, %v1791, %v1710
  %v1826 = vsel %vm1822, %v1793, %v1712
  %v1828 = vsel %vm1822, %v1795, %v1714
  %v1830 = vsel %vm1822, %v1797, %v1716
  %v1832 = vsel %vm1822, %v1799, %v1718
  %v1834 = vsel %vm1822, %v1801, %v1720
  %v1836 = vsel %vm1822, %v1803, %v1722
  %v1838 = vsel %vm1822, %v1805, %v1724
  %v1840 = vsel %vm1822, %v1807, %v1726
  %v1842 = vsel %vm1822, %v1809, %v1728
  %v1844 = vsel %vm1822, %v1811, %v1730
  %v1846 = vsel %vm1822, %v1813, %v1732
  %v1848 = vsel %vm1822, %v1815, %v1734
  %v1850 = vsel %vm1822, %v1817, %v1736
  %v1852 = vsel %vm1822, %v1819, %v1738
  %v1854 = vsel %vm1822, %v1821, %v1740
  %v1855 = vld [vmem:[%s2] sm:$0xf]
  %v1856 = vld [vmem:[%s2 + $0x4] sm:$0xf]
  %v1857 = vld [vmem:[%s2 + $0x8] sm:$0xf]
  %v1858 = vld [vmem:[%s2 + $0xc] sm:$0xf]
  %v1875 = vunpack.c.l.b16 %v1824
  %v1876 = vunpack.c.l.b16 %v1826
  %v1877 = vunpack.c.l.b16 %v1828
  %v1878 = vunpack.c.l.b16 %v1830
  %v1879 = vunpack.c.l.b16 %v1832
  %v1880 = vunpack.c.l.b16 %v1834
  %v1881 = vunpack.c.l.b16 %v1836
  %v1882 = vunpack.c.l.b16 %v1838
  %v1883 = vunpack.c.l.b16 %v1840
  %v1884 = vunpack.c.l.b16 %v1842
  %v1885 = vunpack.c.l.b16 %v1844
  %v1886 = vunpack.c.l.b16 %v1846
  %v1887 = vunpack.c.l.b16 %v1848
  %v1888 = vunpack.c.l.b16 %v1850
  %v1889 = vunpack.c.l.b16 %v1852
  %v1890 = vunpack.c.l.b16 %v1854
  %v1891 = vpack.c.b16 %v1876, %v1875
  %v1892 = vpack.c.b16 %v1878, %v1877
  %v1893 = vpack.c.b16 %v1880, %v1879
  %v1894 = vpack.c.b16 %v1882, %v1881
  %v1895 = vpack.c.b16 %v1884, %v1883
  %v1896 = vpack.c.b16 %v1886, %v1885
  %v1897 = vpack.c.b16 %v1888, %v1887
  %v1898 = vpack.c.b16 %v1890, %v1889
  %v1903 = vunpack.c.l.b16 %v1855
  %v1904 = vunpack.c.l.b16 %v1856
  %v1905 = vunpack.c.l.b16 %v1857
  %v1906 = vunpack.c.l.b16 %v1858
  %v1907 = vpack.c.b16 %v1904, %v1903
  %v1908 = vpack.c.b16 %v1906, %v1905
  %v1912 = vsel %vm486, %v1891, 0
  %v1915 = vsel %vm486, %v1892, 0
  %v1918 = vsel %vm486, %v1893, 0
  %v1921 = vsel %vm486, %v1894, 0
  %v1924 = vsel %vm486, %v1895, 0
  %v1927 = vsel %vm486, %v1896, 0
  %v1930 = vsel %vm486, %v1897, 0
  %v1933 = vsel %vm486, %v1898, 0
  %1935 = vmatprep.subr.bf16.mxu0 0
  %1936 = vmatpush1.bf16.msra.mxu0 %v1907
  %1937 = vmatprep.subr.bf16.mxu0 0
  %1938 = vmatpush1.bf16.msra.mxu0 %v1908
  %1939 = vmatprep.subr.bf16.mxu0 0
  %1940 = vmatpush1.bf16.msra.mxu0 0
  %1941 = vmatprep.subr.bf16.mxu0 0
  %1942 = vmatpush1.bf16.msra.mxu0 0
  %1943 = vmatprep.subr.bf16.mxu0 0
  %1944 = vmatpush1.bf16.msra.mxu0 0
  %1945 = vmatprep.subr.bf16.mxu0 0
  %1946 = vmatpush1.bf16.msra.mxu0 0
  %1947 = vmatprep.subr.bf16.mxu0 0
  %1948 = vmatpush1.bf16.msra.mxu0 0
  %1949 = vmatprep.subr.bf16.mxu0 0
  %1950 = vmatpush1.bf16.msra.mxu0 0
  %1951 = vmatprep.subr.bf16.mxu0 0
  %1952 = vmatpush1.bf16.msra.mxu0 0
  %1953 = vmatprep.subr.bf16.mxu0 0
  %1954 = vmatpush1.bf16.msra.mxu0 0
  %1955 = vmatprep.subr.bf16.mxu0 0
  %1956 = vmatpush1.bf16.msra.mxu0 0
  %1957 = vmatprep.subr.bf16.mxu0 0
  %1958 = vmatpush1.bf16.msra.mxu0 0
  %1959 = vmatprep.subr.bf16.mxu0 0
  %1960 = vmatpush1.bf16.msra.mxu0 0
  %1961 = vmatprep.subr.bf16.mxu0 0
  %1962 = vmatpush1.bf16.msra.mxu0 0
  %1963 = vmatprep.subr.bf16.mxu0 0
  %1964 = vmatpush1.bf16.msra.mxu0 0
  %1965 = vmatprep.subr.bf16.mxu0 0
  %1966 = vmatpush1.bf16.msra.mxu0 0
  %1967 = vmatprep.mubr.bf16.mxu0 0
  %1968 = vmatmul.mubr.bf16.gmra.mrb[0].mxu0 %v1912
  %v1969 = vpop.f32.mrb[0].mxu0
  %v1970 = vadd.f32 0.0, %v1969
  %v1971 = vpop.f32.mrb[0].mxu0
  %v1972 = vpop.f32.mrb[0].mxu0
  %v1973 = vadd.f32 0.0, %v1972
  %v1974 = vpop.f32.mrb[0].mxu0
  %1975 = vmatprep.mubr.bf16.mxu0 0
  %1976 = vmatmul.mubr.bf16.gmra.mrb[0].mxu0 %v1915
  %v1977 = vpop.f32.mrb[0].mxu0
  %v1978 = vadd.f32 0.0, %v1977
  %v1979 = vpop.f32.mrb[0].mxu0
  %v1980 = vpop.f32.mrb[0].mxu0
  %v1981 = vadd.f32 0.0, %v1980
  %v1982 = vpop.f32.mrb[0].mxu0
  %1983 = vmatprep.mubr.bf16.mxu0 0
  %1984 = vmatmul.mubr.bf16.gmra.mrb[0].mxu0 %v1918
  %v1985 = vpop.f32.mrb[0].mxu0
  %v1986 = vadd.f32 0.0, %v1985
  %v1987 = vpop.f32.mrb[0].mxu0
  %v1988 = vpop.f32.mrb[0].mxu0
  %v1989 = vadd.f32 0.0, %v1988
  %v1990 = vpop.f32.mrb[0].mxu0
  %1991 = vmatprep.mubr.bf16.mxu0 0
  %1992 = vmatmul.mubr.bf16.gmra.mrb[0].mxu0 %v1921
  %v1993 = vpop.f32.mrb[0].mxu0
  %v1994 = vadd.f32 0.0, %v1993
  %v1995 = vpop.f32.mrb[0].mxu0
  %v1996 = vpop.f32.mrb[0].mxu0
  %v1997 = vadd.f32 0.0, %v1996
  %v1998 = vpop.f32.mrb[0].mxu0
  %1999 = vmatprep.mubr.bf16.mxu0 0
  %2000 = vmatmul.mubr.bf16.gmra.mrb[0].mxu0 %v1924
  %v2001 = vpop.f32.mrb[0].mxu0
  %v2002 = vadd.f32 0.0, %v2001
  %v2003 = vpop.f32.mrb[0].mxu0
  %v2004 = vpop.f32.mrb[0].mxu0
  %v2005 = vadd.f32 0.0, %v2004
  %v2006 = vpop.f32.mrb[0].mxu0
  %2007 = vmatprep.mubr.bf16.mxu0 0
  %2008 = vmatmul.mubr.bf16.gmra.mrb[0].mxu0 %v1927
  %v2009 = vpop.f32.mrb[0].mxu0
  %v2010 = vadd.f32 0.0, %v2009
  %v2011 = vpop.f32.mrb[0].mxu0
  %v2012 = vpop.f32.mrb[0].mxu0
  %v2013 = vadd.f32 0.0, %v2012
  %v2014 = vpop.f32.mrb[0].mxu0
  %2015 = vmatprep.mubr.bf16.mxu0 0
  %2016 = vmatmul.mubr.bf16.gmra.mrb[0].mxu0 %v1930
  %v2017 = vpop.f32.mrb[0].mxu0
  %v2018 = vadd.f32 0.0, %v2017
  %v2019 = vpop.f32.mrb[0].mxu0
  %v2020 = vpop.f32.mrb[0].mxu0
  %v2021 = vadd.f32 0.0, %v2020
  %v2022 = vpop.f32.mrb[0].mxu0
  %2023 = vmatprep.mubr.bf16.mxu0 0
  %2024 = vmatmul.mubr.bf16.gmra.mrb[0].mxu0 %v1933
  %v2025 = vpop.f32.mrb[0].mxu0
  %v2026 = vadd.f32 0.0, %v2025
  %v2027 = vpop.f32.mrb[0].mxu0
  %v2028 = vpop.f32.mrb[0].mxu0
  %v2029 = vadd.f32 0.0, %v2028
  %v2030 = vpop.f32.mrb[0].mxu0
  %2031 = vdwg.mxu0
  %v2032 = vld [vmem:[#allocation2] sm:$0xe]
  %v2033 = vld [vmem:[#allocation2 + $0x8] sm:$0xe]
  %v2034 = vld [vmem:[#allocation2 + $0x10] sm:$0xe]
  %v2035 = vld [vmem:[#allocation2 + $0x18] sm:$0xe]
  %v2036 = vld [vmem:[#allocation2 + $0x20] sm:$0xe]
  %v2037 = vld [vmem:[#allocation2 + $0x28] sm:$0xe]
  %v2038 = vld [vmem:[#allocation2 + $0x30] sm:$0xe]
  %v2039 = vld [vmem:[#allocation2 + $0x38] sm:$0xe]
  %v2040 = vld [vmem:[#allocation2 + $0x50] sm:$0xe]
  %v2041 = vld [vmem:[#allocation2 + $0x58] sm:$0xe]
  %v2042 = vld [vmem:[#allocation2 + $0x60] sm:$0xe]
  %v2043 = vld [vmem:[#allocation2 + $0x68] sm:$0xe]
  %v2044 = vld [vmem:[#allocation2 + $0x70] sm:$0xe]
  %v2045 = vld [vmem:[#allocation2 + $0x78] sm:$0xe]
  %v2046 = vld [vmem:[#allocation2 + $0x80] sm:$0xe]
  %v2047 = vld [vmem:[#allocation2 + $0x88] sm:$0xe]
  %v2048 = vld [vmem:[%s773] sm:$0xe]
  %v2049 = vld [vmem:[%s773 + $0x8] sm:$0xe]
  %v2050 = vld [vmem:[%s773 + $0x10] sm:$0xe]
  %v2051 = vld [vmem:[%s773 + $0x18] sm:$0xe]
  %v2052 = vld [vmem:[%s773 + $0x20] sm:$0xe]
  %v2053 = vld [vmem:[%s773 + $0x28] sm:$0xe]
  %v2054 = vld [vmem:[%s773 + $0x30] sm:$0xe]
  %v2055 = vld [vmem:[%s773 + $0x38] sm:$0xe]
  %v2056 = vld [vmem:[%s773 + $0x50] sm:$0xe]
  %v2057 = vld [vmem:[%s773 + $0x58] sm:$0xe]
  %v2058 = vld [vmem:[%s773 + $0x60] sm:$0xe]
  %v2059 = vld [vmem:[%s773 + $0x68] sm:$0xe]
  %v2060 = vld [vmem:[%s773 + $0x70] sm:$0xe]
  %v2061 = vld [vmem:[%s773 + $0x78] sm:$0xe]
  %v2062 = vld [vmem:[%s773 + $0x80] sm:$0xe]
  %v2063 = vld [vmem:[%s773 + $0x88] sm:$0xe]
  %v2080 = vunpack.c.l.b16 %v2032
  %v2081 = vunpack.c.l.b16 %v2033
  %v2082 = vunpack.c.l.b16 %v2034
  %v2083 = vunpack.c.l.b16 %v2035
  %v2084 = vunpack.c.l.b16 %v2036
  %v2085 = vunpack.c.l.b16 %v2037
  %v2086 = vunpack.c.l.b16 %v2038
  %v2087 = vunpack.c.l.b16 %v2039
  %v2088 = vunpack.c.l.b16 %v2040
  %v2089 = vunpack.c.l.b16 %v2041
  %v2090 = vunpack.c.l.b16 %v2042
  %v2091 = vunpack.c.l.b16 %v2043
  %v2092 = vunpack.c.l.b16 %v2044
  %v2093 = vunpack.c.l.b16 %v2045
  %v2094 = vunpack.c.l.b16 %v2046
  %v2095 = vunpack.c.l.b16 %v2047
  %v2096 = vpack.c.b16 %v1278, %v2080
  %v2097 = vpack.c.b16 %v1280, %v2081
  %v2098 = vpack.c.b16 %v1282, %v2082
  %v2099 = vpack.c.b16 %v1284, %v2083
  %v2100 = vpack.c.b16 %v1286, %v2084
  %v2101 = vpack.c.b16 %v1288, %v2085
  %v2102 = vpack.c.b16 %v1290, %v2086
  %v2103 = vpack.c.b16 %v1292, %v2087
  %v2104 = vpack.c.b16 %v1294, %v2088
  %v2105 = vpack.c.b16 %v1296, %v2089
  %v2106 = vpack.c.b16 %v1298, %v2090
  %v2107 = vpack.c.b16 %v1300, %v2091
  %v2108 = vpack.c.b16 %v1302, %v2092
  %v2109 = vpack.c.b16 %v1304, %v2093
  %v2110 = vpack.c.b16 %v1306, %v2094
  %v2111 = vpack.c.b16 %v1308, %v2095
  %v2113 = vshrl.u32 %v2096, 16
  %v2115 = vshll.u32 %v2096, 16
  %v2117 = vrot.slane %v2115, 1
  %v2118 = vor.u32 %v2113, %v2117
  %v2120 = vshrl.u32 %v2097, 16
  %v2122 = vshll.u32 %v2097, 16
  %v2124 = vrot.slane %v2122, 1
  %v2125 = vor.u32 %v2120, %v2124
  %v2127 = vshrl.u32 %v2098, 16
  %v2129 = vshll.u32 %v2098, 16
  %v2131 = vrot.slane %v2129, 1
  %v2132 = vor.u32 %v2127, %v2131
  %v2134 = vshrl.u32 %v2099, 16
  %v2136 = vshll.u32 %v2099, 16
  %v2138 = vrot.slane %v2136, 1
  %v2139 = vor.u32 %v2134, %v2138
  %v2141 = vshrl.u32 %v2100, 16
  %v2143 = vshll.u32 %v2100, 16
  %v2145 = vrot.slane %v2143, 1
  %v2146 = vor.u32 %v2141, %v2145
  %v2148 = vshrl.u32 %v2101, 16
  %v2150 = vshll.u32 %v2101, 16
  %v2152 = vrot.slane %v2150, 1
  %v2153 = vor.u32 %v2148, %v2152
  %v2155 = vshrl.u32 %v2102, 16
  %v2157 = vshll.u32 %v2102, 16
  %v2159 = vrot.slane %v2157, 1
  %v2160 = vor.u32 %v2155, %v2159
  %v2162 = vshrl.u32 %v2103, 16
  %v2164 = vshll.u32 %v2103, 16
  %v2166 = vrot.slane %v2164, 1
  %v2167 = vor.u32 %v2162, %v2166
  %v2169 = vshrl.u32 %v2104, 16
  %v2171 = vshll.u32 %v2104, 16
  %v2173 = vrot.slane %v2171, 1
  %v2174 = vor.u32 %v2169, %v2173
  %v2176 = vshrl.u32 %v2105, 16
  %v2178 = vshll.u32 %v2105, 16
  %v2180 = vrot.slane %v2178, 1
  %v2181 = vor.u32 %v2176, %v2180
  %v2183 = vshrl.u32 %v2106, 16
  %v2185 = vshll.u32 %v2106, 16
  %v2187 = vrot.slane %v2185, 1
  %v2188 = vor.u32 %v2183, %v2187
  %v2190 = vshrl.u32 %v2107, 16
  %v2192 = vshll.u32 %v2107, 16
  %v2194 = vrot.slane %v2192, 1
  %v2195 = vor.u32 %v2190, %v2194
  %v2197 = vshrl.u32 %v2108, 16
  %v2199 = vshll.u32 %v2108, 16
  %v2201 = vrot.slane %v2199, 1
  %v2202 = vor.u32 %v2197, %v2201
  %v2204 = vshrl.u32 %v2109, 16
  %v2206 = vshll.u32 %v2109, 16
  %v2208 = vrot.slane %v2206, 1
  %v2209 = vor.u32 %v2204, %v2208
  %v2211 = vshrl.u32 %v2110, 16
  %v2213 = vshll.u32 %v2110, 16
  %v2215 = vrot.slane %v2213, 1
  %v2216 = vor.u32 %v2211, %v2215
  %v2218 = vshrl.u32 %v2111, 16
  %v2220 = vshll.u32 %v2111, 16
  %v2222 = vrot.slane %v2220, 1
  %v2223 = vor.u32 %v2218, %v2222
  %2224 = vrot.lane.b32.xlu0 %v2118, 8
  %v2225 = vpop.permute.xlu0 %2224
  %2226 = vrot.lane.b32.xlu0 %v2125, 8
  %v2227 = vpop.permute.xlu0 %2226
  %2228 = vrot.lane.b32.xlu0 %v2132, 8
  %v2229 = vpop.permute.xlu0 %2228
  %2230 = vrot.lane.b32.xlu0 %v2139, 8
  %v2231 = vpop.permute.xlu0 %2230
  %2232 = vrot.lane.b32.xlu0 %v2146, 8
  %v2233 = vpop.permute.xlu0 %2232
  %2234 = vrot.lane.b32.xlu0 %v2153, 8
  %v2235 = vpop.permute.xlu0 %2234
  %2236 = vrot.lane.b32.xlu0 %v2160, 8
  %v2237 = vpop.permute.xlu0 %2236
  %2238 = vrot.lane.b32.xlu0 %v2167, 8
  %v2239 = vpop.permute.xlu0 %2238
  %2240 = vrot.lane.b32.xlu0 %v2174, 8
  %v2241 = vpop.permute.xlu0 %2240
  %2242 = vrot.lane.b32.xlu0 %v2181, 8
  %v2243 = vpop.permute.xlu0 %2242
  %2244 = vrot.lane.b32.xlu0 %v2188, 8
  %v2245 = vpop.permute.xlu0 %2244
  %2246 = vrot.lane.b32.xlu0 %v2195, 8
  %v2247 = vpop.permute.xlu0 %2246
  %2248 = vrot.lane.b32.xlu0 %v2202, 8
  %v2249 = vpop.permute.xlu0 %2248
  %2250 = vrot.lane.b32.xlu0 %v2209, 8
  %v2251 = vpop.permute.xlu0 %2250
  %2252 = vrot.lane.b32.xlu0 %v2216, 8
  %v2253 = vpop.permute.xlu0 %2252
  %2254 = vrot.lane.b32.xlu0 %v2223, 8
  %v2255 = vpop.permute.xlu0 %2254
  %2256 = vrot.lane.b32.xlu0 %v1581, 16
  %v2257 = vpop.permute.xlu0 %2256
  %2258 = vrot.lane.b32.xlu0 %v1582, 16
  %v2259 = vpop.permute.xlu0 %2258
  %2260 = vrot.lane.b32.xlu0 %v1583, 16
  %v2261 = vpop.permute.xlu0 %2260
  %2262 = vrot.lane.b32.xlu0 %v1584, 16
  %v2263 = vpop.permute.xlu0 %2262
  %2264 = vrot.lane.b32.xlu0 %v1585, 16
  %v2265 = vpop.permute.xlu0 %2264
  %2266 = vrot.lane.b32.xlu0 %v1586, 16
  %v2267 = vpop.permute.xlu0 %2266
  %2268 = vrot.lane.b32.xlu0 %v1587, 16
  %v2269 = vpop.permute.xlu0 %2268
  %2270 = vrot.lane.b32.xlu0 %v1588, 16
  %v2271 = vpop.permute.xlu0 %2270
  %2272 = vrot.lane.b32.xlu0 %v1589, 16
  %v2273 = vpop.permute.xlu0 %2272
  %2274 = vrot.lane.b32.xlu0 %v1590, 16
  %v2275 = vpop.permute.xlu0 %2274
  %2276 = vrot.lane.b32.xlu0 %v1591, 16
  %v2277 = vpop.permute.xlu0 %2276
  %2278 = vrot.lane.b32.xlu0 %v1592, 16
  %v2279 = vpop.permute.xlu0 %2278
  %2280 = vrot.lane.b32.xlu0 %v1593, 16
  %v2281 = vpop.permute.xlu0 %2280
  %2282 = vrot.lane.b32.xlu0 %v1594, 16
  %v2283 = vpop.permute.xlu0 %2282
  %2284 = vrot.lane.b32.xlu0 %v1595, 16
  %v2285 = vpop.permute.xlu0 %2284
  %2286 = vrot.lane.b32.xlu0 %v1596, 16
  %v2287 = vpop.permute.xlu0 %2286
  %v2304 = vunpack.c.l.b16 %v2048
  %v2305 = vunpack.c.l.b16 %v2049
  %v2306 = vunpack.c.l.b16 %v2050
  %v2307 = vunpack.c.l.b16 %v2051
  %v2308 = vunpack.c.l.b16 %v2052
  %v2309 = vunpack.c.l.b16 %v2053
  %v2310 = vunpack.c.l.b16 %v2054
  %v2311 = vunpack.c.l.b16 %v2055
  %v2312 = vunpack.c.l.b16 %v2056
  %v2313 = vunpack.c.l.b16 %v2057
  %v2314 = vunpack.c.l.b16 %v2058
  %v2315 = vunpack.c.l.b16 %v2059
  %v2316 = vunpack.c.l.b16 %v2060
  %v2317 = vunpack.c.l.b16 %v2061
  %v2318 = vunpack.c.l.b16 %v2062
  %v2319 = vunpack.c.l.b16 %v2063
  %v2320 = vpack.c.b16 %v1565, %v2304
  %v2321 = vpack.c.b16 %v1566, %v2305
  %v2322 = vpack.c.b16 %v1567, %v2306
  %v2323 = vpack.c.b16 %v1568, %v2307
  %v2324 = vpack.c.b16 %v1569, %v2308
  %v2325 = vpack.c.b16 %v1570, %v2309
  %v2326 = vpack.c.b16 %v1571, %v2310
  %v2327 = vpack.c.b16 %v1572, %v2311
  %v2328 = vpack.c.b16 %v1573, %v2312
  %v2329 = vpack.c.b16 %v1574, %v2313
  %v2330 = vpack.c.b16 %v1575, %v2314
  %v2331 = vpack.c.b16 %v1576, %v2315
  %v2332 = vpack.c.b16 %v1577, %v2316
  %v2333 = vpack.c.b16 %v1578, %v2317
  %v2334 = vpack.c.b16 %v1579, %v2318
  %v2335 = vpack.c.b16 %v1580, %v2319
  %v2337 = vshrl.u32 %v2320, 16
  %v2339 = vshll.u32 %v2320, 16
  %v2341 = vrot.slane %v2339, 1
  %v2342 = vor.u32 %v2337, %v2341
  %v2344 = vshrl.u32 %v2321, 16
  %v2346 = vshll.u32 %v2321, 16
  %v2348 = vrot.slane %v2346, 1
  %v2349 = vor.u32 %v2344, %v2348
  %v2351 = vshrl.u32 %v2322, 16
  %v2353 = vshll.u32 %v2322, 16
  %v2355 = vrot.slane %v2353, 1
  %v2356 = vor.u32 %v2351, %v2355
  %v2358 = vshrl.u32 %v2323, 16
  %v2360 = vshll.u32 %v2323, 16
  %v2362 = vrot.slane %v2360, 1
  %v2363 = vor.u32 %v2358, %v2362
  %v2365 = vshrl.u32 %v2324, 16
  %v2367 = vshll.u32 %v2324, 16
  %v2369 = vrot.slane %v2367, 1
  %v2370 = vor.u32 %v2365, %v2369
  %v2372 = vshrl.u32 %v2325, 16
  %v2374 = vshll.u32 %v2325, 16
  %v2376 = vrot.slane %v2374, 1
  %v2377 = vor.u32 %v2372, %v2376
  %v2379 = vshrl.u32 %v2326, 16
  %v2381 = vshll.u32 %v2326, 16
  %v2383 = vrot.slane %v2381, 1
  %v2384 = vor.u32 %v2379, %v2383
  %v2386 = vshrl.u32 %v2327, 16
  %v2388 = vshll.u32 %v2327, 16
  %v2390 = vrot.slane %v2388, 1
  %v2391 = vor.u32 %v2386, %v2390
  %v2393 = vshrl.u32 %v2328, 16
  %v2395 = vshll.u32 %v2328, 16
  %v2397 = vrot.slane %v2395, 1
  %v2398 = vor.u32 %v2393, %v2397
  %v2400 = vshrl.u32 %v2329, 16
  %v2402 = vshll.u32 %v2329, 16
  %v2404 = vrot.slane %v2402, 1
  %v2405 = vor.u32 %v2400, %v2404
  %v2407 = vshrl.u32 %v2330, 16
  %v2409 = vshll.u32 %v2330, 16
  %v2411 = vrot.slane %v2409, 1
  %v2412 = vor.u32 %v2407, %v2411
  %v2414 = vshrl.u32 %v2331, 16
  %v2416 = vshll.u32 %v2331, 16
  %v2418 = vrot.slane %v2416, 1
  %v2419 = vor.u32 %v2414, %v2418
  %v2421 = vshrl.u32 %v2332, 16
  %v2423 = vshll.u32 %v2332, 16
  %v2425 = vrot.slane %v2423, 1
  %v2426 = vor.u32 %v2421, %v2425
  %v2428 = vshrl.u32 %v2333, 16
  %v2430 = vshll.u32 %v2333, 16
  %v2432 = vrot.slane %v2430, 1
  %v2433 = vor.u32 %v2428, %v2432
  %v2435 = vshrl.u32 %v2334, 16
  %v2437 = vshll.u32 %v2334, 16
  %v2439 = vrot.slane %v2437, 1
  %v2440 = vor.u32 %v2435, %v2439
  %v2442 = vshrl.u32 %v2335, 16
  %v2444 = vshll.u32 %v2335, 16
  %v2446 = vrot.slane %v2444, 1
  %v2447 = vor.u32 %v2442, %v2446
  %2448 = vrot.lane.b32.xlu0 %v2342, 24
  %v2449 = vpop.permute.xlu0 %2448
  %2450 = vrot.lane.b32.xlu0 %v2349, 24
  %v2451 = vpop.permute.xlu0 %2450
  %2452 = vrot.lane.b32.xlu0 %v2356, 24
  %v2453 = vpop.permute.xlu0 %2452
  %2454 = vrot.lane.b32.xlu0 %v2363, 24
  %v2455 = vpop.permute.xlu0 %2454
  %2456 = vrot.lane.b32.xlu0 %v2370, 24
  %v2457 = vpop.permute.xlu0 %2456
  %2458 = vrot.lane.b32.xlu0 %v2377, 24
  %v2459 = vpop.permute.xlu0 %2458
  %2460 = vrot.lane.b32.xlu0 %v2384, 24
  %v2461 = vpop.permute.xlu0 %2460
  %2462 = vrot.lane.b32.xlu0 %v2391, 24
  %v2463 = vpop.permute.xlu0 %2462
  %2464 = vrot.lane.b32.xlu0 %v2398, 24
  %v2465 = vpop.permute.xlu0 %2464
  %2466 = vrot.lane.b32.xlu0 %v2405, 24
  %v2467 = vpop.permute.xlu0 %2466
  %2468 = vrot.lane.b32.xlu0 %v2412, 24
  %v2469 = vpop.permute.xlu0 %2468
  %2470 = vrot.lane.b32.xlu0 %v2419, 24
  %v2471 = vpop.permute.xlu0 %2470
  %2472 = vrot.lane.b32.xlu0 %v2426, 24
  %v2473 = vpop.permute.xlu0 %2472
  %2474 = vrot.lane.b32.xlu0 %v2433, 24
  %v2475 = vpop.permute.xlu0 %2474
  %2476 = vrot.lane.b32.xlu0 %v2440, 24
  %v2477 = vpop.permute.xlu0 %2476
  %2478 = vrot.lane.b32.xlu0 %v2447, 24
  %v2479 = vpop.permute.xlu0 %2478
  %v2481 = vsel %vm1741, %v1309, %v2225
  %v2483 = vsel %vm1741, %v1310, %v2227
  %v2485 = vsel %vm1741, %v1311, %v2229
  %v2487 = vsel %vm1741, %v1312, %v2231
  %v2489 = vsel %vm1741, %v1313, %v2233
  %v2491 = vsel %vm1741, %v1314, %v2235
  %v2493 = vsel %vm1741, %v1315, %v2237
  %v2495 = vsel %vm1741, %v1316, %v2239
  %v2497 = vsel %vm1741, %v1317, %v2241
  %v2499 = vsel %vm1741, %v1318, %v2243
  %v2501 = vsel %vm1741, %v1319, %v2245
  %v2503 = vsel %vm1741, %v1320, %v2247
  %v2505 = vsel %vm1741, %v1321, %v2249
  %v2507 = vsel %vm1741, %v1322, %v2251
  %v2509 = vsel %vm1741, %v1323, %v2253
  %v2511 = vsel %vm1741, %v1324, %v2255
  %v2513 = vsel %vm453, %v2481, %v2257
  %v2515 = vsel %vm453, %v2483, %v2259
  %v2517 = vsel %vm453, %v2485, %v2261
  %v2519 = vsel %vm453, %v2487, %v2263
  %v2521 = vsel %vm453, %v2489, %v2265
  %v2523 = vsel %vm453, %v2491, %v2267
  %v2525 = vsel %vm453, %v2493, %v2269
  %v2527 = vsel %vm453, %v2495, %v2271
  %v2529 = vsel %vm453, %v2497, %v2273
  %v2531 = vsel %vm453, %v2499, %v2275
  %v2533 = vsel %vm453, %v2501, %v2277
  %v2535 = vsel %vm453, %v2503, %v2279
  %v2537 = vsel %vm453, %v2505, %v2281
  %v2539 = vsel %vm453, %v2507, %v2283
  %v2541 = vsel %vm453, %v2509, %v2285
  %v2543 = vsel %vm453, %v2511, %v2287
  %v2545 = vsel %vm1822, %v2513, %v2449
  %v2547 = vsel %vm1822, %v2515, %v2451
  %v2549 = vsel %vm1822, %v2517, %v2453
  %v2551 = vsel %vm1822, %v2519, %v2455
  %v2553 = vsel %vm1822, %v2521, %v2457
  %v2555 = vsel %vm1822, %v2523, %v2459
  %v2557 = vsel %vm1822, %v2525, %v2461
  %v2559 = vsel %vm1822, %v2527, %v2463
  %v2561 = vsel %vm1822, %v2529, %v2465
  %v2563 = vsel %vm1822, %v2531, %v2467
  %v2565 = vsel %vm1822, %v2533, %v2469
  %v2567 = vsel %vm1822, %v2535, %v2471
  %v2569 = vsel %vm1822, %v2537, %v2473
  %v2571 = vsel %vm1822, %v2539, %v2475
  %v2573 = vsel %vm1822, %v2541, %v2477
  %v2575 = vsel %vm1822, %v2543, %v2479
  %v2592 = vunpack.c.l.b16 %v2545
  %v2593 = vunpack.c.h.b16 %v2545
  %v2594 = vunpack.c.l.b16 %v2547
  %v2595 = vunpack.c.h.b16 %v2547
  %v2596 = vunpack.c.l.b16 %v2549
  %v2597 = vunpack.c.h.b16 %v2549
  %v2598 = vunpack.c.l.b16 %v2551
  %v2599 = vunpack.c.h.b16 %v2551
  %v2600 = vunpack.c.l.b16 %v2553
  %v2601 = vunpack.c.h.b16 %v2553
  %v2602 = vunpack.c.l.b16 %v2555
  %v2603 = vunpack.c.h.b16 %v2555
  %v2604 = vunpack.c.l.b16 %v2557
  %v2605 = vunpack.c.h.b16 %v2557
  %v2606 = vunpack.c.l.b16 %v2559
  %v2607 = vunpack.c.h.b16 %v2559
  %v2608 = vunpack.c.l.b16 %v2561
  %v2609 = vunpack.c.h.b16 %v2561
  %v2610 = vunpack.c.l.b16 %v2563
  %v2611 = vunpack.c.h.b16 %v2563
  %v2612 = vunpack.c.l.b16 %v2565
  %v2613 = vunpack.c.h.b16 %v2565
  %v2614 = vunpack.c.l.b16 %v2567
  %v2615 = vunpack.c.h.b16 %v2567
  %v2616 = vunpack.c.l.b16 %v2569
  %v2617 = vunpack.c.h.b16 %v2569
  %v2618 = vunpack.c.l.b16 %v2571
  %v2619 = vunpack.c.h.b16 %v2571
  %v2620 = vunpack.c.l.b16 %v2573
  %v2621 = vunpack.c.h.b16 %v2573
  %v2622 = vunpack.c.l.b16 %v2575
  %v2623 = vunpack.c.h.b16 %v2575
  %v2624 = vpack.c.b16 %v2592, %v2592
  %v2625 = vpack.c.b16 %v2593, %v2593
  %v2626 = vpack.c.b16 %v2594, %v2594
  %v2627 = vpack.c.b16 %v2595, %v2595
  %v2628 = vpack.c.b16 %v2596, %v2596
  %v2629 = vpack.c.b16 %v2597, %v2597
  %v2630 = vpack.c.b16 %v2598, %v2598
  %v2631 = vpack.c.b16 %v2599, %v2599
  %v2632 = vpack.c.b16 %v2600, %v2600
  %v2633 = vpack.c.b16 %v2601, %v2601
  %v2634 = vpack.c.b16 %v2602, %v2602
  %v2635 = vpack.c.b16 %v2603, %v2603
  %v2636 = vpack.c.b16 %v2604, %v2604
  %v2637 = vpack.c.b16 %v2605, %v2605
  %v2638 = vpack.c.b16 %v2606, %v2606
  %v2639 = vpack.c.b16 %v2607, %v2607
  %v2640 = vpack.c.b16 %v2608, %v2608
  %v2641 = vpack.c.b16 %v2609, %v2609
  %v2642 = vpack.c.b16 %v2610, %v2610
  %v2643 = vpack.c.b16 %v2611, %v2611
  %v2644 = vpack.c.b16 %v2612, %v2612
  %v2645 = vpack.c.b16 %v2613, %v2613
  %v2646 = vpack.c.b16 %v2614, %v2614
  %v2647 = vpack.c.b16 %v2615, %v2615
  %v2648 = vpack.c.b16 %v2616, %v2616
  %v2649 = vpack.c.b16 %v2617, %v2617
  %v2650 = vpack.c.b16 %v2618, %v2618
  %v2651 = vpack.c.b16 %v2619, %v2619
  %v2652 = vpack.c.b16 %v2620, %v2620
  %v2653 = vpack.c.b16 %v2621, %v2621
  %v2654 = vpack.c.b16 %v2622, %v2622
  %v2655 = vpack.c.b16 %v2623, %v2623
  %vm2656 = vsmask.f32 3328
  %vm2657 = vsmask.f32 7440
  %vm2658 = vmor %vm2656, %vm2657
  %v2660 = vshrl.u32 %v2624, 16
  %v2662 = vrot.slane %v2660, 4
  %v2663 = vshll.u32 %v2624, 16
  %v2665 = vrot.slane %v2663, 5
  %v2666 = vor.u32 %v2662, %v2665
  %v2667 = vrot.slane %v2666, 4
  %v2669 = vshll.u32 %v2625, 16
  %v2671 = vrot.slane %v2669, 5
  %v2672 = vsel %vm2658, %v2667, %v2671
  %v2674 = vshrl.u32 %v2626, 16
  %v2676 = vrot.slane %v2674, 4
  %v2677 = vshll.u32 %v2626, 16
  %v2679 = vrot.slane %v2677, 5
  %v2680 = vor.u32 %v2676, %v2679
  %v2681 = vrot.slane %v2680, 4
  %v2683 = vshll.u32 %v2627, 16
  %v2685 = vrot.slane %v2683, 5
  %v2686 = vsel %vm2658, %v2681, %v2685
  %v2688 = vshrl.u32 %v2628, 16
  %v2690 = vrot.slane %v2688, 4
  %v2691 = vshll.u32 %v2628, 16
  %v2693 = vrot.slane %v2691, 5
  %v2694 = vor.u32 %v2690, %v2693
  %v2695 = vrot.slane %v2694, 4
  %v2697 = vshll.u32 %v2629, 16
  %v2699 = vrot.slane %v2697, 5
  %v2700 = vsel %vm2658, %v2695, %v2699
  %v2702 = vshrl.u32 %v2630, 16
  %v2704 = vrot.slane %v2702, 4
  %v2705 = vshll.u32 %v2630, 16
  %v2707 = vrot.slane %v2705, 5
  %v2708 = vor.u32 %v2704, %v2707
  %v2709 = vrot.slane %v2708, 4
  %v2711 = vshll.u32 %v2631, 16
  %v2713 = vrot.slane %v2711, 5
  %v2714 = vsel %vm2658, %v2709, %v2713
  %v2716 = vshrl.u32 %v2632, 16
  %v2718 = vrot.slane %v2716, 4
  %v2719 = vshll.u32 %v2632, 16
  %v2721 = vrot.slane %v2719, 5
  %v2722 = vor.u32 %v2718, %v2721
  %v2723 = vrot.slane %v2722, 4
  %v2725 = vshll.u32 %v2633, 16
  %v2727 = vrot.slane %v2725, 5
  %v2728 = vsel %vm2658, %v2723, %v2727
  %v2730 = vshrl.u32 %v2634, 16
  %v2732 = vrot.slane %v2730, 4
  %v2733 = vshll.u32 %v2634, 16
  %v2735 = vrot.slane %v2733, 5
  %v2736 = vor.u32 %v2732, %v2735
  %v2737 = vrot.slane %v2736, 4
  %v2739 = vshll.u32 %v2635, 16
  %v2741 = vrot.slane %v2739, 5
  %v2742 = vsel %vm2658, %v2737, %v2741
  %v2744 = vshrl.u32 %v2636, 16
  %v2746 = vrot.slane %v2744, 4
  %v2747 = vshll.u32 %v2636, 16
  %v2749 = vrot.slane %v2747, 5
  %v2750 = vor.u32 %v2746, %v2749
  %v2751 = vrot.slane %v2750, 4
  %v2753 = vshll.u32 %v2637, 16
  %v2755 = vrot.slane %v2753, 5
  %v2756 = vsel %vm2658, %v2751, %v2755
  %v2758 = vshrl.u32 %v2638, 16
  %v2760 = vrot.slane %v2758, 4
  %v2761 = vshll.u32 %v2638, 16
  %v2763 = vrot.slane %v2761, 5
  %v2764 = vor.u32 %v2760, %v2763
  %v2765 = vrot.slane %v2764, 4
  %v2767 = vshll.u32 %v2639, 16
  %v2769 = vrot.slane %v2767, 5
  %v2770 = vsel %vm2658, %v2765, %v2769
  %v2772 = vshrl.u32 %v2640, 16
  %v2774 = vrot.slane %v2772, 4
  %v2775 = vshll.u32 %v2640, 16
  %v2777 = vrot.slane %v2775, 5
  %v2778 = vor.u32 %v2774, %v2777
  %v2779 = vrot.slane %v2778, 4
  %v2781 = vshll.u32 %v2641, 16
  %v2783 = vrot.slane %v2781, 5
  %v2784 = vsel %vm2658, %v2779, %v2783
  %v2786 = vshrl.u32 %v2642, 16
  %v2788 = vrot.slane %v2786, 4
  %v2789 = vshll.u32 %v2642, 16
  %v2791 = vrot.slane %v2789, 5
  %v2792 = vor.u32 %v2788, %v2791
  %v2793 = vrot.slane %v2792, 4
  %v2795 = vshll.u32 %v2643, 16
  %v2797 = vrot.slane %v2795, 5
  %v2798 = vsel %vm2658, %v2793, %v2797
  %v2800 = vshrl.u32 %v2644, 16
  %v2802 = vrot.slane %v2800, 4
  %v2803 = vshll.u32 %v2644, 16
  %v2805 = vrot.slane %v2803, 5
  %v2806 = vor.u32 %v2802, %v2805
  %v2807 = vrot.slane %v2806, 4
  %v2809 = vshll.u32 %v2645, 16
  %v2811 = vrot.slane %v2809, 5
  %v2812 = vsel %vm2658, %v2807, %v2811
  %v2814 = vshrl.u32 %v2646, 16
  %v2816 = vrot.slane %v2814, 4
  %v2817 = vshll.u32 %v2646, 16
  %v2819 = vrot.slane %v2817, 5
  %v2820 = vor.u32 %v2816, %v2819
  %v2821 = vrot.slane %v2820, 4
  %v2823 = vshll.u32 %v2647, 16
  %v2825 = vrot.slane %v2823, 5
  %v2826 = vsel %vm2658, %v2821, %v2825
  %v2828 = vshrl.u32 %v2648, 16
  %v2830 = vrot.slane %v2828, 4
  %v2831 = vshll.u32 %v2648, 16
  %v2833 = vrot.slane %v2831, 5
  %v2834 = vor.u32 %v2830, %v2833
  %v2835 = vrot.slane %v2834, 4
  %v2837 = vshll.u32 %v2649, 16
  %v2839 = vrot.slane %v2837, 5
  %v2840 = vsel %vm2658, %v2835, %v2839
  %v2842 = vshrl.u32 %v2650, 16
  %v2844 = vrot.slane %v2842, 4
  %v2845 = vshll.u32 %v2650, 16
  %v2847 = vrot.slane %v2845, 5
  %v2848 = vor.u32 %v2844, %v2847
  %v2849 = vrot.slane %v2848, 4
  %v2851 = vshll.u32 %v2651, 16
  %v2853 = vrot.slane %v2851, 5
  %v2854 = vsel %vm2658, %v2849, %v2853
  %v2856 = vshrl.u32 %v2652, 16
  %v2858 = vrot.slane %v2856, 4
  %v2859 = vshll.u32 %v2652, 16
  %v2861 = vrot.slane %v2859, 5
  %v2862 = vor.u32 %v2858, %v2861
  %v2863 = vrot.slane %v2862, 4
  %v2865 = vshll.u32 %v2653, 16
  %v2867 = vrot.slane %v2865, 5
  %v2868 = vsel %vm2658, %v2863, %v2867
  %v2870 = vshrl.u32 %v2654, 16
  %v2872 = vrot.slane %v2870, 4
  %v2873 = vshll.u32 %v2654, 16
  %v2875 = vrot.slane %v2873, 5
  %v2876 = vor.u32 %v2872, %v2875
  %v2877 = vrot.slane %v2876, 4
  %v2879 = vshll.u32 %v2655, 16
  %v2881 = vrot.slane %v2879, 5
  %v2882 = vsel %vm2658, %v2877, %v2881
  %s2883 = scalar_lea.vmem %s2, 16
  %v2884 = vld [vmem:[%s2883] sm:$0xf]
  %v2885 = vld [vmem:[%s2883 + $0x4] sm:$0xf]
  %v2886 = vld [vmem:[%s2883 + $0x8] sm:$0xf]
  %v2887 = vld [vmem:[%s2883 + $0xc] sm:$0xf]
  %v2888 = vunpack.c.l.b16 %v2672
  %v2889 = vunpack.c.l.b16 %v2686
  %v2890 = vunpack.c.l.b16 %v2700
  %v2891 = vunpack.c.l.b16 %v2714
  %v2892 = vunpack.c.l.b16 %v2728
  %v2893 = vunpack.c.l.b16 %v2742
  %v2894 = vunpack.c.l.b16 %v2756
  %v2895 = vunpack.c.l.b16 %v2770
  %v2896 = vunpack.c.l.b16 %v2784
  %v2897 = vunpack.c.l.b16 %v2798
  %v2898 = vunpack.c.l.b16 %v2812
  %v2899 = vunpack.c.l.b16 %v2826
  %v2900 = vunpack.c.l.b16 %v2840
  %v2901 = vunpack.c.l.b16 %v2854
  %v2902 = vunpack.c.l.b16 %v2868
  %v2903 = vunpack.c.l.b16 %v2882
  %v2904 = vpack.c.b16 %v2889, %v2888
  %v2905 = vpack.c.b16 %v2891, %v2890
  %v2906 = vpack.c.b16 %v2893, %v2892
  %v2907 = vpack.c.b16 %v2895, %v2894
  %v2908 = vpack.c.b16 %v2897, %v2896
  %v2909 = vpack.c.b16 %v2899, %v2898
  %v2910 = vpack.c.b16 %v2901, %v2900
  %v2911 = vpack.c.b16 %v2903, %v2902
  %v2916 = vunpack.c.l.b16 %v2884
  %v2917 = vunpack.c.l.b16 %v2885
  %v2918 = vunpack.c.l.b16 %v2886
  %v2919 = vunpack.c.l.b16 %v2887
  %v2920 = vpack.c.b16 %v2917, %v2916
  %v2921 = vpack.c.b16 %v2919, %v2918
  %v2925 = vsel %vm486, %v2904, 0
  %v2928 = vsel %vm486, %v2905, 0
  %v2931 = vsel %vm486, %v2906, 0
  %v2934 = vsel %vm486, %v2907, 0
  %v2937 = vsel %vm486, %v2908, 0
  %v2940 = vsel %vm486, %v2909, 0
  %v2943 = vsel %vm486, %v2910, 0
  %v2946 = vsel %vm486, %v2911, 0
  %2948 = vmatprep.subr.bf16.mxu0 0
  %2949 = vmatpush1.bf16.msra.mxu0 %v2920
  %2950 = vmatprep.subr.bf16.mxu0 0
  %2951 = vmatpush1.bf16.msra.mxu0 %v2921
  %2952 = vmatprep.subr.bf16.mxu0 0
  %2953 = vmatpush1.bf16.msra.mxu0 0
  %2954 = vmatprep.subr.bf16.mxu0 0
  %2955 = vmatpush1.bf16.msra.mxu0 0
  %2956 = vmatprep.subr.bf16.mxu0 0
  %2957 = vmatpush1.bf16.msra.mxu0 0
  %2958 = vmatprep.subr.bf16.mxu0 0
  %2959 = vmatpush1.bf16.msra.mxu0 0
  %2960 = vmatprep.subr.bf16.mxu0 0
  %2961 = vmatpush1.bf16.msra.mxu0 0
  %2962 = vmatprep.subr.bf16.mxu0 0
  %2963 = vmatpush1.bf16.msra.mxu0 0
  %2964 = vmatprep.subr.bf16.mxu0 0
  %2965 = vmatpush1.bf16.msra.mxu0 0
  %2966 = vmatprep.subr.bf16.mxu0 0
  %2967 = vmatpush1.bf16.msra.mxu0 0
  %2968 = vmatprep.subr.bf16.mxu0 0
  %2969 = vmatpush1.bf16.msra.mxu0 0
  %2970 = vmatprep.subr.bf16.mxu0 0
  %2971 = vmatpush1.bf16.msra.mxu0 0
  %2972 = vmatprep.subr.bf16.mxu0 0
  %2973 = vmatpush1.bf16.msra.mxu0 0
  %2974 = vmatprep.subr.bf16.mxu0 0
  %2975 = vmatpush1.bf16.msra.mxu0 0
  %2976 = vmatprep.subr.bf16.mxu0 0
  %2977 = vmatpush1.bf16.msra.mxu0 0
  %2978 = vmatprep.subr.bf16.mxu0 0
  %2979 = vmatpush1.bf16.msra.mxu0 0
  %2980 = vmatprep.mubr.bf16.mxu0 0
  %2981 = vmatmul.mubr.bf16.gmra.mrb[0].mxu0 %v2925
  %v2982 = vpop.f32.mrb[0].mxu0
  %v2983 = vadd.f32 0.0, %v2982
  %v2984 = vpop.f32.mrb[0].mxu0
  %v2985 = vpop.f32.mrb[0].mxu0
  %v2986 = vadd.f32 0.0, %v2985
  %v2987 = vpop.f32.mrb[0].mxu0
  %2988 = vmatprep.mubr.bf16.mxu0 0
  %2989 = vmatmul.mubr.bf16.gmra.mrb[0].mxu0 %v2928
  %v2990 = vpop.f32.mrb[0].mxu0
  %v2991 = vadd.f32 0.0, %v2990
  %v2992 = vpop.f32.mrb[0].mxu0
  %v2993 = vpop.f32.mrb[0].mxu0
  %v2994 = vadd.f32 0.0, %v2993
  %v2995 = vpop.f32.mrb[0].mxu0
  %2996 = vmatprep.mubr.bf16.mxu0 0
  %2997 = vmatmul.mubr.bf16.gmra.mrb[0].mxu0 %v2931
  %v2998 = vpop.f32.mrb[0].mxu0
  %v2999 = vadd.f32 0.0, %v2998
  %v3000 = vpop.f32.mrb[0].mxu0
  %v3001 = vpop.f32.mrb[0].mxu0
  %v3002 = vadd.f32 0.0, %v3001
  %v3003 = vpop.f32.mrb[0].mxu0
  %3004 = vmatprep.mubr.bf16.mxu0 0
  %3005 = vmatmul.mubr.bf16.gmra.mrb[0].mxu0 %v2934
  %v3006 = vpop.f32.mrb[0].mxu0
  %v3007 = vadd.f32 0.0, %v3006
  %v3008 = vpop.f32.mrb[0].mxu0
  %v3009 = vpop.f32.mrb[0].mxu0
  %v3010 = vadd.f32 0.0, %v3009
  %v3011 = vpop.f32.mrb[0].mxu0
  %3012 = vmatprep.mubr.bf16.mxu0 0
  %3013 = vmatmul.mubr.bf16.gmra.mrb[0].mxu0 %v2937
  %v3014 = vpop.f32.mrb[0].mxu0
  %v3015 = vadd.f32 0.0, %v3014
  %v3016 = vpop.f32.mrb[0].mxu0
  %v3017 = vpop.f32.mrb[0].mxu0
  %v3018 = vadd.f32 0.0, %v3017
  %v3019 = vpop.f32.mrb[0].mxu0
  %3020 = vmatprep.mubr.bf16.mxu0 0
  %3021 = vmatmul.mubr.bf16.gmra.mrb[0].mxu0 %v2940
  %v3022 = vpop.f32.mrb[0].mxu0
  %v3023 = vadd.f32 0.0, %v3022
  %v3024 = vpop.f32.mrb[0].mxu0
  %v3025 = vpop.f32.mrb[0].mxu0
  %v3026 = vadd.f32 0.0, %v3025
  %v3027 = vpop.f32.mrb[0].mxu0
  %3028 = vmatprep.mubr.bf16.mxu0 0
  %3029 = vmatmul.mubr.bf16.gmra.mrb[0].mxu0 %v2943
  %v3030 = vpop.f32.mrb[0].mxu0
  %v3031 = vadd.f32 0.0, %v3030
  %v3032 = vpop.f32.mrb[0].mxu0
  %v3033 = vpop.f32.mrb[0].mxu0
  %v3034 = vadd.f32 0.0, %v3033
  %v3035 = vpop.f32.mrb[0].mxu0
  %3036 = vmatprep.mubr.bf16.mxu0 0
  %3037 = vmatmul.mubr.bf16.gmra.mrb[0].mxu0 %v2946
  %v3038 = vpop.f32.mrb[0].mxu0
  %v3039 = vadd.f32 0.0, %v3038
  %v3040 = vpop.f32.mrb[0].mxu0
  %v3041 = vpop.f32.mrb[0].mxu0
  %v3042 = vadd.f32 0.0, %v3041
  %v3043 = vpop.f32.mrb[0].mxu0
  %3044 = vdwg.mxu0
  %s3045 = scalar_lea.vmem [#allocation2], 16
  %v3046 = vld [vmem:[%s3045] sm:$0xf]
  %v3047 = vld [vmem:[%s3045 + $0x8] sm:$0xf]
  %v3048 = vld [vmem:[%s3045 + $0x10] sm:$0xf]
  %v3049 = vld [vmem:[%s3045 + $0x18] sm:$0xf]
  %v3050 = vld [vmem:[%s3045 + $0x20] sm:$0xf]
  %v3051 = vld [vmem:[%s3045 + $0x28] sm:$0xf]
  %v3052 = vld [vmem:[%s3045 + $0x30] sm:$0xf]
  %v3053 = vld [vmem:[%s3045 + $0x38] sm:$0xf]
  %v3054 = vld [vmem:[%s3045 + $0x50] sm:$0xf]
  %v3055 = vld [vmem:[%s3045 + $0x58] sm:$0xf]
  %v3056 = vld [vmem:[%s3045 + $0x60] sm:$0xf]
  %v3057 = vld [vmem:[%s3045 + $0x68] sm:$0xf]
  %v3058 = vld [vmem:[%s3045 + $0x70] sm:$0xf]
  %v3059 = vld [vmem:[%s3045 + $0x78] sm:$0xf]
  %v3060 = vld [vmem:[%s3045 + $0x80] sm:$0xf]
  %v3061 = vld [vmem:[%s3045 + $0x88] sm:$0xf]
  %v3062 = vld [vmem:[%s3045 + $0x4] sm:$0x1]
  %v3063 = vld [vmem:[%s3045 + $0xc] sm:$0x1]
  %v3064 = vld [vmem:[%s3045 + $0x14] sm:$0x1]
  %v3065 = vld [vmem:[%s3045 + $0x1c] sm:$0x1]
  %v3066 = vld [vmem:[%s3045 + $0x24] sm:$0x1]
  %v3067 = vld [vmem:[%s3045 + $0x2c] sm:$0x1]
  %v3068 = vld [vmem:[%s3045 + $0x34] sm:$0x1]
  %v3069 = vld [vmem:[%s3045 + $0x3c] sm:$0x1]
  %v3070 = vld [vmem:[%s3045 + $0x54] sm:$0x1]
  %v3071 = vld [vmem:[%s3045 + $0x5c] sm:$0x1]
  %v3072 = vld [vmem:[%s3045 + $0x64] sm:$0x1]
  %v3073 = vld [vmem:[%s3045 + $0x6c] sm:$0x1]
  %v3074 = vld [vmem:[%s3045 + $0x74] sm:$0x1]
  %v3075 = vld [vmem:[%s3045 + $0x7c] sm:$0x1]
  %v3076 = vld [vmem:[%s3045 + $0x84] sm:$0x1]
  %v3077 = vld [vmem:[%s3045 + $0x8c] sm:$0x1]
  %3078 = vrot.lane.b32.xlu0 %v1603, 8
  %v3079 = vpop.permute.xlu0 %3078
  %3080 = vrot.lane.b32.xlu0 %v1610, 8
  %v3081 = vpop.permute.xlu0 %3080
  %3082 = vrot.lane.b32.xlu0 %v1617, 8
  %v3083 = vpop.permute.xlu0 %3082
  %3084 = vrot.lane.b32.xlu0 %v1624, 8
  %v3085 = vpop.permute.xlu0 %3084
  %3086 = vrot.lane.b32.xlu0 %v1631, 8
  %v3087 = vpop.permute.xlu0 %3086
  %3088 = vrot.lane.b32.xlu0 %v1638, 8
  %v3089 = vpop.permute.xlu0 %3088
  %3090 = vrot.lane.b32.xlu0 %v1645, 8
  %v3091 = vpop.permute.xlu0 %3090
  %3092 = vrot.lane.b32.xlu0 %v1652, 8
  %v3093 = vpop.permute.xlu0 %3092
  %3094 = vrot.lane.b32.xlu0 %v1659, 8
  %v3095 = vpop.permute.xlu0 %3094
  %3096 = vrot.lane.b32.xlu0 %v1666, 8
  %v3097 = vpop.permute.xlu0 %3096
  %3098 = vrot.lane.b32.xlu0 %v1673, 8
  %v3099 = vpop.permute.xlu0 %3098
  %3100 = vrot.lane.b32.xlu0 %v1680, 8
  %v3101 = vpop.permute.xlu0 %3100
  %3102 = vrot.lane.b32.xlu0 %v1687, 8
  %v3103 = vpop.permute.xlu0 %3102
  %3104 = vrot.lane.b32.xlu0 %v1694, 8
  %v3105 = vpop.permute.xlu0 %3104
  %3106 = vrot.lane.b32.xlu0 %v1701, 8
  %v3107 = vpop.permute.xlu0 %3106
  %3108 = vrot.lane.b32.xlu0 %v1708, 8
  %v3109 = vpop.permute.xlu0 %3108
  %v3126 = vunpack.c.l.b16 %v3046
  %v3127 = vunpack.c.l.b16 %v3047
  %v3128 = vunpack.c.l.b16 %v3048
  %v3129 = vunpack.c.l.b16 %v3049
  %v3130 = vunpack.c.l.b16 %v3050
  %v3131 = vunpack.c.l.b16 %v3051
  %v3132 = vunpack.c.l.b16 %v3052
  %v3133 = vunpack.c.l.b16 %v3053
  %v3134 = vunpack.c.l.b16 %v3054
  %v3135 = vunpack.c.l.b16 %v3055
  %v3136 = vunpack.c.l.b16 %v3056
  %v3137 = vunpack.c.l.b16 %v3057
  %v3138 = vunpack.c.l.b16 %v3058
  %v3139 = vunpack.c.l.b16 %v3059
  %v3140 = vunpack.c.l.b16 %v3060
  %v3141 = vunpack.c.l.b16 %v3061
  %v3142 = vpack.c.b16 %v3126, %v3126
  %v3143 = vpack.c.b16 %v3127, %v3127
  %v3144 = vpack.c.b16 %v3128, %v3128
  %v3145 = vpack.c.b16 %v3129, %v3129
  %v3146 = vpack.c.b16 %v3130, %v3130
  %v3147 = vpack.c.b16 %v3131, %v3131
  %v3148 = vpack.c.b16 %v3132, %v3132
  %v3149 = vpack.c.b16 %v3133, %v3133
  %v3150 = vpack.c.b16 %v3134, %v3134
  %v3151 = vpack.c.b16 %v3135, %v3135
  %v3152 = vpack.c.b16 %v3136, %v3136
  %v3153 = vpack.c.b16 %v3137, %v3137
  %v3154 = vpack.c.b16 %v3138, %v3138
  %v3155 = vpack.c.b16 %v3139, %v3139
  %v3156 = vpack.c.b16 %v3140, %v3140
  %v3157 = vpack.c.b16 %v3141, %v3141
  %3158 = vrot.lane.b32.xlu0 %v3142, 16
  %v3159 = vpop.permute.xlu0 %3158
  %3160 = vrot.lane.b32.xlu0 %v3143, 16
  %v3161 = vpop.permute.xlu0 %3160
  %3162 = vrot.lane.b32.xlu0 %v3144, 16
  %v3163 = vpop.permute.xlu0 %3162
  %3164 = vrot.lane.b32.xlu0 %v3145, 16
  %v3165 = vpop.permute.xlu0 %3164
  %3166 = vrot.lane.b32.xlu0 %v3146, 16
  %v3167 = vpop.permute.xlu0 %3166
  %3168 = vrot.lane.b32.xlu0 %v3147, 16
  %v3169 = vpop.permute.xlu0 %3168
  %3170 = vrot.lane.b32.xlu0 %v3148, 16
  %v3171 = vpop.permute.xlu0 %3170
  %3172 = vrot.lane.b32.xlu0 %v3149, 16
  %v3173 = vpop.permute.xlu0 %3172
  %3174 = vrot.lane.b32.xlu0 %v3150, 16
  %v3175 = vpop.permute.xlu0 %3174
  %3176 = vrot.lane.b32.xlu0 %v3151, 16
  %v3177 = vpop.permute.xlu0 %3176
  %3178 = vrot.lane.b32.xlu0 %v3152, 16
  %v3179 = vpop.permute.xlu0 %3178
  %3180 = vrot.lane.b32.xlu0 %v3153, 16
  %v3181 = vpop.permute.xlu0 %3180
  %3182 = vrot.lane.b32.xlu0 %v3154, 16
  %v3183 = vpop.permute.xlu0 %3182
  %3184 = vrot.lane.b32.xlu0 %v3155, 16
  %v3185 = vpop.permute.xlu0 %3184
  %3186 = vrot.lane.b32.xlu0 %v3156, 16
  %v3187 = vpop.permute.xlu0 %3186
  %3188 = vrot.lane.b32.xlu0 %v3157, 16
  %v3189 = vpop.permute.xlu0 %3188
  %v3206 = vunpack.c.l.b16 %v3062
  %v3207 = vunpack.c.l.b16 %v3063
  %v3208 = vunpack.c.l.b16 %v3064
  %v3209 = vunpack.c.l.b16 %v3065
  %v3210 = vunpack.c.l.b16 %v3066
  %v3211 = vunpack.c.l.b16 %v3067
  %v3212 = vunpack.c.l.b16 %v3068
  %v3213 = vunpack.c.l.b16 %v3069
  %v3214 = vunpack.c.l.b16 %v3070
  %v3215 = vunpack.c.l.b16 %v3071
  %v3216 = vunpack.c.l.b16 %v3072
  %v3217 = vunpack.c.l.b16 %v3073
  %v3218 = vunpack.c.l.b16 %v3074
  %v3219 = vunpack.c.l.b16 %v3075
  %v3220 = vunpack.c.l.b16 %v3076
  %v3221 = vunpack.c.l.b16 %v3077
  %v3222 = vpack.c.b16 %v3206, %v3126
  %v3223 = vpack.c.b16 %v3207, %v3127
  %v3224 = vpack.c.b16 %v3208, %v3128
  %v3225 = vpack.c.b16 %v3209, %v3129
  %v3226 = vpack.c.b16 %v3210, %v3130
  %v3227 = vpack.c.b16 %v3211, %v3131
  %v3228 = vpack.c.b16 %v3212, %v3132
  %v3229 = vpack.c.b16 %v3213, %v3133
  %v3230 = vpack.c.b16 %v3214, %v3134
  %v3231 = vpack.c.b16 %v3215, %v3135
  %v3232 = vpack.c.b16 %v3216, %v3136
  %v3233 = vpack.c.b16 %v3217, %v3137
  %v3234 = vpack.c.b16 %v3218, %v3138
  %v3235 = vpack.c.b16 %v3219, %v3139
  %v3236 = vpack.c.b16 %v3220, %v3140
  %v3237 = vpack.c.b16 %v3221, %v3141
  %v3239 = vshrl.u32 %v3222, 16
  %v3241 = vshll.u32 %v3222, 16
  %v3243 = vrot.slane %v3241, 1
  %v3244 = vor.u32 %v3239, %v3243
  %v3246 = vshrl.u32 %v3223, 16
  %v3248 = vshll.u32 %v3223, 16
  %v3250 = vrot.slane %v3248, 1
  %v3251 = vor.u32 %v3246, %v3250
  %v3253 = vshrl.u32 %v3224, 16
  %v3255 = vshll.u32 %v3224, 16
  %v3257 = vrot.slane %v3255, 1
  %v3258 = vor.u32 %v3253, %v3257
  %v3260 = vshrl.u32 %v3225, 16
  %v3262 = vshll.u32 %v3225, 16
  %v3264 = vrot.slane %v3262, 1
  %v3265 = vor.u32 %v3260, %v3264
  %v3267 = vshrl.u32 %v3226, 16
  %v3269 = vshll.u32 %v3226, 16
  %v3271 = vrot.slane %v3269, 1
  %v3272 = vor.u32 %v3267, %v3271
  %v3274 = vshrl.u32 %v3227, 16
  %v3276 = vshll.u32 %v3227, 16
  %v3278 = vrot.slane %v3276, 1
  %v3279 = vor.u32 %v3274, %v3278
  %v3281 = vshrl.u32 %v3228, 16
  %v3283 = vshll.u32 %v3228, 16
  %v3285 = vrot.slane %v3283, 1
  %v3286 = vor.u32 %v3281, %v3285
  %v3288 = vshrl.u32 %v3229, 16
  %v3290 = vshll.u32 %v3229, 16
  %v3292 = vrot.slane %v3290, 1
  %v3293 = vor.u32 %v3288, %v3292
  %v3295 = vshrl.u32 %v3230, 16
  %v3297 = vshll.u32 %v3230, 16
  %v3299 = vrot.slane %v3297, 1
  %v3300 = vor.u32 %v3295, %v3299
  %v3302 = vshrl.u32 %v3231, 16
  %v3304 = vshll.u32 %v3231, 16
  %v3306 = vrot.slane %v3304, 1
  %v3307 = vor.u32 %v3302, %v3306
  %v3309 = vshrl.u32 %v3232, 16
  %v3311 = vshll.u32 %v3232, 16
  %v3313 = vrot.slane %v3311, 1
  %v3314 = vor.u32 %v3309, %v3313
  %v3316 = vshrl.u32 %v3233, 16
  %v3318 = vshll.u32 %v3233, 16
  %v3320 = vrot.slane %v3318, 1
  %v3321 = vor.u32 %v3316, %v3320
  %v3323 = vshrl.u32 %v3234, 16
  %v3325 = vshll.u32 %v3234, 16
  %v3327 = vrot.slane %v3325, 1
  %v3328 = vor.u32 %v3323, %v3327
  %v3330 = vshrl.u32 %v3235, 16
  %v3332 = vshll.u32 %v3235, 16
  %v3334 = vrot.slane %v3332, 1
  %v3335 = vor.u32 %v3330, %v3334
  %v3337 = vshrl.u32 %v3236, 16
  %v3339 = vshll.u32 %v3236, 16
  %v3341 = vrot.slane %v3339, 1
  %v3342 = vor.u32 %v3337, %v3341
  %v3344 = vshrl.u32 %v3237, 16
  %v3346 = vshll.u32 %v3237, 16
  %v3348 = vrot.slane %v3346, 1
  %v3349 = vor.u32 %v3344, %v3348
  %3350 = vrot.lane.b32.xlu0 %v3244, 24
  %v3351 = vpop.permute.xlu0 %3350
  %3352 = vrot.lane.b32.xlu0 %v3251, 24
  %v3353 = vpop.permute.xlu0 %3352
  %3354 = vrot.lane.b32.xlu0 %v3258, 24
  %v3355 = vpop.permute.xlu0 %3354
  %3356 = vrot.lane.b32.xlu0 %v3265, 24
  %v3357 = vpop.permute.xlu0 %3356
  %3358 = vrot.lane.b32.xlu0 %v3272, 24
  %v3359 = vpop.permute.xlu0 %3358
  %3360 = vrot.lane.b32.xlu0 %v3279, 24
  %v3361 = vpop.permute.xlu0 %3360
  %3362 = vrot.lane.b32.xlu0 %v3286, 24
  %v3363 = vpop.permute.xlu0 %3362
  %3364 = vrot.lane.b32.xlu0 %v3293, 24
  %v3365 = vpop.permute.xlu0 %3364
  %3366 = vrot.lane.b32.xlu0 %v3300, 24
  %v3367 = vpop.permute.xlu0 %3366
  %3368 = vrot.lane.b32.xlu0 %v3307, 24
  %v3369 = vpop.permute.xlu0 %3368
  %3370 = vrot.lane.b32.xlu0 %v3314, 24
  %v3371 = vpop.permute.xlu0 %3370
  %3372 = vrot.lane.b32.xlu0 %v3321, 24
  %v3373 = vpop.permute.xlu0 %3372
  %3374 = vrot.lane.b32.xlu0 %v3328, 24
  %v3375 = vpop.permute.xlu0 %3374
  %3376 = vrot.lane.b32.xlu0 %v3335, 24
  %v3377 = vpop.permute.xlu0 %3376
  %3378 = vrot.lane.b32.xlu0 %v3342, 24
  %v3379 = vpop.permute.xlu0 %3378
  %3380 = vrot.lane.b32.xlu0 %v3349, 24
  %v3381 = vpop.permute.xlu0 %3380
  %v3384 = vsel %vm1741, %v1213, %v3079
  %v3387 = vsel %vm1741, %v1214, %v3081
  %v3390 = vsel %vm1741, %v1215, %v3083
  %v3393 = vsel %vm1741, %v1216, %v3085
  %v3396 = vsel %vm1741, %v1217, %v3087
  %v3399 = vsel %vm1741, %v1218, %v3089
  %v3402 = vsel %vm1741, %v1219, %v3091
  %v3405 = vsel %vm1741, %v1220, %v3093
  %v3408 = vsel %vm1741, %v1221, %v3095
  %v3411 = vsel %vm1741, %v1222, %v3097
  %v3414 = vsel %vm1741, %v1223, %v3099
  %v3417 = vsel %vm1741, %v1224, %v3101
  %v3420 = vsel %vm1741, %v1225, %v3103
  %v3423 = vsel %vm1741, %v1226, %v3105
  %v3426 = vsel %vm1741, %v1227, %v3107
  %v3429 = vsel %vm1741, %v1228, %v3109
  %v3431 = vsel %vm453, %v3384, %v3159
  %v3433 = vsel %vm453, %v3387, %v3161
  %v3435 = vsel %vm453, %v3390, %v3163
  %v3437 = vsel %vm453, %v3393, %v3165
  %v3439 = vsel %vm453, %v3396, %v3167
  %v3441 = vsel %vm453, %v3399, %v3169
  %v3443 = vsel %vm453, %v3402, %v3171
  %v3445 = vsel %vm453, %v3405, %v3173
  %v3447 = vsel %vm453, %v3408, %v3175
  %v3449 = vsel %vm453, %v3411, %v3177
  %v3451 = vsel %vm453, %v3414, %v3179
  %v3453 = vsel %vm453, %v3417, %v3181
  %v3455 = vsel %vm453, %v3420, %v3183
  %v3457 = vsel %vm453, %v3423, %v3185
  %v3459 = vsel %vm453, %v3426, %v3187
  %v3461 = vsel %vm453, %v3429, %v3189
  %v3463 = vsel %vm1822, %v3431, %v3351
  %v3465 = vsel %vm1822, %v3433, %v3353
  %v3467 = vsel %vm1822, %v3435, %v3355
  %v3469 = vsel %vm1822, %v3437, %v3357
  %v3471 = vsel %vm1822, %v3439, %v3359
  %v3473 = vsel %vm1822, %v3441, %v3361
  %v3475 = vsel %vm1822, %v3443, %v3363
  %v3477 = vsel %vm1822, %v3445, %v3365
  %v3479 = vsel %vm1822, %v3447, %v3367
  %v3481 = vsel %vm1822, %v3449, %v3369
  %v3483 = vsel %vm1822, %v3451, %v3371
  %v3485 = vsel %vm1822, %v3453, %v3373
  %v3487 = vsel %vm1822, %v3455, %v3375
  %v3489 = vsel %vm1822, %v3457, %v3377
  %v3491 = vsel %vm1822, %v3459, %v3379
  %v3493 = vsel %vm1822, %v3461, %v3381
  %s3494 = scalar_lea.vmem %s2, 32
  %v3495 = vld [vmem:[%s3494] sm:$0xf]
  %v3496 = vld [vmem:[%s3494 + $0x4] sm:$0xf]
  %v3497 = vld [vmem:[%s3494 + $0x8] sm:$0xf]
  %v3498 = vld [vmem:[%s3494 + $0xc] sm:$0xf]
  %v3515 = vunpack.c.l.b16 %v3463
  %v3516 = vunpack.c.l.b16 %v3465
  %v3517 = vunpack.c.l.b16 %v3467
  %v3518 = vunpack.c.l.b16 %v3469
  %v3519 = vunpack.c.l.b16 %v3471
  %v3520 = vunpack.c.l.b16 %v3473
  %v3521 = vunpack.c.l.b16 %v3475
  %v3522 = vunpack.c.l.b16 %v3477
  %v3523 = vunpack.c.l.b16 %v3479
  %v3524 = vunpack.c.l.b16 %v3481
  %v3525 = vunpack.c.l.b16 %v3483
  %v3526 = vunpack.c.l.b16 %v3485
  %v3527 = vunpack.c.l.b16 %v3487
  %v3528 = vunpack.c.l.b16 %v3489
  %v3529 = vunpack.c.l.b16 %v3491
  %v3530 = vunpack.c.l.b16 %v3493
  %v3531 = vpack.c.b16 %v3516, %v3515
  %v3532 = vpack.c.b16 %v3518, %v3517
  %v3533 = vpack.c.b16 %v3520, %v3519
  %v3534 = vpack.c.b16 %v3522, %v3521
  %v3535 = vpack.c.b16 %v3524, %v3523
  %v3536 = vpack.c.b16 %v3526, %v3525
  %v3537 = vpack.c.b16 %v3528, %v3527
  %v3538 = vpack.c.b16 %v3530, %v3529
  %v3543 = vunpack.c.l.b16 %v3495
  %v3544 = vunpack.c.l.b16 %v3496
  %v3545 = vunpack.c.l.b16 %v3497
  %v3546 = vunpack.c.l.b16 %v3498
  %v3547 = vpack.c.b16 %v3544, %v3543
  %v3548 = vpack.c.b16 %v3546, %v3545
  %v3552 = vsel %vm486, %v3531, 0
  %v3555 = vsel %vm486, %v3532, 0
  %v3558 = vsel %vm486, %v3533, 0
  %v3561 = vsel %vm486, %v3534, 0
  %v3564 = vsel %vm486, %v3535, 0
  %v3567 = vsel %vm486, %v3536, 0
  %v3570 = vsel %vm486, %v3537, 0
  %v3573 = vsel %vm486, %v3538, 0
  %3575 = vmatprep.subr.bf16.mxu0 0
  %3576 = vmatpush1.bf16.msra.mxu0 %v3547
  %3577 = vmatprep.subr.bf16.mxu0 0
  %3578 = vmatpush1.bf16.msra.mxu0 %v3548
  %3579 = vmatprep.subr.bf16.mxu0 0
  %3580 = vmatpush1.bf16.msra.mxu0 0
  %3581 = vmatprep.subr.bf16.mxu0 0
  %3582 = vmatpush1.bf16.msra.mxu0 0
  %3583 = vmatprep.subr.bf16.mxu0 0
  %3584 = vmatpush1.bf16.msra.mxu0 0
  %3585 = vmatprep.subr.bf16.mxu0 0
  %3586 = vmatpush1.bf16.msra.mxu0 0
  %3587 = vmatprep.subr.bf16.mxu0 0
  %3588 = vmatpush1.bf16.msra.mxu0 0
  %3589 = vmatprep.subr.bf16.mxu0 0
  %3590 = vmatpush1.bf16.msra.mxu0 0
  %3591 = vmatprep.subr.bf16.mxu0 0
  %3592 = vmatpush1.bf16.msra.mxu0 0
  %3593 = vmatprep.subr.bf16.mxu0 0
  %3594 = vmatpush1.bf16.msra.mxu0 0
  %3595 = vmatprep.subr.bf16.mxu0 0
  %3596 = vmatpush1.bf16.msra.mxu0 0
  %3597 = vmatprep.subr.bf16.mxu0 0
  %3598 = vmatpush1.bf16.msra.mxu0 0
  %3599 = vmatprep.subr.bf16.mxu0 0
  %3600 = vmatpush1.bf16.msra.mxu0 0
  %3601 = vmatprep.subr.bf16.mxu0 0
  %3602 = vmatpush1.bf16.msra.mxu0 0
  %3603 = vmatprep.subr.bf16.mxu0 0
  %3604 = vmatpush1.bf16.msra.mxu0 0
  %3605 = vmatprep.subr.bf16.mxu0 0
  %3606 = vmatpush1.bf16.msra.mxu0 0
  %3607 = vmatprep.mubr.bf16.mxu0 0
  %3608 = vmatmul.mubr.bf16.gmra.mrb[0].mxu0 %v3552
  %v3609 = vpop.f32.mrb[0].mxu0
  %v3610 = vadd.f32 0.0, %v3609
  %v3611 = vpop.f32.mrb[0].mxu0
  %v3612 = vpop.f32.mrb[0].mxu0
  %v3613 = vadd.f32 0.0, %v3612
  %v3614 = vpop.f32.mrb[0].mxu0
  %3615 = vmatprep.mubr.bf16.mxu0 0
  %3616 = vmatmul.mubr.bf16.gmra.mrb[0].mxu0 %v3555
  %v3617 = vpop.f32.mrb[0].mxu0
  %v3618 = vadd.f32 0.0, %v3617
  %v3619 = vpop.f32.mrb[0].mxu0
  %v3620 = vpop.f32.mrb[0].mxu0
  %v3621 = vadd.f32 0.0, %v3620
  %v3622 = vpop.f32.mrb[0].mxu0
  %3623 = vmatprep.mubr.bf16.mxu0 0
  %3624 = vmatmul.mubr.bf16.gmra.mrb[0].mxu0 %v3558
  %v3625 = vpop.f32.mrb[0].mxu0
  %v3626 = vadd.f32 0.0, %v3625
  %v3627 = vpop.f32.mrb[0].mxu0
  %v3628 = vpop.f32.mrb[0].mxu0
  %v3629 = vadd.f32 0.0, %v3628
  %v3630 = vpop.f32.mrb[0].mxu0
  %3631 = vmatprep.mubr.bf16.mxu0 0
  %3632 = vmatmul.mubr.bf16.gmra.mrb[0].mxu0 %v3561
  %v3633 = vpop.f32.mrb[0].mxu0
  %v3634 = vadd.f32 0.0, %v3633
  %v3635 = vpop.f32.mrb[0].mxu0
  %v3636 = vpop.f32.mrb[0].mxu0
  %v3637 = vadd.f32 0.0, %v3636
  %v3638 = vpop.f32.mrb[0].mxu0
  %3639 = vmatprep.mubr.bf16.mxu0 0
  %3640 = vmatmul.mubr.bf16.gmra.mrb[0].mxu0 %v3564
  %v3641 = vpop.f32.mrb[0].mxu0
  %v3642 = vadd.f32 0.0, %v3641
  %v3643 = vpop.f32.mrb[0].mxu0
  %v3644 = vpop.f32.mrb[0].mxu0
  %v3645 = vadd.f32 0.0, %v3644
  %v3646 = vpop.f32.mrb[0].mxu0
  %3647 = vmatprep.mubr.bf16.mxu0 0
  %3648 = vmatmul.mubr.bf16.gmra.mrb[0].mxu0 %v3567
  %v3649 = vpop.f32.mrb[0].mxu0
  %v3650 = vadd.f32 0.0, %v3649
  %v3651 = vpop.f32.mrb[0].mxu0
  %v3652 = vpop.f32.mrb[0].mxu0
  %v3653 = vadd.f32 0.0, %v3652
  %v3654 = vpop.f32.mrb[0].mxu0
  %3655 = vmatprep.mubr.bf16.mxu0 0
  %3656 = vmatmul.mubr.bf16.gmra.mrb[0].mxu0 %v3570
  %v3657 = vpop.f32.mrb[0].mxu0
  %v3658 = vadd.f32 0.0, %v3657
  %v3659 = vpop.f32.mrb[0].mxu0
  %v3660 = vpop.f32.mrb[0].mxu0
  %v3661 = vadd.f32 0.0, %v3660
  %v3662 = vpop.f32.mrb[0].mxu0
  %3663 = vmatprep.mubr.bf16.mxu0 0
  %3664 = vmatmul.mubr.bf16.gmra.mrb[0].mxu0 %v3573
  %v3665 = vpop.f32.mrb[0].mxu0
  %v3666 = vadd.f32 0.0, %v3665
  %v3667 = vpop.f32.mrb[0].mxu0
  %v3668 = vpop.f32.mrb[0].mxu0
  %v3669 = vadd.f32 0.0, %v3668
  %v3670 = vpop.f32.mrb[0].mxu0
  %3671 = vdwg.mxu0
  %v3672 = vld [vmem:[%s3045] sm:$0xe]
  %v3673 = vld [vmem:[%s3045 + $0x8] sm:$0xe]
  %v3674 = vld [vmem:[%s3045 + $0x10] sm:$0xe]
  %v3675 = vld [vmem:[%s3045 + $0x18] sm:$0xe]
  %v3676 = vld [vmem:[%s3045 + $0x20] sm:$0xe]
  %v3677 = vld [vmem:[%s3045 + $0x28] sm:$0xe]
  %v3678 = vld [vmem:[%s3045 + $0x30] sm:$0xe]
  %v3679 = vld [vmem:[%s3045 + $0x38] sm:$0xe]
  %v3680 = vld [vmem:[%s3045 + $0x50] sm:$0xe]
  %v3681 = vld [vmem:[%s3045 + $0x58] sm:$0xe]
  %v3682 = vld [vmem:[%s3045 + $0x60] sm:$0xe]
  %v3683 = vld [vmem:[%s3045 + $0x68] sm:$0xe]
  %v3684 = vld [vmem:[%s3045 + $0x70] sm:$0xe]
  %v3685 = vld [vmem:[%s3045 + $0x78] sm:$0xe]
  %v3686 = vld [vmem:[%s3045 + $0x80] sm:$0xe]
  %v3687 = vld [vmem:[%s3045 + $0x88] sm:$0xe]
  %3688 = vrot.lane.b32.xlu0 %v2342, 8
  %v3689 = vpop.permute.xlu0 %3688
  %3690 = vrot.lane.b32.xlu0 %v2349, 8
  %v3691 = vpop.permute.xlu0 %3690
  %3692 = vrot.lane.b32.xlu0 %v2356, 8
  %v3693 = vpop.permute.xlu0 %3692
  %3694 = vrot.lane.b32.xlu0 %v2363, 8
  %v3695 = vpop.permute.xlu0 %3694
  %3696 = vrot.lane.b32.xlu0 %v2370, 8
  %v3697 = vpop.permute.xlu0 %3696
  %3698 = vrot.lane.b32.xlu0 %v2377, 8
  %v3699 = vpop.permute.xlu0 %3698
  %3700 = vrot.lane.b32.xlu0 %v2384, 8
  %v3701 = vpop.permute.xlu0 %3700
  %3702 = vrot.lane.b32.xlu0 %v2391, 8
  %v3703 = vpop.permute.xlu0 %3702
  %3704 = vrot.lane.b32.xlu0 %v2398, 8
  %v3705 = vpop.permute.xlu0 %3704
  %3706 = vrot.lane.b32.xlu0 %v2405, 8
  %v3707 = vpop.permute.xlu0 %3706
  %3708 = vrot.lane.b32.xlu0 %v2412, 8
  %v3709 = vpop.permute.xlu0 %3708
  %3710 = vrot.lane.b32.xlu0 %v2419, 8
  %v3711 = vpop.permute.xlu0 %3710
  %3712 = vrot.lane.b32.xlu0 %v2426, 8
  %v3713 = vpop.permute.xlu0 %3712
  %3714 = vrot.lane.b32.xlu0 %v2433, 8
  %v3715 = vpop.permute.xlu0 %3714
  %3716 = vrot.lane.b32.xlu0 %v2440, 8
  %v3717 = vpop.permute.xlu0 %3716
  %3718 = vrot.lane.b32.xlu0 %v2447, 8
  %v3719 = vpop.permute.xlu0 %3718
  %3720 = vrot.lane.b32.xlu0 %v3222, 16
  %v3721 = vpop.permute.xlu0 %3720
  %3722 = vrot.lane.b32.xlu0 %v3223, 16
  %v3723 = vpop.permute.xlu0 %3722
  %3724 = vrot.lane.b32.xlu0 %v3224, 16
  %v3725 = vpop.permute.xlu0 %3724
  %3726 = vrot.lane.b32.xlu0 %v3225, 16
  %v3727 = vpop.permute.xlu0 %3726
  %3728 = vrot.lane.b32.xlu0 %v3226, 16
  %v3729 = vpop.permute.xlu0 %3728
  %3730 = vrot.lane.b32.xlu0 %v3227, 16
  %v3731 = vpop.permute.xlu0 %3730
  %3732 = vrot.lane.b32.xlu0 %v3228, 16
  %v3733 = vpop.permute.xlu0 %3732
  %3734 = vrot.lane.b32.xlu0 %v3229, 16
  %v3735 = vpop.permute.xlu0 %3734
  %3736 = vrot.lane.b32.xlu0 %v3230, 16
  %v3737 = vpop.permute.xlu0 %3736
  %3738 = vrot.lane.b32.xlu0 %v3231, 16
  %v3739 = vpop.permute.xlu0 %3738
  %3740 = vrot.lane.b32.xlu0 %v3232, 16
  %v3741 = vpop.permute.xlu0 %3740
  %3742 = vrot.lane.b32.xlu0 %v3233, 16
  %v3743 = vpop.permute.xlu0 %3742
  %3744 = vrot.lane.b32.xlu0 %v3234, 16
  %v3745 = vpop.permute.xlu0 %3744
  %3746 = vrot.lane.b32.xlu0 %v3235, 16
  %v3747 = vpop.permute.xlu0 %3746
  %3748 = vrot.lane.b32.xlu0 %v3236, 16
  %v3749 = vpop.permute.xlu0 %3748
  %3750 = vrot.lane.b32.xlu0 %v3237, 16
  %v3751 = vpop.permute.xlu0 %3750
  %v3768 = vunpack.c.l.b16 %v3672
  %v3769 = vunpack.c.l.b16 %v3673
  %v3770 = vunpack.c.l.b16 %v3674
  %v3771 = vunpack.c.l.b16 %v3675
  %v3772 = vunpack.c.l.b16 %v3676
  %v3773 = vunpack.c.l.b16 %v3677
  %v3774 = vunpack.c.l.b16 %v3678
  %v3775 = vunpack.c.l.b16 %v3679
  %v3776 = vunpack.c.l.b16 %v3680
  %v3777 = vunpack.c.l.b16 %v3681
  %v3778 = vunpack.c.l.b16 %v3682
  %v3779 = vunpack.c.l.b16 %v3683
  %v3780 = vunpack.c.l.b16 %v3684
  %v3781 = vunpack.c.l.b16 %v3685
  %v3782 = vunpack.c.l.b16 %v3686
  %v3783 = vunpack.c.l.b16 %v3687
  %v3784 = vpack.c.b16 %v3206, %v3768
  %v3785 = vpack.c.b16 %v3207, %v3769
  %v3786 = vpack.c.b16 %v3208, %v3770
  %v3787 = vpack.c.b16 %v3209, %v3771
  %v3788 = vpack.c.b16 %v3210, %v3772
  %v3789 = vpack.c.b16 %v3211, %v3773
  %v3790 = vpack.c.b16 %v3212, %v3774
  %v3791 = vpack.c.b16 %v3213, %v3775
  %v3792 = vpack.c.b16 %v3214, %v3776
  %v3793 = vpack.c.b16 %v3215, %v3777
  %v3794 = vpack.c.b16 %v3216, %v3778
  %v3795 = vpack.c.b16 %v3217, %v3779
  %v3796 = vpack.c.b16 %v3218, %v3780
  %v3797 = vpack.c.b16 %v3219, %v3781
  %v3798 = vpack.c.b16 %v3220, %v3782
  %v3799 = vpack.c.b16 %v3221, %v3783
  %v3801 = vshrl.u32 %v3784, 16
  %v3803 = vshll.u32 %v3784, 16
  %v3805 = vrot.slane %v3803, 1
  %v3806 = vor.u32 %v3801, %v3805
  %v3808 = vshrl.u32 %v3785, 16
  %v3810 = vshll.u32 %v3785, 16
  %v3812 = vrot.slane %v3810, 1
  %v3813 = vor.u32 %v3808, %v3812
  %v3815 = vshrl.u32 %v3786, 16
  %v3817 = vshll.u32 %v3786, 16
  %v3819 = vrot.slane %v3817, 1
  %v3820 = vor.u32 %v3815, %v3819
  %v3822 = vshrl.u32 %v3787, 16
  %v3824 = vshll.u32 %v3787, 16
  %v3826 = vrot.slane %v3824, 1
  %v3827 = vor.u32 %v3822, %v3826
  %v3829 = vshrl.u32 %v3788, 16
  %v3831 = vshll.u32 %v3788, 16
  %v3833 = vrot.slane %v3831, 1
  %v3834 = vor.u32 %v3829, %v3833
  %v3836 = vshrl.u32 %v3789, 16
  %v3838 = vshll.u32 %v3789, 16
  %v3840 = vrot.slane %v3838, 1
  %v3841 = vor.u32 %v3836, %v3840
  %v3843 = vshrl.u32 %v3790, 16
  %v3845 = vshll.u32 %v3790, 16
  %v3847 = vrot.slane %v3845, 1
  %v3848 = vor.u32 %v3843, %v3847
  %v3850 = vshrl.u32 %v3791, 16
  %v3852 = vshll.u32 %v3791, 16
  %v3854 = vrot.slane %v3852, 1
  %v3855 = vor.u32 %v3850, %v3854
  %v3857 = vshrl.u32 %v3792, 16
  %v3859 = vshll.u32 %v3792, 16
  %v3861 = vrot.slane %v3859, 1
  %v3862 = vor.u32 %v3857, %v3861
  %v3864 = vshrl.u32 %v3793, 16
  %v3866 = vshll.u32 %v3793, 16
  %v3868 = vrot.slane %v3866, 1
  %v3869 = vor.u32 %v3864, %v3868
  %v3871 = vshrl.u32 %v3794, 16
  %v3873 = vshll.u32 %v3794, 16
  %v3875 = vrot.slane %v3873, 1
  %v3876 = vor.u32 %v3871, %v3875
  %v3878 = vshrl.u32 %v3795, 16
  %v3880 = vshll.u32 %v3795, 16
  %v3882 = vrot.slane %v3880, 1
  %v3883 = vor.u32 %v3878, %v3882
  %v3885 = vshrl.u32 %v3796, 16
  %v3887 = vshll.u32 %v3796, 16
  %v3889 = vrot.slane %v3887, 1
  %v3890 = vor.u32 %v3885, %v3889
  %v3892 = vshrl.u32 %v3797, 16
  %v3894 = vshll.u32 %v3797, 16
  %v3896 = vrot.slane %v3894, 1
  %v3897 = vor.u32 %v3892, %v3896
  %v3899 = vshrl.u32 %v3798, 16
  %v3901 = vshll.u32 %v3798, 16
  %v3903 = vrot.slane %v3901, 1
  %v3904 = vor.u32 %v3899, %v3903
  %v3906 = vshrl.u32 %v3799, 16
  %v3908 = vshll.u32 %v3799, 16
  %v3910 = vrot.slane %v3908, 1
  %v3911 = vor.u32 %v3906, %v3910
  %3912 = vrot.lane.b32.xlu0 %v3806, 24
  %v3913 = vpop.permute.xlu0 %3912
  %3914 = vrot.lane.b32.xlu0 %v3813, 24
  %v3915 = vpop.permute.xlu0 %3914
  %3916 = vrot.lane.b32.xlu0 %v3820, 24
  %v3917 = vpop.permute.xlu0 %3916
  %3918 = vrot.lane.b32.xlu0 %v3827, 24
  %v3919 = vpop.permute.xlu0 %3918
  %3920 = vrot.lane.b32.xlu0 %v3834, 24
  %v3921 = vpop.permute.xlu0 %3920
  %3922 = vrot.lane.b32.xlu0 %v3841, 24
  %v3923 = vpop.permute.xlu0 %3922
  %3924 = vrot.lane.b32.xlu0 %v3848, 24
  %v3925 = vpop.permute.xlu0 %3924
  %3926 = vrot.lane.b32.xlu0 %v3855, 24
  %v3927 = vpop.permute.xlu0 %3926
  %3928 = vrot.lane.b32.xlu0 %v3862, 24
  %v3929 = vpop.permute.xlu0 %3928
  %3930 = vrot.lane.b32.xlu0 %v3869, 24
  %v3931 = vpop.permute.xlu0 %3930
  %3932 = vrot.lane.b32.xlu0 %v3876, 24
  %v3933 = vpop.permute.xlu0 %3932
  %3934 = vrot.lane.b32.xlu0 %v3883, 24
  %v3935 = vpop.permute.xlu0 %3934
  %3936 = vrot.lane.b32.xlu0 %v3890, 24
  %v3937 = vpop.permute.xlu0 %3936
  %3938 = vrot.lane.b32.xlu0 %v3897, 24
  %v3939 = vpop.permute.xlu0 %3938
  %3940 = vrot.lane.b32.xlu0 %v3904, 24
  %v3941 = vpop.permute.xlu0 %3940
  %3942 = vrot.lane.b32.xlu0 %v3911, 24
  %v3943 = vpop.permute.xlu0 %3942
  %v3945 = vsel %vm1741, %v1581, %v3689
  %v3947 = vsel %vm1741, %v1582, %v3691
  %v3949 = vsel %vm1741, %v1583, %v3693
  %v3951 = vsel %vm1741, %v1584, %v3695
  %v3953 = vsel %vm1741, %v1585, %v3697
  %v3955 = vsel %vm1741, %v1586, %v3699
  %v3957 = vsel %vm1741, %v1587, %v3701
  %v3959 = vsel %vm1741, %v1588, %v3703
  %v3961 = vsel %vm1741, %v1589, %v3705
  %v3963 = vsel %vm1741, %v1590, %v3707
  %v3965 = vsel %vm1741, %v1591, %v3709
  %v3967 = vsel %vm1741, %v1592, %v3711
  %v3969 = vsel %vm1741, %v1593, %v3713
  %v3971 = vsel %vm1741, %v1594, %v3715
  %v3973 = vsel %vm1741, %v1595, %v3717
  %v3975 = vsel %vm1741, %v1596, %v3719
  %v3977 = vsel %vm453, %v3945, %v3721
  %v3979 = vsel %vm453, %v3947, %v3723
  %v3981 = vsel %vm453, %v3949, %v3725
  %v3983 = vsel %vm453, %v3951, %v3727
  %v3985 = vsel %vm453, %v3953, %v3729
  %v3987 = vsel %vm453, %v3955, %v3731
  %v3989 = vsel %vm453, %v3957, %v3733
  %v3991 = vsel %vm453, %v3959, %v3735
  %v3993 = vsel %vm453, %v3961, %v3737
  %v3995 = vsel %vm453, %v3963, %v3739
  %v3997 = vsel %vm453, %v3965, %v3741
  %v3999 = vsel %vm453, %v3967, %v3743
  %v4001 = vsel %vm453, %v3969, %v3745
  %v4003 = vsel %vm453, %v3971, %v3747
  %v4005 = vsel %vm453, %v3973, %v3749
  %v4007 = vsel %vm453, %v3975, %v3751
  %v4009 = vsel %vm1822, %v3977, %v3913
  %v4011 = vsel %vm1822, %v3979, %v3915
  %v4013 = vsel %vm1822, %v3981, %v3917
  %v4015 = vsel %vm1822, %v3983, %v3919
  %v4017 = vsel %vm1822, %v3985, %v3921
  %v4019 = vsel %vm1822, %v3987, %v3923
  %v4021 = vsel %vm1822, %v3989, %v3925
  %v4023 = vsel %vm1822, %v3991, %v3927
  %v4025 = vsel %vm1822, %v3993, %v3929
  %v4027 = vsel %vm1822, %v3995, %v3931
  %v4029 = vsel %vm1822, %v3997, %v3933
  %v4031 = vsel %vm1822, %v3999, %v3935
  %v4033 = vsel %vm1822, %v4001, %v3937
  %v4035 = vsel %vm1822, %v4003, %v3939
  %v4037 = vsel %vm1822, %v4005, %v3941
  %v4039 = vsel %vm1822, %v4007, %v3943
  %v4056 = vunpack.c.l.b16 %v4009
  %v4057 = vunpack.c.h.b16 %v4009
  %v4058 = vunpack.c.l.b16 %v4011
  %v4059 = vunpack.c.h.b16 %v4011
  %v4060 = vunpack.c.l.b16 %v4013
  %v4061 = vunpack.c.h.b16 %v4013
  %v4062 = vunpack.c.l.b16 %v4015
  %v4063 = vunpack.c.h.b16 %v4015
  %v4064 = vunpack.c.l.b16 %v4017
  %v4065 = vunpack.c.h.b16 %v4017
  %v4066 = vunpack.c.l.b16 %v4019
  %v4067 = vunpack.c.h.b16 %v4019
  %v4068 = vunpack.c.l.b16 %v4021
  %v4069 = vunpack.c.h.b16 %v4021
  %v4070 = vunpack.c.l.b16 %v4023
  %v4071 = vunpack.c.h.b16 %v4023
  %v4072 = vunpack.c.l.b16 %v4025
  %v4073 = vunpack.c.h.b16 %v4025
  %v4074 = vunpack.c.l.b16 %v4027
  %v4075 = vunpack.c.h.b16 %v4027
  %v4076 = vunpack.c.l.b16 %v4029
  %v4077 = vunpack.c.h.b16 %v4029
  %v4078 = vunpack.c.l.b16 %v4031
  %v4079 = vunpack.c.h.b16 %v4031
  %v4080 = vunpack.c.l.b16 %v4033
  %v4081 = vunpack.c.h.b16 %v4033
  %v4082 = vunpack.c.l.b16 %v4035
  %v4083 = vunpack.c.h.b16 %v4035
  %v4084 = vunpack.c.l.b16 %v4037
  %v4085 = vunpack.c.h.b16 %v4037
  %v4086 = vunpack.c.l.b16 %v4039
  %v4087 = vunpack.c.h.b16 %v4039
  %v4088 = vpack.c.b16 %v4056, %v4056
  %v4089 = vpack.c.b16 %v4057, %v4057
  %v4090 = vpack.c.b16 %v4058, %v4058
  %v4091 = vpack.c.b16 %v4059, %v4059
  %v4092 = vpack.c.b16 %v4060, %v4060
  %v4093 = vpack.c.b16 %v4061, %v4061
  %v4094 = vpack.c.b16 %v4062, %v4062
  %v4095 = vpack.c.b16 %v4063, %v4063
  %v4096 = vpack.c.b16 %v4064, %v4064
  %v4097 = vpack.c.b16 %v4065, %v4065
  %v4098 = vpack.c.b16 %v4066, %v4066
  %v4099 = vpack.c.b16 %v4067, %v4067
  %v4100 = vpack.c.b16 %v4068, %v4068
  %v4101 = vpack.c.b16 %v4069, %v4069
  %v4102 = vpack.c.b16 %v4070, %v4070
  %v4103 = vpack.c.b16 %v4071, %v4071
  %v4104 = vpack.c.b16 %v4072, %v4072
  %v4105 = vpack.c.b16 %v4073, %v4073
  %v4106 = vpack.c.b16 %v4074, %v4074
  %v4107 = vpack.c.b16 %v4075, %v4075
  %v4108 = vpack.c.b16 %v4076, %v4076
  %v4109 = vpack.c.b16 %v4077, %v4077
  %v4110 = vpack.c.b16 %v4078, %v4078
  %v4111 = vpack.c.b16 %v4079, %v4079
  %v4112 = vpack.c.b16 %v4080, %v4080
  %v4113 = vpack.c.b16 %v4081, %v4081
  %v4114 = vpack.c.b16 %v4082, %v4082
  %v4115 = vpack.c.b16 %v4083, %v4083
  %v4116 = vpack.c.b16 %v4084, %v4084
  %v4117 = vpack.c.b16 %v4085, %v4085
  %v4118 = vpack.c.b16 %v4086, %v4086
  %v4119 = vpack.c.b16 %v4087, %v4087
  %v4121 = vshrl.u32 %v4088, 16
  %v4123 = vrot.slane %v4121, 4
  %v4124 = vshll.u32 %v4088, 16
  %v4126 = vrot.slane %v4124, 5
  %v4127 = vor.u32 %v4123, %v4126
  %v4128 = vrot.slane %v4127, 4
  %v4130 = vshll.u32 %v4089, 16
  %v4132 = vrot.slane %v4130, 5
  %v4133 = vsel %vm2658, %v4128, %v4132
  %v4135 = vshrl.u32 %v4090, 16
  %v4137 = vrot.slane %v4135, 4
  %v4138 = vshll.u32 %v4090, 16
  %v4140 = vrot.slane %v4138, 5
  %v4141 = vor.u32 %v4137, %v4140
  %v4142 = vrot.slane %v4141, 4
  %v4144 = vshll.u32 %v4091, 16
  %v4146 = vrot.slane %v4144, 5
  %v4147 = vsel %vm2658, %v4142, %v4146
  %v4149 = vshrl.u32 %v4092, 16
  %v4151 = vrot.slane %v4149, 4
  %v4152 = vshll.u32 %v4092, 16
  %v4154 = vrot.slane %v4152, 5
  %v4155 = vor.u32 %v4151, %v4154
  %v4156 = vrot.slane %v4155, 4
  %v4158 = vshll.u32 %v4093, 16
  %v4160 = vrot.slane %v4158, 5
  %v4161 = vsel %vm2658, %v4156, %v4160
  %v4163 = vshrl.u32 %v4094, 16
  %v4165 = vrot.slane %v4163, 4
  %v4166 = vshll.u32 %v4094, 16
  %v4168 = vrot.slane %v4166, 5
  %v4169 = vor.u32 %v4165, %v4168
  %v4170 = vrot.slane %v4169, 4
  %v4172 = vshll.u32 %v4095, 16
  %v4174 = vrot.slane %v4172, 5
  %v4175 = vsel %vm2658, %v4170, %v4174
  %v4177 = vshrl.u32 %v4096, 16
  %v4179 = vrot.slane %v4177, 4
  %v4180 = vshll.u32 %v4096, 16
  %v4182 = vrot.slane %v4180, 5
  %v4183 = vor.u32 %v4179, %v4182
  %v4184 = vrot.slane %v4183, 4
  %v4186 = vshll.u32 %v4097, 16
  %v4188 = vrot.slane %v4186, 5
  %v4189 = vsel %vm2658, %v4184, %v4188
  %v4191 = vshrl.u32 %v4098, 16
  %v4193 = vrot.slane %v4191, 4
  %v4194 = vshll.u32 %v4098, 16
  %v4196 = vrot.slane %v4194, 5
  %v4197 = vor.u32 %v4193, %v4196
  %v4198 = vrot.slane %v4197, 4
  %v4200 = vshll.u32 %v4099, 16
  %v4202 = vrot.slane %v4200, 5
  %v4203 = vsel %vm2658, %v4198, %v4202
  %v4205 = vshrl.u32 %v4100, 16
  %v4207 = vrot.slane %v4205, 4
  %v4208 = vshll.u32 %v4100, 16
  %v4210 = vrot.slane %v4208, 5
  %v4211 = vor.u32 %v4207, %v4210
  %v4212 = vrot.slane %v4211, 4
  %v4214 = vshll.u32 %v4101, 16
  %v4216 = vrot.slane %v4214, 5
  %v4217 = vsel %vm2658, %v4212, %v4216
  %v4219 = vshrl.u32 %v4102, 16
  %v4221 = vrot.slane %v4219, 4
  %v4222 = vshll.u32 %v4102, 16
  %v4224 = vrot.slane %v4222, 5
  %v4225 = vor.u32 %v4221, %v4224
  %v4226 = vrot.slane %v4225, 4
  %v4228 = vshll.u32 %v4103, 16
  %v4230 = vrot.slane %v4228, 5
  %v4231 = vsel %vm2658, %v4226, %v4230
  %v4233 = vshrl.u32 %v4104, 16
  %v4235 = vrot.slane %v4233, 4
  %v4236 = vshll.u32 %v4104, 16
  %v4238 = vrot.slane %v4236, 5
  %v4239 = vor.u32 %v4235, %v4238
  %v4240 = vrot.slane %v4239, 4
  %v4242 = vshll.u32 %v4105, 16
  %v4244 = vrot.slane %v4242, 5
  %v4245 = vsel %vm2658, %v4240, %v4244
  %v4247 = vshrl.u32 %v4106, 16
  %v4249 = vrot.slane %v4247, 4
  %v4250 = vshll.u32 %v4106, 16
  %v4252 = vrot.slane %v4250, 5
  %v4253 = vor.u32 %v4249, %v4252
  %v4254 = vrot.slane %v4253, 4
  %v4256 = vshll.u32 %v4107, 16
  %v4258 = vrot.slane %v4256, 5
  %v4259 = vsel %vm2658, %v4254, %v4258
  %v4261 = vshrl.u32 %v4108, 16
  %v4263 = vrot.slane %v4261, 4
  %v4264 = vshll.u32 %v4108, 16
  %v4266 = vrot.slane %v4264, 5
  %v4267 = vor.u32 %v4263, %v4266
  %v4268 = vrot.slane %v4267, 4
  %v4270 = vshll.u32 %v4109, 16
  %v4272 = vrot.slane %v4270, 5
  %v4273 = vsel %vm2658, %v4268, %v4272
  %v4275 = vshrl.u32 %v4110, 16
  %v4277 = vrot.slane %v4275, 4
  %v4278 = vshll.u32 %v4110, 16
  %v4280 = vrot.slane %v4278, 5
  %v4281 = vor.u32 %v4277, %v4280
  %v4282 = vrot.slane %v4281, 4
  %v4284 = vshll.u32 %v4111, 16
  %v4286 = vrot.slane %v4284, 5
  %v4287 = vsel %vm2658, %v4282, %v4286
  %v4289 = vshrl.u32 %v4112, 16
  %v4291 = vrot.slane %v4289, 4
  %v4292 = vshll.u32 %v4112, 16
  %v4294 = vrot.slane %v4292, 5
  %v4295 = vor.u32 %v4291, %v4294
  %v4296 = vrot.slane %v4295, 4
  %v4298 = vshll.u32 %v4113, 16
  %v4300 = vrot.slane %v4298, 5
  %v4301 = vsel %vm2658, %v4296, %v4300
  %v4303 = vshrl.u32 %v4114, 16
  %v4305 = vrot.slane %v4303, 4
  %v4306 = vshll.u32 %v4114, 16
  %v4308 = vrot.slane %v4306, 5
  %v4309 = vor.u32 %v4305, %v4308
  %v4310 = vrot.slane %v4309, 4
  %v4312 = vshll.u32 %v4115, 16
  %v4314 = vrot.slane %v4312, 5
  %v4315 = vsel %vm2658, %v4310, %v4314
  %v4317 = vshrl.u32 %v4116, 16
  %v4319 = vrot.slane %v4317, 4
  %v4320 = vshll.u32 %v4116, 16
  %v4322 = vrot.slane %v4320, 5
  %v4323 = vor.u32 %v4319, %v4322
  %v4324 = vrot.slane %v4323, 4
  %v4326 = vshll.u32 %v4117, 16
  %v4328 = vrot.slane %v4326, 5
  %v4329 = vsel %vm2658, %v4324, %v4328
  %v4331 = vshrl.u32 %v4118, 16
  %v4333 = vrot.slane %v4331, 4
  %v4334 = vshll.u32 %v4118, 16
  %v4336 = vrot.slane %v4334, 5
  %v4337 = vor.u32 %v4333, %v4336
  %v4338 = vrot.slane %v4337, 4
  %v4340 = vshll.u32 %v4119, 16
  %v4342 = vrot.slane %v4340, 5
  %v4343 = vsel %vm2658, %v4338, %v4342
  %s4344 = scalar_lea.vmem %s2, 48
  %v4345 = vld [vmem:[%s4344] sm:$0xf]
  %v4346 = vld [vmem:[%s4344 + $0x4] sm:$0xf]
  %v4347 = vld [vmem:[%s4344 + $0x8] sm:$0xf]
  %v4348 = vld [vmem:[%s4344 + $0xc] sm:$0xf]
  %v4349 = vunpack.c.l.b16 %v4133
  %v4350 = vunpack.c.l.b16 %v4147
  %v4351 = vunpack.c.l.b16 %v4161
  %v4352 = vunpack.c.l.b16 %v4175
  %v4353 = vunpack.c.l.b16 %v4189
  %v4354 = vunpack.c.l.b16 %v4203
  %v4355 = vunpack.c.l.b16 %v4217
  %v4356 = vunpack.c.l.b16 %v4231
  %v4357 = vunpack.c.l.b16 %v4245
  %v4358 = vunpack.c.l.b16 %v4259
  %v4359 = vunpack.c.l.b16 %v4273
  %v4360 = vunpack.c.l.b16 %v4287
  %v4361 = vunpack.c.l.b16 %v4301
  %v4362 = vunpack.c.l.b16 %v4315
  %v4363 = vunpack.c.l.b16 %v4329
  %v4364 = vunpack.c.l.b16 %v4343
  %v4365 = vpack.c.b16 %v4350, %v4349
  %v4366 = vpack.c.b16 %v4352, %v4351
  %v4367 = vpack.c.b16 %v4354, %v4353
  %v4368 = vpack.c.b16 %v4356, %v4355
  %v4369 = vpack.c.b16 %v4358, %v4357
  %v4370 = vpack.c.b16 %v4360, %v4359
  %v4371 = vpack.c.b16 %v4362, %v4361
  %v4372 = vpack.c.b16 %v4364, %v4363
  %v4377 = vunpack.c.l.b16 %v4345
  %v4378 = vunpack.c.l.b16 %v4346
  %v4379 = vunpack.c.l.b16 %v4347
  %v4380 = vunpack.c.l.b16 %v4348
  %v4381 = vpack.c.b16 %v4378, %v4377
  %v4382 = vpack.c.b16 %v4380, %v4379
  %v4386 = vsel %vm486, %v4365, 0
  %v4389 = vsel %vm486, %v4366, 0
  %v4392 = vsel %vm486, %v4367, 0
  %v4395 = vsel %vm486, %v4368, 0
  %v4398 = vsel %vm486, %v4369, 0
  %v4401 = vsel %vm486, %v4370, 0
  %v4404 = vsel %vm486, %v4371, 0
  %v4407 = vsel %vm486, %v4372, 0
  %4409 = vmatprep.subr.bf16.mxu0 0
  %4410 = vmatpush1.bf16.msra.mxu0 %v4381
  %4411 = vmatprep.subr.bf16.mxu0 0
  %4412 = vmatpush1.bf16.msra.mxu0 %v4382
  %4413 = vmatprep.subr.bf16.mxu0 0
  %4414 = vmatpush1.bf16.msra.mxu0 0
  %4415 = vmatprep.subr.bf16.mxu0 0
  %4416 = vmatpush1.bf16.msra.mxu0 0
  %4417 = vmatprep.subr.bf16.mxu0 0
  %4418 = vmatpush1.bf16.msra.mxu0 0
  %4419 = vmatprep.subr.bf16.mxu0 0
  %4420 = vmatpush1.bf16.msra.mxu0 0
  %4421 = vmatprep.subr.bf16.mxu0 0
  %4422 = vmatpush1.bf16.msra.mxu0 0
  %4423 = vmatprep.subr.bf16.mxu0 0
  %4424 = vmatpush1.bf16.msra.mxu0 0
  %4425 = vmatprep.subr.bf16.mxu0 0
  %4426 = vmatpush1.bf16.msra.mxu0 0
  %4427 = vmatprep.subr.bf16.mxu0 0
  %4428 = vmatpush1.bf16.msra.mxu0 0
  %4429 = vmatprep.subr.bf16.mxu0 0
  %4430 = vmatpush1.bf16.msra.mxu0 0
  %4431 = vmatprep.subr.bf16.mxu0 0
  %4432 = vmatpush1.bf16.msra.mxu0 0
  %4433 = vmatprep.subr.bf16.mxu0 0
  %4434 = vmatpush1.bf16.msra.mxu0 0
  %4435 = vmatprep.subr.bf16.mxu0 0
  %4436 = vmatpush1.bf16.msra.mxu0 0
  %4437 = vmatprep.subr.bf16.mxu0 0
  %4438 = vmatpush1.bf16.msra.mxu0 0
  %4439 = vmatprep.subr.bf16.mxu0 0
  %4440 = vmatpush1.bf16.msra.mxu0 0
  %4441 = vmatprep.mubr.bf16.mxu0 0
  %4442 = vmatmul.mubr.bf16.gmra.mrb[0].mxu0 %v4386
  %v4443 = vpop.f32.mrb[0].mxu0
  %v4444 = vadd.f32 0.0, %v4443
  %v4445 = vpop.f32.mrb[0].mxu0
  %v4446 = vpop.f32.mrb[0].mxu0
  %v4447 = vadd.f32 0.0, %v4446
  %v4448 = vpop.f32.mrb[0].mxu0
  %4449 = vmatprep.mubr.bf16.mxu0 0
  %4450 = vmatmul.mubr.bf16.gmra.mrb[0].mxu0 %v4389
  %v4451 = vpop.f32.mrb[0].mxu0
  %v4452 = vadd.f32 0.0, %v4451
  %v4453 = vpop.f32.mrb[0].mxu0
  %v4454 = vpop.f32.mrb[0].mxu0
  %v4455 = vadd.f32 0.0, %v4454
  %v4456 = vpop.f32.mrb[0].mxu0
  %4457 = vmatprep.mubr.bf16.mxu0 0
  %4458 = vmatmul.mubr.bf16.gmra.mrb[0].mxu0 %v4392
  %v4459 = vpop.f32.mrb[0].mxu0
  %v4460 = vadd.f32 0.0, %v4459
  %v4461 = vpop.f32.mrb[0].mxu0
  %v4462 = vpop.f32.mrb[0].mxu0
  %v4463 = vadd.f32 0.0, %v4462
  %v4464 = vpop.f32.mrb[0].mxu0
  %4465 = vmatprep.mubr.bf16.mxu0 0
  %4466 = vmatmul.mubr.bf16.gmra.mrb[0].mxu0 %v4395
  %v4467 = vpop.f32.mrb[0].mxu0
  %v4468 = vadd.f32 0.0, %v4467
  %v4469 = vpop.f32.mrb[0].mxu0
  %v4470 = vpop.f32.mrb[0].mxu0
  %v4471 = vadd.f32 0.0, %v4470
  %v4472 = vpop.f32.mrb[0].mxu0
  %4473 = vmatprep.mubr.bf16.mxu0 0
  %4474 = vmatmul.mubr.bf16.gmra.mrb[0].mxu0 %v4398
  %v4475 = vpop.f32.mrb[0].mxu0
  %v4476 = vadd.f32 0.0, %v4475
  %v4477 = vpop.f32.mrb[0].mxu0
  %v4478 = vpop.f32.mrb[0].mxu0
  %v4479 = vadd.f32 0.0, %v4478
  %v4480 = vpop.f32.mrb[0].mxu0
  %4481 = vmatprep.mubr.bf16.mxu0 0
  %4482 = vmatmul.mubr.bf16.gmra.mrb[0].mxu0 %v4401
  %v4483 = vpop.f32.mrb[0].mxu0
  %v4484 = vadd.f32 0.0, %v4483
  %v4485 = vpop.f32.mrb[0].mxu0
  %v4486 = vpop.f32.mrb[0].mxu0
  %v4487 = vadd.f32 0.0, %v4486
  %v4488 = vpop.f32.mrb[0].mxu0
  %4489 = vmatprep.mubr.bf16.mxu0 0
  %4490 = vmatmul.mubr.bf16.gmra.mrb[0].mxu0 %v4404
  %v4491 = vpop.f32.mrb[0].mxu0
  %v4492 = vadd.f32 0.0, %v4491
  %v4493 = vpop.f32.mrb[0].mxu0
  %v4494 = vpop.f32.mrb[0].mxu0
  %v4495 = vadd.f32 0.0, %v4494
  %v4496 = vpop.f32.mrb[0].mxu0
  %4497 = vmatprep.mubr.bf16.mxu0 0
  %4498 = vmatmul.mubr.bf16.gmra.mrb[0].mxu0 %v4407
  %v4499 = vpop.f32.mrb[0].mxu0
  %v4500 = vadd.f32 0.0, %v4499
  %v4501 = vpop.f32.mrb[0].mxu0
  %v4502 = vpop.f32.mrb[0].mxu0
  %v4503 = vadd.f32 0.0, %v4502
  %v4504 = vpop.f32.mrb[0].mxu0
  %4505 = vdwg.mxu0
  %vm4506 = vcmask 31744
  %v4507 = vsel %vm4506, %v1970, 0.0
  %v4508 = vsel %vm4506, %v1973, 0.0
  %v4509 = vadd.f32 %v4507, %v4508
  %v4510 = vsel %vm4506, %v1978, 0.0
  %v4511 = vadd.f32 %v4509, %v4510
  %v4512 = vsel %vm4506, %v1981, 0.0
  %v4513 = vadd.f32 %v4511, %v4512
  %v4514 = vsel %vm4506, %v1986, 0.0
  %v4515 = vadd.f32 %v4513, %v4514
  %v4516 = vsel %vm4506, %v1989, 0.0
  %v4517 = vadd.f32 %v4515, %v4516
  %v4518 = vsel %vm4506, %v1994, 0.0
  %v4519 = vadd.f32 %v4517, %v4518
  %v4520 = vsel %vm4506, %v1997, 0.0
  %v4521 = vadd.f32 %v4519, %v4520
  %v4522 = vsel %vm4506, %v2002, 0.0
  %v4523 = vadd.f32 %v4521, %v4522
  %v4524 = vsel %vm4506, %v2005, 0.0
  %v4525 = vadd.f32 %v4523, %v4524
  %v4526 = vsel %vm4506, %v2010, 0.0
  %v4527 = vadd.f32 %v4525, %v4526
  %v4528 = vsel %vm4506, %v2013, 0.0
  %v4529 = vadd.f32 %v4527, %v4528
  %v4530 = vsel %vm4506, %v2018, 0.0
  %v4531 = vadd.f32 %v4529, %v4530
  %v4532 = vsel %vm4506, %v2021, 0.0
  %v4533 = vadd.f32 %v4531, %v4532
  %v4534 = vsel %vm4506, %v2026, 0.0
  %v4535 = vadd.f32 %v4533, %v4534
  %v4536 = vsel %vm4506, %v2029, 0.0
  %v4537 = vadd.f32 %v4535, %v4536
  %v4538 = vrot.slane %v4537, 4
  %v4539 = vadd.f32 %v4537, %v4538
  %v4540 = vrot.slane %v4539, 2
  %v4541 = vadd.f32 %v4539, %v4540
  %v4542 = vrot.slane %v4541, 1
  %v4543 = vadd.f32 %v4541, %v4542
  %v4544 = vadd.f32 %v4543, 0.0
  %v4545 = vmul.f32 %v1970, %v1970
  %v4546 = vmul.f32 %v1973, %v1973
  %v4547 = vmul.f32 %v1978, %v1978
  %v4548 = vmul.f32 %v1981, %v1981
  %v4549 = vmul.f32 %v1986, %v1986
  %v4550 = vmul.f32 %v1989, %v1989
  %v4551 = vmul.f32 %v1994, %v1994
  %v4552 = vmul.f32 %v1997, %v1997
  %v4553 = vmul.f32 %v2002, %v2002
  %v4554 = vmul.f32 %v2005, %v2005
  %v4555 = vmul.f32 %v2010, %v2010
  %v4556 = vmul.f32 %v2013, %v2013
  %v4557 = vmul.f32 %v2018, %v2018
  %v4558 = vmul.f32 %v2021, %v2021
  %v4559 = vmul.f32 %v2026, %v2026
  %v4560 = vmul.f32 %v2029, %v2029
  %v4561 = vsel %vm4506, %v4545, 0.0
  %v4562 = vsel %vm4506, %v4546, 0.0
  %v4563 = vadd.f32 %v4561, %v4562
  %v4564 = vsel %vm4506, %v4547, 0.0
  %v4565 = vadd.f32 %v4563, %v4564
  %v4566 = vsel %vm4506, %v4548, 0.0
  %v4567 = vadd.f32 %v4565, %v4566
  %v4568 = vsel %vm4506, %v4549, 0.0
  %v4569 = vadd.f32 %v4567, %v4568
  %v4570 = vsel %vm4506, %v4550, 0.0
  %v4571 = vadd.f32 %v4569, %v4570
  %v4572 = vsel %vm4506, %v4551, 0.0
  %v4573 = vadd.f32 %v4571, %v4572
  %v4574 = vsel %vm4506, %v4552, 0.0
  %v4575 = vadd.f32 %v4573, %v4574
  %v4576 = vsel %vm4506, %v4553, 0.0
  %v4577 = vadd.f32 %v4575, %v4576
  %v4578 = vsel %vm4506, %v4554, 0.0
  %v4579 = vadd.f32 %v4577, %v4578
  %v4580 = vsel %vm4506, %v4555, 0.0
  %v4581 = vadd.f32 %v4579, %v4580
  %v4582 = vsel %vm4506, %v4556, 0.0
  %v4583 = vadd.f32 %v4581, %v4582
  %v4584 = vsel %vm4506, %v4557, 0.0
  %v4585 = vadd.f32 %v4583, %v4584
  %v4586 = vsel %vm4506, %v4558, 0.0
  %v4587 = vadd.f32 %v4585, %v4586
  %v4588 = vsel %vm4506, %v4559, 0.0
  %v4589 = vadd.f32 %v4587, %v4588
  %v4590 = vsel %vm4506, %v4560, 0.0
  %v4591 = vadd.f32 %v4589, %v4590
  %v4592 = vrot.slane %v4591, 4
  %v4593 = vadd.f32 %v4591, %v4592
  %v4594 = vrot.slane %v4593, 2
  %v4595 = vadd.f32 %v4593, %v4594
  %v4596 = vrot.slane %v4595, 1
  %v4597 = vadd.f32 %v4595, %v4596
  %v4598 = vadd.f32 %v4597, 0.0
  %v4599 = vsel %vm4506, %v2983, 0.0
  %v4600 = vsel %vm4506, %v2986, 0.0
  %v4601 = vadd.f32 %v4599, %v4600
  %v4602 = vsel %vm4506, %v2991, 0.0
  %v4603 = vadd.f32 %v4601, %v4602
  %v4604 = vsel %vm4506, %v2994, 0.0
  %v4605 = vadd.f32 %v4603, %v4604
  %v4606 = vsel %vm4506, %v2999, 0.0
  %v4607 = vadd.f32 %v4605, %v4606
  %v4608 = vsel %vm4506, %v3002, 0.0
  %v4609 = vadd.f32 %v4607, %v4608
  %v4610 = vsel %vm4506, %v3007, 0.0
  %v4611 = vadd.f32 %v4609, %v4610
  %v4612 = vsel %vm4506, %v3010, 0.0
  %v4613 = vadd.f32 %v4611, %v4612
  %v4614 = vsel %vm4506, %v3015, 0.0
  %v4615 = vadd.f32 %v4613, %v4614
  %v4616 = vsel %vm4506, %v3018, 0.0
  %v4617 = vadd.f32 %v4615, %v4616
  %v4618 = vsel %vm4506, %v3023, 0.0
  %v4619 = vadd.f32 %v4617, %v4618
  %v4620 = vsel %vm4506, %v3026, 0.0
  %v4621 = vadd.f32 %v4619, %v4620
  %v4622 = vsel %vm4506, %v3031, 0.0
  %v4623 = vadd.f32 %v4621, %v4622
  %v4624 = vsel %vm4506, %v3034, 0.0
  %v4625 = vadd.f32 %v4623, %v4624
  %v4626 = vsel %vm4506, %v3039, 0.0
  %v4627 = vadd.f32 %v4625, %v4626
  %v4628 = vsel %vm4506, %v3042, 0.0
  %v4629 = vadd.f32 %v4627, %v4628
  %v4630 = vrot.slane %v4629, 4
  %v4631 = vadd.f32 %v4629, %v4630
  %v4632 = vrot.slane %v4631, 2
  %v4633 = vadd.f32 %v4631, %v4632
  %v4634 = vrot.slane %v4633, 1
  %v4635 = vadd.f32 %v4633, %v4634
  %v4636 = vadd.f32 %v4544, %v4635
  %v4637 = vmul.f32 %v2983, %v2983
  %v4638 = vmul.f32 %v2986, %v2986
  %v4639 = vmul.f32 %v2991, %v2991
  %v4640 = vmul.f32 %v2994, %v2994
  %v4641 = vmul.f32 %v2999, %v2999
  %v4642 = vmul.f32 %v3002, %v3002
  %v4643 = vmul.f32 %v3007, %v3007
  %v4644 = vmul.f32 %v3010, %v3010
  %v4645 = vmul.f32 %v3015, %v3015
  %v4646 = vmul.f32 %v3018, %v3018
  %v4647 = vmul.f32 %v3023, %v3023
  %v4648 = vmul.f32 %v3026, %v3026
  %v4649 = vmul.f32 %v3031, %v3031
  %v4650 = vmul.f32 %v3034, %v3034
  %v4651 = vmul.f32 %v3039, %v3039
  %v4652 = vmul.f32 %v3042, %v3042
  %v4653 = vsel %vm4506, %v4637, 0.0
  %v4654 = vsel %vm4506, %v4638, 0.0
  %v4655 = vadd.f32 %v4653, %v4654
  %v4656 = vsel %vm4506, %v4639, 0.0
  %v4657 = vadd.f32 %v4655, %v4656
  %v4658 = vsel %vm4506, %v4640, 0.0
  %v4659 = vadd.f32 %v4657, %v4658
  %v4660 = vsel %vm4506, %v4641, 0.0
  %v4661 = vadd.f32 %v4659, %v4660
  %v4662 = vsel %vm4506, %v4642, 0.0
  %v4663 = vadd.f32 %v4661, %v4662
  %v4664 = vsel %vm4506, %v4643, 0.0
  %v4665 = vadd.f32 %v4663, %v4664
  %v4666 = vsel %vm4506, %v4644, 0.0
  %v4667 = vadd.f32 %v4665, %v4666
  %v4668 = vsel %vm4506, %v4645, 0.0
  %v4669 = vadd.f32 %v4667, %v4668
  %v4670 = vsel %vm4506, %v4646, 0.0
  %v4671 = vadd.f32 %v4669, %v4670
  %v4672 = vsel %vm4506, %v4647, 0.0
  %v4673 = vadd.f32 %v4671, %v4672
  %v4674 = vsel %vm4506, %v4648, 0.0
  %v4675 = vadd.f32 %v4673, %v4674
  %v4676 = vsel %vm4506, %v4649, 0.0
  %v4677 = vadd.f32 %v4675, %v4676
  %v4678 = vsel %vm4506, %v4650, 0.0
  %v4679 = vadd.f32 %v4677, %v4678
  %v4680 = vsel %vm4506, %v4651, 0.0
  %v4681 = vadd.f32 %v4679, %v4680
  %v4682 = vsel %vm4506, %v4652, 0.0
  %v4683 = vadd.f32 %v4681, %v4682
  %v4684 = vrot.slane %v4683, 4
  %v4685 = vadd.f32 %v4683, %v4684
  %v4686 = vrot.slane %v4685, 2
  %v4687 = vadd.f32 %v4685, %v4686
  %v4688 = vrot.slane %v4687, 1
  %v4689 = vadd.f32 %v4687, %v4688
  %v4690 = vadd.f32 %v4598, %v4689
  %v4691 = vsel %vm4506, %v3610, 0.0
  %v4692 = vsel %vm4506, %v3613, 0.0
  %v4693 = vadd.f32 %v4691, %v4692
  %v4694 = vsel %vm4506, %v3618, 0.0
  %v4695 = vadd.f32 %v4693, %v4694
  %v4696 = vsel %vm4506, %v3621, 0.0
  %v4697 = vadd.f32 %v4695, %v4696
  %v4698 = vsel %vm4506, %v3626, 0.0
  %v4699 = vadd.f32 %v4697, %v4698
  %v4700 = vsel %vm4506, %v3629, 0.0
  %v4701 = vadd.f32 %v4699, %v4700
  %v4702 = vsel %vm4506, %v3634, 0.0
  %v4703 = vadd.f32 %v4701, %v4702
  %v4704 = vsel %vm4506, %v3637, 0.0
  %v4705 = vadd.f32 %v4703, %v4704
  %v4706 = vsel %vm4506, %v3642, 0.0
  %v4707 = vadd.f32 %v4705, %v4706
  %v4708 = vsel %vm4506, %v3645, 0.0
  %v4709 = vadd.f32 %v4707, %v4708
  %v4710 = vsel %vm4506, %v3650, 0.0
  %v4711 = vadd.f32 %v4709, %v4710
  %v4712 = vsel %vm4506, %v3653, 0.0
  %v4713 = vadd.f32 %v4711, %v4712
  %v4714 = vsel %vm4506, %v3658, 0.0
  %v4715 = vadd.f32 %v4713, %v4714
  %v4716 = vsel %vm4506, %v3661, 0.0
  %v4717 = vadd.f32 %v4715, %v4716
  %v4718 = vsel %vm4506, %v3666, 0.0
  %v4719 = vadd.f32 %v4717, %v4718
  %v4720 = vsel %vm4506, %v3669, 0.0
  %v4721 = vadd.f32 %v4719, %v4720
  %v4722 = vrot.slane %v4721, 4
  %v4723 = vadd.f32 %v4721, %v4722
  %v4724 = vrot.slane %v4723, 2
  %v4725 = vadd.f32 %v4723, %v4724
  %v4726 = vrot.slane %v4725, 1
  %v4727 = vadd.f32 %v4725, %v4726
  %v4728 = vadd.f32 %v4636, %v4727
  %v4729 = vmul.f32 %v3610, %v3610
  %v4730 = vmul.f32 %v3613, %v3613
  %v4731 = vmul.f32 %v3618, %v3618
  %v4732 = vmul.f32 %v3621, %v3621
  %v4733 = vmul.f32 %v3626, %v3626
  %v4734 = vmul.f32 %v3629, %v3629
  %v4735 = vmul.f32 %v3634, %v3634
  %v4736 = vmul.f32 %v3637, %v3637
  %v4737 = vmul.f32 %v3642, %v3642
  %v4738 = vmul.f32 %v3645, %v3645
  %v4739 = vmul.f32 %v3650, %v3650
  %v4740 = vmul.f32 %v3653, %v3653
  %v4741 = vmul.f32 %v3658, %v3658
  %v4742 = vmul.f32 %v3661, %v3661
  %v4743 = vmul.f32 %v3666, %v3666
  %v4744 = vmul.f32 %v3669, %v3669
  %v4745 = vsel %vm4506, %v4729, 0.0
  %v4746 = vsel %vm4506, %v4730, 0.0
  %v4747 = vadd.f32 %v4745, %v4746
  %v4748 = vsel %vm4506, %v4731, 0.0
  %v4749 = vadd.f32 %v4747, %v4748
  %v4750 = vsel %vm4506, %v4732, 0.0
  %v4751 = vadd.f32 %v4749, %v4750
  %v4752 = vsel %vm4506, %v4733, 0.0
  %v4753 = vadd.f32 %v4751, %v4752
  %v4754 = vsel %vm4506, %v4734, 0.0
  %v4755 = vadd.f32 %v4753, %v4754
  %v4756 = vsel %vm4506, %v4735, 0.0
  %v4757 = vadd.f32 %v4755, %v4756
  %v4758 = vsel %vm4506, %v4736, 0.0
  %v4759 = vadd.f32 %v4757, %v4758
  %v4760 = vsel %vm4506, %v4737, 0.0
  %v4761 = vadd.f32 %v4759, %v4760
  %v4762 = vsel %vm4506, %v4738, 0.0
  %v4763 = vadd.f32 %v4761, %v4762
  %v4764 = vsel %vm4506, %v4739, 0.0
  %v4765 = vadd.f32 %v4763, %v4764
  %v4766 = vsel %vm4506, %v4740, 0.0
  %v4767 = vadd.f32 %v4765, %v4766
  %v4768 = vsel %vm4506, %v4741, 0.0
  %v4769 = vadd.f32 %v4767, %v4768
  %v4770 = vsel %vm4506, %v4742, 0.0
  %v4771 = vadd.f32 %v4769, %v4770
  %v4772 = vsel %vm4506, %v4743, 0.0
  %v4773 = vadd.f32 %v4771, %v4772
  %v4774 = vsel %vm4506, %v4744, 0.0
  %v4775 = vadd.f32 %v4773, %v4774
  %v4776 = vrot.slane %v4775, 4
  %v4777 = vadd.f32 %v4775, %v4776
  %v4778 = vrot.slane %v4777, 2
  %v4779 = vadd.f32 %v4777, %v4778
  %v4780 = vrot.slane %v4779, 1
  %v4781 = vadd.f32 %v4779, %v4780
  %v4782 = vadd.f32 %v4690, %v4781
  %v4783 = vsel %vm4506, %v4444, 0.0
  %v4784 = vsel %vm4506, %v4447, 0.0
  %v4785 = vadd.f32 %v4783, %v4784
  %v4786 = vsel %vm4506, %v4452, 0.0
  %v4787 = vadd.f32 %v4785, %v4786
  %v4788 = vsel %vm4506, %v4455, 0.0
  %v4789 = vadd.f32 %v4787, %v4788
  %v4790 = vsel %vm4506, %v4460, 0.0
  %v4791 = vadd.f32 %v4789, %v4790
  %v4792 = vsel %vm4506, %v4463, 0.0
  %v4793 = vadd.f32 %v4791, %v4792
  %v4794 = vsel %vm4506, %v4468, 0.0
  %v4795 = vadd.f32 %v4793, %v4794
  %v4796 = vsel %vm4506, %v4471, 0.0
  %v4797 = vadd.f32 %v4795, %v4796
  %v4798 = vsel %vm4506, %v4476, 0.0
  %v4799 = vadd.f32 %v4797, %v4798
  %v4800 = vsel %vm4506, %v4479, 0.0
  %v4801 = vadd.f32 %v4799, %v4800
  %v4802 = vsel %vm4506, %v4484, 0.0
  %v4803 = vadd.f32 %v4801, %v4802
  %v4804 = vsel %vm4506, %v4487, 0.0
  %v4805 = vadd.f32 %v4803, %v4804
  %v4806 = vsel %vm4506, %v4492, 0.0
  %v4807 = vadd.f32 %v4805, %v4806
  %v4808 = vsel %vm4506, %v4495, 0.0
  %v4809 = vadd.f32 %v4807, %v4808
  %v4810 = vsel %vm4506, %v4500, 0.0
  %v4811 = vadd.f32 %v4809, %v4810
  %v4812 = vsel %vm4506, %v4503, 0.0
  %v4813 = vadd.f32 %v4811, %v4812
  %v4814 = vrot.slane %v4813, 4
  %v4815 = vadd.f32 %v4813, %v4814
  %v4816 = vrot.slane %v4815, 2
  %v4817 = vadd.f32 %v4815, %v4816
  %v4818 = vrot.slane %v4817, 1
  %v4819 = vadd.f32 %v4817, %v4818
  %v4820 = vadd.f32 %v4728, %v4819
  %v4821 = vmul.f32 %v4444, %v4444
  %v4822 = vmul.f32 %v4447, %v4447
  %v4823 = vmul.f32 %v4452, %v4452
  %v4824 = vmul.f32 %v4455, %v4455
  %v4825 = vmul.f32 %v4460, %v4460
  %v4826 = vmul.f32 %v4463, %v4463
  %v4827 = vmul.f32 %v4468, %v4468
  %v4828 = vmul.f32 %v4471, %v4471
  %v4829 = vmul.f32 %v4476, %v4476
  %v4830 = vmul.f32 %v4479, %v4479
  %v4831 = vmul.f32 %v4484, %v4484
  %v4832 = vmul.f32 %v4487, %v4487
  %v4833 = vmul.f32 %v4492, %v4492
  %v4834 = vmul.f32 %v4495, %v4495
  %v4835 = vmul.f32 %v4500, %v4500
  %v4836 = vmul.f32 %v4503, %v4503
  %v4837 = vsel %vm4506, %v4821, 0.0
  %v4838 = vsel %vm4506, %v4822, 0.0
  %v4839 = vadd.f32 %v4837, %v4838
  %v4840 = vsel %vm4506, %v4823, 0.0
  %v4841 = vadd.f32 %v4839, %v4840
  %v4842 = vsel %vm4506, %v4824, 0.0
  %v4843 = vadd.f32 %v4841, %v4842
  %v4844 = vsel %vm4506, %v4825, 0.0
  %v4845 = vadd.f32 %v4843, %v4844
  %v4846 = vsel %vm4506, %v4826, 0.0
  %v4847 = vadd.f32 %v4845, %v4846
  %v4848 = vsel %vm4506, %v4827, 0.0
  %v4849 = vadd.f32 %v4847, %v4848
  %v4850 = vsel %vm4506, %v4828, 0.0
  %v4851 = vadd.f32 %v4849, %v4850
  %v4852 = vsel %vm4506, %v4829, 0.0
  %v4853 = vadd.f32 %v4851, %v4852
  %v4854 = vsel %vm4506, %v4830, 0.0
  %v4855 = vadd.f32 %v4853, %v4854
  %v4856 = vsel %vm4506, %v4831, 0.0
  %v4857 = vadd.f32 %v4855, %v4856
  %v4858 = vsel %vm4506, %v4832, 0.0
  %v4859 = vadd.f32 %v4857, %v4858
  %v4860 = vsel %vm4506, %v4833, 0.0
  %v4861 = vadd.f32 %v4859, %v4860
  %v4862 = vsel %vm4506, %v4834, 0.0
  %v4863 = vadd.f32 %v4861, %v4862
  %v4864 = vsel %vm4506, %v4835, 0.0
  %v4865 = vadd.f32 %v4863, %v4864
  %v4866 = vsel %vm4506, %v4836, 0.0
  %v4867 = vadd.f32 %v4865, %v4866
  %v4868 = vrot.slane %v4867, 4
  %v4869 = vadd.f32 %v4867, %v4868
  %v4870 = vrot.slane %v4869, 2
  %v4871 = vadd.f32 %v4869, %v4870
  %v4872 = vrot.slane %v4871, 1
  %v4873 = vadd.f32 %v4871, %v4872
  %v4874 = vadd.f32 %v4782, %v4873
  %vm4875 = vcmask 24576
  %4876 = vst.msk [vmem:[%s4] sm:$0x1] %vm4875, %v4820
  %4877 = vst.msk [vmem:[%s4 + $0x1] sm:$0x1] %vm4875, %v4874
  %4894 = vrot.lane.b32.xlu0 %v2983, 4
  %v4895 = vpop.permute.xlu0 %4894
  %4896 = vrot.lane.b32.xlu0 %v2986, 4
  %v4897 = vpop.permute.xlu0 %4896
  %4898 = vrot.lane.b32.xlu0 %v2991, 4
  %v4899 = vpop.permute.xlu0 %4898
  %4900 = vrot.lane.b32.xlu0 %v2994, 4
  %v4901 = vpop.permute.xlu0 %4900
  %4902 = vrot.lane.b32.xlu0 %v2999, 4
  %v4903 = vpop.permute.xlu0 %4902
  %4904 = vrot.lane.b32.xlu0 %v3002, 4
  %v4905 = vpop.permute.xlu0 %4904
  %4906 = vrot.lane.b32.xlu0 %v3007, 4
  %v4907 = vpop.permute.xlu0 %4906
  %4908 = vrot.lane.b32.xlu0 %v3010, 4
  %v4909 = vpop.permute.xlu0 %4908
  %4910 = vrot.lane.b32.xlu0 %v3015, 4
  %v4911 = vpop.permute.xlu0 %4910
  %4912 = vrot.lane.b32.xlu0 %v3018, 4
  %v4913 = vpop.permute.xlu0 %4912
  %4914 = vrot.lane.b32.xlu0 %v3023, 4
  %v4915 = vpop.permute.xlu0 %4914
  %4916 = vrot.lane.b32.xlu0 %v3026, 4
  %v4917 = vpop.permute.xlu0 %4916
  %4918 = vrot.lane.b32.xlu0 %v3031, 4
  %v4919 = vpop.permute.xlu0 %4918
  %4920 = vrot.lane.b32.xlu0 %v3034, 4
  %v4921 = vpop.permute.xlu0 %4920
  %4922 = vrot.lane.b32.xlu0 %v3039, 4
  %v4923 = vpop.permute.xlu0 %4922
  %4924 = vrot.lane.b32.xlu0 %v3042, 4
  %v4925 = vpop.permute.xlu0 %4924
  %4958 = vrot.lane.b32.xlu0 %v3610, 8
  %v4959 = vpop.permute.xlu0 %4958
  %4960 = vrot.lane.b32.xlu0 %v3613, 8
  %v4961 = vpop.permute.xlu0 %4960
  %4962 = vrot.lane.b32.xlu0 %v3618, 8
  %v4963 = vpop.permute.xlu0 %4962
  %4964 = vrot.lane.b32.xlu0 %v3621, 8
  %v4965 = vpop.permute.xlu0 %4964
  %4966 = vrot.lane.b32.xlu0 %v3626, 8
  %v4967 = vpop.permute.xlu0 %4966
  %4968 = vrot.lane.b32.xlu0 %v3629, 8
  %v4969 = vpop.permute.xlu0 %4968
  %4970 = vrot.lane.b32.xlu0 %v3634, 8
  %v4971 = vpop.permute.xlu0 %4970
  %4972 = vrot.lane.b32.xlu0 %v3637, 8
  %v4973 = vpop.permute.xlu0 %4972
  %4974 = vrot.lane.b32.xlu0 %v3642, 8
  %v4975 = vpop.permute.xlu0 %4974
  %4976 = vrot.lane.b32.xlu0 %v3645, 8
  %v4977 = vpop.permute.xlu0 %4976
  %4978 = vrot.lane.b32.xlu0 %v3650, 8
  %v4979 = vpop.permute.xlu0 %4978
  %4980 = vrot.lane.b32.xlu0 %v3653, 8
  %v4981 = vpop.permute.xlu0 %4980
  %4982 = vrot.lane.b32.xlu0 %v3658, 8
  %v4983 = vpop.permute.xlu0 %4982
  %4984 = vrot.lane.b32.xlu0 %v3661, 8
  %v4985 = vpop.permute.xlu0 %4984
  %4986 = vrot.lane.b32.xlu0 %v3666, 8
  %v4987 = vpop.permute.xlu0 %4986
  %4988 = vrot.lane.b32.xlu0 %v3669, 8
  %v4989 = vpop.permute.xlu0 %4988
  %5022 = vrot.lane.b32.xlu0 %v4444, 12
  %v5023 = vpop.permute.xlu0 %5022
  %5024 = vrot.lane.b32.xlu0 %v4447, 12
  %v5025 = vpop.permute.xlu0 %5024
  %5026 = vrot.lane.b32.xlu0 %v4452, 12
  %v5027 = vpop.permute.xlu0 %5026
  %5028 = vrot.lane.b32.xlu0 %v4455, 12
  %v5029 = vpop.permute.xlu0 %5028
  %5030 = vrot.lane.b32.xlu0 %v4460, 12
  %v5031 = vpop.permute.xlu0 %5030
  %5032 = vrot.lane.b32.xlu0 %v4463, 12
  %v5033 = vpop.permute.xlu0 %5032
  %5034 = vrot.lane.b32.xlu0 %v4468, 12
  %v5035 = vpop.permute.xlu0 %5034
  %5036 = vrot.lane.b32.xlu0 %v4471, 12
  %v5037 = vpop.permute.xlu0 %5036
  %5038 = vrot.lane.b32.xlu0 %v4476, 12
  %v5039 = vpop.permute.xlu0 %5038
  %5040 = vrot.lane.b32.xlu0 %v4479, 12
  %v5041 = vpop.permute.xlu0 %5040
  %5042 = vrot.lane.b32.xlu0 %v4484, 12
  %v5043 = vpop.permute.xlu0 %5042
  %5044 = vrot.lane.b32.xlu0 %v4487, 12
  %v5045 = vpop.permute.xlu0 %5044
  %5046 = vrot.lane.b32.xlu0 %v4492, 12
  %v5047 = vpop.permute.xlu0 %5046
  %5048 = vrot.lane.b32.xlu0 %v4495, 12
  %v5049 = vpop.permute.xlu0 %5048
  %5050 = vrot.lane.b32.xlu0 %v4500, 12
  %v5051 = vpop.permute.xlu0 %5050
  %5052 = vrot.lane.b32.xlu0 %v4503, 12
  %v5053 = vpop.permute.xlu0 %5052
  %v5070 = vsel %vm4506, %v1970, %v4895
  %v5071 = vsel %vm4506, %v1973, %v4897
  %v5072 = vsel %vm4506, %v1978, %v4899
  %v5073 = vsel %vm4506, %v1981, %v4901
  %v5074 = vsel %vm4506, %v1986, %v4903
  %v5075 = vsel %vm4506, %v1989, %v4905
  %v5076 = vsel %vm4506, %v1994, %v4907
  %v5077 = vsel %vm4506, %v1997, %v4909
  %v5078 = vsel %vm4506, %v2002, %v4911
  %v5079 = vsel %vm4506, %v2005, %v4913
  %v5080 = vsel %vm4506, %v2010, %v4915
  %v5081 = vsel %vm4506, %v2013, %v4917
  %v5082 = vsel %vm4506, %v2018, %v4919
  %v5083 = vsel %vm4506, %v2021, %v4921
  %v5084 = vsel %vm4506, %v2026, %v4923
  %v5085 = vsel %vm4506, %v2029, %v4925
  %v5086 = vsel %vm1741, %v5070, %v4959
  %v5087 = vsel %vm1741, %v5071, %v4961
  %v5088 = vsel %vm1741, %v5072, %v4963
  %v5089 = vsel %vm1741, %v5073, %v4965
  %v5090 = vsel %vm1741, %v5074, %v4967
  %v5091 = vsel %vm1741, %v5075, %v4969
  %v5092 = vsel %vm1741, %v5076, %v4971
  %v5093 = vsel %vm1741, %v5077, %v4973
  %v5094 = vsel %vm1741, %v5078, %v4975
  %v5095 = vsel %vm1741, %v5079, %v4977
  %v5096 = vsel %vm1741, %v5080, %v4979
  %v5097 = vsel %vm1741, %v5081, %v4981
  %v5098 = vsel %vm1741, %v5082, %v4983
  %v5099 = vsel %vm1741, %v5083, %v4985
  %v5100 = vsel %vm1741, %v5084, %v4987
  %v5101 = vsel %vm1741, %v5085, %v4989
  %vm5102 = vcmask 97280
  %v5103 = vsel %vm5102, %v5086, %v5023
  %v5104 = vsel %vm5102, %v5087, %v5025
  %v5105 = vsel %vm5102, %v5088, %v5027
  %v5106 = vsel %vm5102, %v5089, %v5029
  %v5107 = vsel %vm5102, %v5090, %v5031
  %v5108 = vsel %vm5102, %v5091, %v5033
  %v5109 = vsel %vm5102, %v5092, %v5035
  %v5110 = vsel %vm5102, %v5093, %v5037
  %v5111 = vsel %vm5102, %v5094, %v5039
  %v5112 = vsel %vm5102, %v5095, %v5041
  %v5113 = vsel %vm5102, %v5096, %v5043
  %v5114 = vsel %vm5102, %v5097, %v5045
  %v5115 = vsel %vm5102, %v5098, %v5047
  %v5116 = vsel %vm5102, %v5099, %v5049
  %v5117 = vsel %vm5102, %v5100, %v5051
  %v5118 = vsel %vm5102, %v5101, %v5053
  %5119 = vst.msk [vmem:[%s3] sm:$0xff] %vm453, %v5103
  %5120 = vst.msk [vmem:[%s3 + $0x8] sm:$0xff] %vm453, %v5104
  %5121 = vst.msk [vmem:[%s3 + $0x10] sm:$0xff] %vm453, %v5105
  %5122 = vst.msk [vmem:[%s3 + $0x18] sm:$0xff] %vm453, %v5106
  %5123 = vst.msk [vmem:[%s3 + $0x20] sm:$0xff] %vm453, %v5107
  %5124 = vst.msk [vmem:[%s3 + $0x28] sm:$0xff] %vm453, %v5108
  %5125 = vst.msk [vmem:[%s3 + $0x30] sm:$0xff] %vm453, %v5109
  %5126 = vst.msk [vmem:[%s3 + $0x38] sm:$0xff] %vm453, %v5110
  %5127 = vst.msk [vmem:[%s3 + $0x40] sm:$0xff] %vm453, %v5111
  %5128 = vst.msk [vmem:[%s3 + $0x48] sm:$0xff] %vm453, %v5112
  %5129 = vst.msk [vmem:[%s3 + $0x50] sm:$0xff] %vm453, %v5113
  %5130 = vst.msk [vmem:[%s3 + $0x58] sm:$0xff] %vm453, %v5114
  %5131 = vst.msk [vmem:[%s3 + $0x60] sm:$0xff] %vm453, %v5115
  %5132 = vst.msk [vmem:[%s3 + $0x68] sm:$0xff] %vm453, %v5116
  %5133 = vst.msk [vmem:[%s3 + $0x70] sm:$0xff] %vm453, %v5117
  %5134 = vst.msk [vmem:[%s3 + $0x78] sm:$0xff] %vm453, %v5118
  // Predicated region
  $region14: #{unet_innermost_forward.1} parent=0 // pred_check
    _
  $region15: #{unet_innermost_forward.1} parent=0 // pred_check_branch
    %5136 = sbr.rel (0) target = $region17
  $region16: #{unet_innermost_forward.1} parent=0 // pred_region
    _
  $region17: #{unet_innermost_forward.1} parent=0 // pred_fallthru
    _
  // Predicated region
  $region18: #{unet_innermost_forward.1} parent=0 // pred_check
    _
  $region19: #{unet_innermost_forward.1} parent=0 // pred_check_branch
    %5138 = sbr.rel (0) target = $region21
  $region20: #{unet_innermost_forward.1} parent=0 // pred_region
    _
  $region21: #{unet_innermost_forward.1} parent=0 // pred_fallthru
    _
  // Predicated region
  $region22: #{unet_innermost_forward.1} parent=0 // pred_check
    _
  $region23: #{unet_innermost_forward.1} parent=0 // pred_check_branch
    %5140 = sbr.rel (0) target = $region25
  $region24: #{unet_innermost_forward.1} parent=0 // pred_region
    _
  $region25: #{unet_innermost_forward.1} parent=0 // pred_fallthru
    _
  // Predicated region
  $region26: #{unet_innermost_forward.1} parent=0 // pred_check
    _
  $region27: #{unet_innermost_forward.1} parent=0 // pred_check_branch
    %5142 = sbr.rel (0) target = $region29
  $region28: #{unet_innermost_forward.1} parent=0 // pred_region
    _
  $region29: #{unet_innermost_forward.1} parent=0 // pred_fallthru
    _

</llo_original>
